<compile_context>
chip_gen: v7x
topology: tpu7x:2x2x1
jax: 0.10.0
libtpu: 0.0.40
codegen_flags: <defaults>
</compile_context>

<pallas_src>
import math

import jax
import jax.numpy as jnp
from jax import lax
from jax.experimental import pallas as pl
from jax.experimental.pallas import tpu as pltpu  # noqa: F401  (TPU backend)

# ----------------------------- config ---------------------------------------
EMB = 16          # config.embedding_size
HID = 32          # config.hidden_size
HEADS = 4         # config.num_attention_heads
HEAD_DIM = HID // HEADS
INTER = 64        # config.intermediate_size
SEQ = 8
BATCH = 2
NUM_LAYERS = 2    # config.num_hidden_layers
NUM_GROUPS = 1    # config.num_hidden_groups
INNER_GROUP = 1   # config.inner_group_num
LN_EPS = 1e-12    # config.layer_norm_eps

# ------------------------- weight-slab row layout -----------------------------
LANES = 128                       # slab is lane-dense: last dim = 128
R_EMBW = 0                        # (EMB, HID)    rows   0:16
R_WQKV = R_EMBW + EMB             # (HID, 3*HID)  rows  16:48
R_WO = R_WQKV + HID               # (HID, HID)    rows  48:80
R_WF = R_WO + HID                 # (HID, INTER)  rows  80:112
R_WFO = R_WF + HID                # (INTER, HID)  rows 112:176
R_BIAS = R_WFO + INTER            # bias rows start at 176
R_EMBB = R_BIAS + 0               # (1, HID)
R_BQKV = R_BIAS + 1               # (1, 3*HID)
R_BO = R_BIAS + 2                 # (1, HID)
R_G1 = R_BIAS + 3                 # (1, HID)
R_B1 = R_BIAS + 4                 # (1, HID)
R_BF = R_BIAS + 5                 # (1, INTER)
R_BFO = R_BIAS + 6                # (1, HID)
R_G2 = R_BIAS + 7                 # (1, HID)
R_B2 = R_BIAS + 8                 # (1, HID)
SLAB_ROWS_RAW = R_BIAS + 9        # 185
SLAB_ROWS = ((SLAB_ROWS_RAW + 7) // 8) * 8   # pad to 192 for clean (8,128) tiles


# --------------------------- math helpers ------------------------------------
def _gelu_new(x):
    # 0.5 * x * (1 + tanh(sqrt(2/pi) * (x + 0.044715 * x^3)))
    c = math.sqrt(2.0 / math.pi)
    return 0.5 * x * (1.0 + jnp.tanh(c * (x + 0.044715 * x * x * x)))


def _layernorm(x, gamma, beta):
    mu = jnp.mean(x, axis=-1, keepdims=True)
    var = jnp.mean((x - mu) ** 2, axis=-1, keepdims=True)
    return (x - mu) * jax.lax.rsqrt(var + LN_EPS) * gamma + beta


# ------------------------------ fused kernel ----------------------------------
def albert_fused_kernel(x_ref, mask_ref, w_ref, out_ref):
    f32 = jnp.float32

    x = x_ref[...].astype(f32)            # (B*S, EMB)
    mask = mask_ref[...].astype(f32)      # (B, S) additive mask

    # ---- static slices of the single packed weight slab (loaded once) -------
    emb_w = w_ref[pl.ds(R_EMBW, EMB), pl.ds(0, HID)]          # (EMB, HID)
    wqkv = w_ref[pl.ds(R_WQKV, HID), pl.ds(0, 3 * HID)]       # (HID, 3H)
    wo = w_ref[pl.ds(R_WO, HID), pl.ds(0, HID)]               # (HID, HID)
    wf = w_ref[pl.ds(R_WF, HID), pl.ds(0, INTER)]             # (HID, INTER)
    wfo = w_ref[pl.ds(R_WFO, INTER), pl.ds(0, HID)]           # (INTER, HID)
    emb_b = w_ref[pl.ds(R_EMBB, 1), pl.ds(0, HID)]            # (1, HID)
    bqkv = w_ref[pl.ds(R_BQKV, 1), pl.ds(0, 3 * HID)]         # (1, 3H)
    bo = w_ref[pl.ds(R_BO, 1), pl.ds(0, HID)]
    g1 = w_ref[pl.ds(R_G1, 1), pl.ds(0, HID)]
    b1 = w_ref[pl.ds(R_B1, 1), pl.ds(0, HID)]
    bf = w_ref[pl.ds(R_BF, 1), pl.ds(0, INTER)]
    bfo = w_ref[pl.ds(R_BFO, 1), pl.ds(0, HID)]
    g2 = w_ref[pl.ds(R_G2, 1), pl.ds(0, HID)]
    b2 = w_ref[pl.ds(R_B2, 1), pl.ds(0, HID)]

    # ---- embedding_hidden_mapping_in : (B*S, E) @ (E, H) + (1, H) ------------
    h0 = jnp.dot(x, emb_w, preferred_element_type=f32) + emb_b     # (B*S, H)

    scale = 1.0 / math.sqrt(HEAD_DIM)
    mask_b = mask[:, None, :]          # (B, 1, S), layer-invariant -> hoisted

    def one_layer(h):
        # ---------------- AlbertAttention ------------------------------------
        # Fused QKV: one lane-dense (B*S, H) @ (H, 3H) MXU matmul.
        qkv = jnp.dot(h, wqkv, preferred_element_type=f32) + bqkv  # (B*S, 3H)
        q = qkv[:, 0:HID].reshape(BATCH, SEQ, HID)                 # (B, S, H)
        k = qkv[:, HID:2 * HID].reshape(BATCH, SEQ, HID)
        v = qkv[:, 2 * HID:3 * HID].reshape(BATCH, SEQ, HID)

        # Heads only exist for the tiny (S x S) score / context einsums.
        # TODO(synk): attention-probs dropout / head_mask omitted (p=0 / None).
        ctx_heads = []
        for hd in range(HEADS):                     # static 4-iteration loop
            sl = slice(hd * HEAD_DIM, (hd + 1) * HEAD_DIM)
            qh, kh, vh = q[:, :, sl], k[:, :, sl], v[:, :, sl]     # (B, S, D)
            s = jnp.einsum('bqd,bkd->bqk', qh, kh,
                           preferred_element_type=f32) * scale     # (B, S, S)
            s = s + mask_b
            m = jnp.max(s, axis=-1, keepdims=True)
            e = jnp.exp(s - m)
            p = e / jnp.sum(e, axis=-1, keepdims=True)             # exact softmax
            ctx_heads.append(jnp.einsum('bqk,bkd->bqd', p, vh,
                                        preferred_element_type=f32))
        # Head -> lane flatten (tiny XLU concat), then ONE K=32 output matmul
        # (identical to torch.einsum('bfnd,ndh->bfh', ctx, Wo.view(n,d,h)) + b).
        ctx = jnp.concatenate(ctx_heads, axis=-1).reshape(BATCH * SEQ, HID)
        proj = jnp.dot(ctx, wo, preferred_element_type=f32) + bo
        # TODO(synk): projected-context dropout is identity in eval (p=0).
        x1 = _layernorm(h + proj, g1, b1)                          # attn LayerNorm

        # -------------------------------- FFN ---------------------------------
        f = _gelu_new(jnp.dot(x1, wf, preferred_element_type=f32) + bf)
        fo = jnp.dot(f, wfo, preferred_element_type=f32) + bfo
        return _layernorm(fo + x1, g2, b2)                         # full_layer LN

    # ALBERT shares one layer's weights across all num_hidden_layers
    # (num_hidden_groups=1, inner_group_num=1), so the same slab slices feed
    # every iteration of the in-kernel layer loop.
    h = lax.fori_loop(0, NUM_LAYERS, lambda _, hh: one_layer(hh), h0, unroll=True)

    out_ref[...] = h.astype(out_ref.dtype)


# ------------------------------ wrapper ---------------------------------------
def _pack_params(params):
    """Pack all weights/biases into one lane-dense (SLAB_ROWS, 128) f32 slab."""
    p = params["groups"][0][0]

    def pad(x):
        r, c = x.shape
        return jnp.pad(x.astype(jnp.float32), ((0, 0), (0, LANES - c)))

    wqkv = jnp.concatenate([p["wq"], p["wk"], p["wv"]], axis=1)    # (HID, 3H)
    bqkv = jnp.concatenate([p["bq"], p["bk"], p["bv"]], axis=1)    # (1, 3H)

    pieces = [
        pad(params["emb_w"]),   # rows   0:16
        pad(wqkv),              # rows  16:48
        pad(p["wo"]),           # rows  48:80
        pad(p["wf"]),           # rows  80:112
        pad(p["wfo"]),          # rows 112:176
        pad(params["emb_b"]),   # row 176
        pad(bqkv),              # row 177
        pad(p["bo"]),           # row 178
        pad(p["g1"]),           # row 179
        pad(p["b1"]),           # row 180
        pad(p["bf"]),           # row 181
        pad(p["bfo"]),          # row 182
        pad(p["g2"]),           # row 183
        pad(p["b2"]),           # row 184
    ]
    slab = jnp.concatenate(pieces, axis=0)                         # (185, 128)
    slab = jnp.pad(slab, ((0, SLAB_ROWS - slab.shape[0]), (0, 0))) # (192, 128)
    return slab


def albert_transformer_forward(hidden_states, attention_mask, params):
    """Mirrors AlbertTransformer.forward (output_attentions/hidden_states off)."""
    B, S, E = hidden_states.shape
    assert (B, S, E) == (BATCH, SEQ, EMB)
    # The kernel hard-codes ALBERT weight sharing: one weight set for all layers.
    assert NUM_GROUPS == 1 and INNER_GROUP == 1
    assert len(params["groups"]) == 1 and len(params["groups"][0]) == 1

    slab = _pack_params(params)
    x2d = hidden_states.reshape(B * S, E)          # leading-dim flatten (free)
    mask2d = attention_mask.reshape(B, S)          # additive mask per key pos

    out = pl.pallas_call(
        albert_fused_kernel,
        out_shape=jax.ShapeDtypeStruct((B * S, HID), hidden_states.dtype),
        # No grid: single invocation, whole arrays resident in VMEM,
        # no double-buffer pipelining machinery for ~100 KiB of input.
    )(x2d, mask2d, slab)

    return (out.reshape(B, S, HID),)


# --------------------------- reference (pure JAX) -----------------------------
def _ref_forward(x, mask, params):
    h = x @ params["emb_w"] + params["emb_b"][0]
    layers_per_group = NUM_LAYERS // NUM_GROUPS
    for i in range(NUM_LAYERS):
        p = params["groups"][i // layers_per_group][0]
        q = h @ p["wq"] + p["bq"][0]
        k = h @ p["wk"] + p["bk"][0]
        v = h @ p["wv"] + p["bv"][0]

        def split(t):
            return t.reshape(BATCH, SEQ, HEADS, HEAD_DIM).transpose(0, 2, 1, 3)

        qh, kh, vh = split(q), split(k), split(v)
        scores = jnp.einsum("bhqd,bhkd->bhqk", qh, kh) / math.sqrt(HEAD_DIM)
        scores = scores + mask[:, None, :, :]          # (B,1,1,S) broadcast
        probs = jax.nn.softmax(scores, axis=-1)
        ctx = jnp.einsum("bhqk,bhkd->bhqd", probs, vh)
        ctx = ctx.transpose(0, 2, 1, 3).reshape(BATCH, SEQ, HID)
        proj = ctx @ p["wo"] + p["bo"][0]
        x1 = _layernorm(h + proj, p["g1"][0], p["b1"][0])
        f = _gelu_new(x1 @ p["wf"] + p["bf"][0])
        fo = f @ p["wfo"] + p["bfo"][0]
        h = _layernorm(fo + x1, p["g2"][0], p["b2"][0])
    return h


# ------------------------------ params ----------------------------------------
def init_params(key):
    def lin(k, din, dout):
        k1, k2 = jax.random.split(k)
        w = jax.random.normal(k1, (din, dout), jnp.float32) * 0.02
        b = jax.random.normal(k2, (1, dout), jnp.float32) * 0.02
        return w, b

    keys = jax.random.split(key, 8)
    emb_w, emb_b = lin(keys[0], EMB, HID)

    wq, bq = lin(keys[1], HID, HID)
    wk, bk = lin(keys[2], HID, HID)
    wv, bv = lin(keys[3], HID, HID)
    wo, bo = lin(keys[4], HID, HID)      # attention.dense (weight already transposed)
    wf, bf = lin(keys[5], HID, INTER)    # ffn
    wfo, bfo = lin(keys[6], INTER, HID)  # ffn_output

    layer = dict(
        wq=wq, bq=bq, wk=wk, bk=bk, wv=wv, bv=bv,
        wo=wo, bo=bo,
        g1=jnp.ones((1, HID), jnp.float32), b1=jnp.zeros((1, HID), jnp.float32),
        wf=wf, bf=bf, wfo=wfo, bfo=bfo,
        g2=jnp.ones((1, HID), jnp.float32), b2=jnp.zeros((1, HID), jnp.float32),
    )
    # ALBERT: one shared layer group (num_hidden_groups=1, inner_group_num=1)
    return dict(emb_w=emb_w, emb_b=emb_b, groups=[[layer]])


# -------------------------------- main -----------------------------------------
if __name__ == "__main__":
    key = jax.random.PRNGKey(0)
    k_param, k_x = jax.random.split(key)
    params = init_params(k_param)

    hidden_states = jax.random.normal(k_x, (BATCH, SEQ, EMB), jnp.float32)
    attention_mask = jnp.zeros((BATCH, 1, SEQ), jnp.float32)  # additive mask

    out = albert_transformer_forward(hidden_states, attention_mask, params)[0]
    out = jax.block_until_ready(out)

    ref = _ref_forward(hidden_states, attention_mask, params)
    assert out.shape == (BATCH, SEQ, HID)
    # Tolerance covers MXU f32 multi-pass rounding vs. the XLA reference path
    # (softmax normalisation is exact in both now).
    assert jnp.allclose(out, ref, atol=1e-3, rtol=1e-3), "mismatch vs JAX reference"

    print("KERNEL_OK")
</pallas_src>

<mosaic_0001>
module attributes {stable_mosaic.version = 11 : i64} {
  func.func @albert_fused_kernel(%arg0: memref<16x16xf32, #tpu.memory_space<vmem>>, %arg1: memref<2x8xf32, #tpu.memory_space<vmem>>, %arg2: memref<192x128xf32, #tpu.memory_space<vmem>>, %arg3: memref<16x32xf32, #tpu.memory_space<vmem>>) attributes {dimension_semantics = [], scalar_prefetch = 0 : i64, scratch_operands = 0 : i64, tpu.core_type = #tpu.core_type<tc>} {
    %c0 = arith.constant 0 : index
    %c0_0 = arith.constant 0 : index
    %0 = vector.load %arg0[%c0, %c0_0] : memref<16x16xf32, #tpu.memory_space<vmem>>, vector<16x16xf32>
    %c0_1 = arith.constant 0 : index
    %c0_2 = arith.constant 0 : index
    %1 = vector.load %arg1[%c0_1, %c0_2] : memref<2x8xf32, #tpu.memory_space<vmem>>, vector<2x8xf32>
    %c0_3 = arith.constant 0 : index
    %c0_4 = arith.constant 0 : index
    %2 = vector.load %arg2[%c0_3, %c0_4] : memref<192x128xf32, #tpu.memory_space<vmem>>, vector<16x32xf32>
    %c16 = arith.constant 16 : index
    %c0_5 = arith.constant 0 : index
    %3 = vector.load %arg2[%c16, %c0_5] : memref<192x128xf32, #tpu.memory_space<vmem>>, vector<32x96xf32>
    %c48 = arith.constant 48 : index
    %c0_6 = arith.constant 0 : index
    %4 = vector.load %arg2[%c48, %c0_6] : memref<192x128xf32, #tpu.memory_space<vmem>>, vector<32x32xf32>
    %c80 = arith.constant 80 : index
    %c0_7 = arith.constant 0 : index
    %5 = vector.load %arg2[%c80, %c0_7] : memref<192x128xf32, #tpu.memory_space<vmem>>, vector<32x64xf32>
    %c112 = arith.constant 112 : index
    %c0_8 = arith.constant 0 : index
    %6 = vector.load %arg2[%c112, %c0_8] : memref<192x128xf32, #tpu.memory_space<vmem>>, vector<64x32xf32>
    %c176 = arith.constant 176 : index
    %c0_9 = arith.constant 0 : index
    %7 = vector.load %arg2[%c176, %c0_9] : memref<192x128xf32, #tpu.memory_space<vmem>>, vector<1x32xf32>
    %c177 = arith.constant 177 : index
    %c0_10 = arith.constant 0 : index
    %8 = vector.load %arg2[%c177, %c0_10] : memref<192x128xf32, #tpu.memory_space<vmem>>, vector<1x96xf32>
    %c178 = arith.constant 178 : index
    %c0_11 = arith.constant 0 : index
    %9 = vector.load %arg2[%c178, %c0_11] : memref<192x128xf32, #tpu.memory_space<vmem>>, vector<1x32xf32>
    %c179 = arith.constant 179 : index
    %c0_12 = arith.constant 0 : index
    %10 = vector.load %arg2[%c179, %c0_12] : memref<192x128xf32, #tpu.memory_space<vmem>>, vector<1x32xf32>
    %c180 = arith.constant 180 : index
    %c0_13 = arith.constant 0 : index
    %11 = vector.load %arg2[%c180, %c0_13] : memref<192x128xf32, #tpu.memory_space<vmem>>, vector<1x32xf32>
    %c181 = arith.constant 181 : index
    %c0_14 = arith.constant 0 : index
    %12 = vector.load %arg2[%c181, %c0_14] : memref<192x128xf32, #tpu.memory_space<vmem>>, vector<1x64xf32>
    %c182 = arith.constant 182 : index
    %c0_15 = arith.constant 0 : index
    %13 = vector.load %arg2[%c182, %c0_15] : memref<192x128xf32, #tpu.memory_space<vmem>>, vector<1x32xf32>
    %c183 = arith.constant 183 : index
    %c0_16 = arith.constant 0 : index
    %14 = vector.load %arg2[%c183, %c0_16] : memref<192x128xf32, #tpu.memory_space<vmem>>, vector<1x32xf32>
    %c184 = arith.constant 184 : index
    %c0_17 = arith.constant 0 : index
    %15 = vector.load %arg2[%c184, %c0_17] : memref<192x128xf32, #tpu.memory_space<vmem>>, vector<1x32xf32>
    %cst = arith.constant dense<0.000000e+00> : vector<16x32xf32>
    %16 = tpu.matmul %0, %2, %cst {dimension_numbers = #tpu.dot_dimension_numbers<[1], [0], [0], [1], [0, 0, 1, 1], [], []>} : vector<16x16xf32>, vector<16x32xf32>, vector<16x32xf32> -> vector<16x32xf32>
    %17 = vector.broadcast %7 : vector<1x32xf32> to vector<16x32xf32>
    %18 = arith.addf %16, %17 : vector<16x32xf32>
    %19 = vector.shape_cast %1 : vector<2x8xf32> to vector<2x1x8xf32>
    %c0_i32 = arith.constant 0 : i32
    %cst_18 = arith.constant dense<0.000000e+00> : vector<16x96xf32>
    %20 = tpu.matmul %18, %3, %cst_18 {dimension_numbers = #tpu.dot_dimension_numbers<[1], [0], [0], [1], [0, 0, 1, 1], [], []>} : vector<16x32xf32>, vector<32x96xf32>, vector<16x96xf32> -> vector<16x96xf32>
    %21 = vector.broadcast %8 : vector<1x96xf32> to vector<16x96xf32>
    %22 = arith.addf %20, %21 : vector<16x96xf32>
    %23 = vector.extract_strided_slice %22 {offsets = [0, 0], sizes = [16, 32], strides = [1, 1]} : vector<16x96xf32> to vector<16x32xf32>
    %24 = vector.shape_cast %23 : vector<16x32xf32> to vector<2x8x32xf32>
    %25 = vector.extract_strided_slice %22 {offsets = [0, 32], sizes = [16, 32], strides = [1, 1]} : vector<16x96xf32> to vector<16x32xf32>
    %26 = vector.shape_cast %25 : vector<16x32xf32> to vector<2x8x32xf32>
    %27 = vector.extract_strided_slice %22 {offsets = [0, 64], sizes = [16, 32], strides = [1, 1]} : vector<16x96xf32> to vector<16x32xf32>
    %28 = vector.shape_cast %27 : vector<16x32xf32> to vector<2x8x32xf32>
    %29 = vector.extract_strided_slice %24 {offsets = [0, 0, 0], sizes = [2, 8, 8], strides = [1, 1, 1]} : vector<2x8x32xf32> to vector<2x8x8xf32>
    %30 = vector.extract_strided_slice %26 {offsets = [0, 0, 0], sizes = [2, 8, 8], strides = [1, 1, 1]} : vector<2x8x32xf32> to vector<2x8x8xf32>
    %31 = vector.extract_strided_slice %28 {offsets = [0, 0, 0], sizes = [2, 8, 8], strides = [1, 1, 1]} : vector<2x8x32xf32> to vector<2x8x8xf32>
    "tpu.trace_start"() <{level = 10 : i32, message = "bqd,bkd->bqk"}> : () -> ()
    %cst_19 = arith.constant dense<0.000000e+00> : vector<2x8x8xf32>
    %32 = tpu.matmul %29, %30, %cst_19 {dimension_numbers = #tpu.dot_dimension_numbers<[2], [2], [1], [1], [0, 0, 0, 1, 1, 1], [0], [0]>} : vector<2x8x8xf32>, vector<2x8x8xf32>, vector<2x8x8xf32> -> vector<2x8x8xf32>
    "tpu.trace_stop"() : () -> ()
    %cst_20 = arith.constant 0.353553385 : f32
    %33 = vector.broadcast %cst_20 : f32 to vector<2x8x8xf32>
    %34 = arith.mulf %32, %33 : vector<2x8x8xf32>
    %35 = vector.broadcast %19 : vector<2x1x8xf32> to vector<2x8x8xf32>
    %36 = arith.addf %34, %35 : vector<2x8x8xf32>
    %cst_21 = arith.constant dense<0xFF800000> : vector<2x8xf32>
    %37 = vector.multi_reduction <maximumf>, %36, %cst_21 [2] : vector<2x8x8xf32> to vector<2x8xf32>
    %38 = vector.shape_cast %37 : vector<2x8xf32> to vector<2x8x1xf32>
    %39 = vector.broadcast %38 : vector<2x8x1xf32> to vector<2x8x8xf32>
    %40 = arith.subf %36, %39 : vector<2x8x8xf32>
    %41 = math.exp %40 : vector<2x8x8xf32>
    %cst_22 = arith.constant dense<0.000000e+00> : vector<2x8xf32>
    %42 = vector.multi_reduction <add>, %41, %cst_22 [2] : vector<2x8x8xf32> to vector<2x8xf32>
    %43 = vector.shape_cast %42 : vector<2x8xf32> to vector<2x8x1xf32>
    %44 = vector.broadcast %43 : vector<2x8x1xf32> to vector<2x8x8xf32>
    %45 = arith.divf %41, %44 : vector<2x8x8xf32>
    "tpu.trace_start"() <{level = 10 : i32, message = "bqk,bkd->bqd"}> : () -> ()
    %cst_23 = arith.constant dense<0.000000e+00> : vector<2x8x8xf32>
    %46 = tpu.matmul %45, %31, %cst_23 {dimension_numbers = #tpu.dot_dimension_numbers<[2], [1], [1], [2], [0, 0, 0, 1, 1, 2], [0], [0]>} : vector<2x8x8xf32>, vector<2x8x8xf32>, vector<2x8x8xf32> -> vector<2x8x8xf32>
    "tpu.trace_stop"() : () -> ()
    %47 = vector.extract_strided_slice %24 {offsets = [0, 0, 8], sizes = [2, 8, 8], strides = [1, 1, 1]} : vector<2x8x32xf32> to vector<2x8x8xf32>
    %48 = vector.extract_strided_slice %26 {offsets = [0, 0, 8], sizes = [2, 8, 8], strides = [1, 1, 1]} : vector<2x8x32xf32> to vector<2x8x8xf32>
    %49 = vector.extract_strided_slice %28 {offsets = [0, 0, 8], sizes = [2, 8, 8], strides = [1, 1, 1]} : vector<2x8x32xf32> to vector<2x8x8xf32>
    "tpu.trace_start"() <{level = 10 : i32, message = "bqd,bkd->bqk"}> : () -> ()
    %cst_24 = arith.constant dense<0.000000e+00> : vector<2x8x8xf32>
    %50 = tpu.matmul %47, %48, %cst_24 {dimension_numbers = #tpu.dot_dimension_numbers<[2], [2], [1], [1], [0, 0, 0, 1, 1, 1], [0], [0]>} : vector<2x8x8xf32>, vector<2x8x8xf32>, vector<2x8x8xf32> -> vector<2x8x8xf32>
    "tpu.trace_stop"() : () -> ()
    %cst_25 = arith.constant 0.353553385 : f32
    %51 = vector.broadcast %cst_25 : f32 to vector<2x8x8xf32>
    %52 = arith.mulf %50, %51 : vector<2x8x8xf32>
    %53 = vector.broadcast %19 : vector<2x1x8xf32> to vector<2x8x8xf32>
    %54 = arith.addf %52, %53 : vector<2x8x8xf32>
    %cst_26 = arith.constant dense<0xFF800000> : vector<2x8xf32>
    %55 = vector.multi_reduction <maximumf>, %54, %cst_26 [2] : vector<2x8x8xf32> to vector<2x8xf32>
    %56 = vector.shape_cast %55 : vector<2x8xf32> to vector<2x8x1xf32>
    %57 = vector.broadcast %56 : vector<2x8x1xf32> to vector<2x8x8xf32>
    %58 = arith.subf %54, %57 : vector<2x8x8xf32>
    %59 = math.exp %58 : vector<2x8x8xf32>
    %cst_27 = arith.constant dense<0.000000e+00> : vector<2x8xf32>
    %60 = vector.multi_reduction <add>, %59, %cst_27 [2] : vector<2x8x8xf32> to vector<2x8xf32>
    %61 = vector.shape_cast %60 : vector<2x8xf32> to vector<2x8x1xf32>
    %62 = vector.broadcast %61 : vector<2x8x1xf32> to vector<2x8x8xf32>
    %63 = arith.divf %59, %62 : vector<2x8x8xf32>
    "tpu.trace_start"() <{level = 10 : i32, message = "bqk,bkd->bqd"}> : () -> ()
    %cst_28 = arith.constant dense<0.000000e+00> : vector<2x8x8xf32>
    %64 = tpu.matmul %63, %49, %cst_28 {dimension_numbers = #tpu.dot_dimension_numbers<[2], [1], [1], [2], [0, 0, 0, 1, 1, 2], [0], [0]>} : vector<2x8x8xf32>, vector<2x8x8xf32>, vector<2x8x8xf32> -> vector<2x8x8xf32>
    "tpu.trace_stop"() : () -> ()
    %65 = vector.extract_strided_slice %24 {offsets = [0, 0, 16], sizes = [2, 8, 8], strides = [1, 1, 1]} : vector<2x8x32xf32> to vector<2x8x8xf32>
    %66 = vector.extract_strided_slice %26 {offsets = [0, 0, 16], sizes = [2, 8, 8], strides = [1, 1, 1]} : vector<2x8x32xf32> to vector<2x8x8xf32>
    %67 = vector.extract_strided_slice %28 {offsets = [0, 0, 16], sizes = [2, 8, 8], strides = [1, 1, 1]} : vector<2x8x32xf32> to vector<2x8x8xf32>
    "tpu.trace_start"() <{level = 10 : i32, message = "bqd,bkd->bqk"}> : () -> ()
    %cst_29 = arith.constant dense<0.000000e+00> : vector<2x8x8xf32>
    %68 = tpu.matmul %65, %66, %cst_29 {dimension_numbers = #tpu.dot_dimension_numbers<[2], [2], [1], [1], [0, 0, 0, 1, 1, 1], [0], [0]>} : vector<2x8x8xf32>, vector<2x8x8xf32>, vector<2x8x8xf32> -> vector<2x8x8xf32>
    "tpu.trace_stop"() : () -> ()
    %cst_30 = arith.constant 0.353553385 : f32
    %69 = vector.broadcast %cst_30 : f32 to vector<2x8x8xf32>
    %70 = arith.mulf %68, %69 : vector<2x8x8xf32>
    %71 = vector.broadcast %19 : vector<2x1x8xf32> to vector<2x8x8xf32>
    %72 = arith.addf %70, %71 : vector<2x8x8xf32>
    %cst_31 = arith.constant dense<0xFF800000> : vector<2x8xf32>
    %73 = vector.multi_reduction <maximumf>, %72, %cst_31 [2] : vector<2x8x8xf32> to vector<2x8xf32>
    %74 = vector.shape_cast %73 : vector<2x8xf32> to vector<2x8x1xf32>
    %75 = vector.broadcast %74 : vector<2x8x1xf32> to vector<2x8x8xf32>
    %76 = arith.subf %72, %75 : vector<2x8x8xf32>
    %77 = math.exp %76 : vector<2x8x8xf32>
    %cst_32 = arith.constant dense<0.000000e+00> : vector<2x8xf32>
    %78 = vector.multi_reduction <add>, %77, %cst_32 [2] : vector<2x8x8xf32> to vector<2x8xf32>
    %79 = vector.shape_cast %78 : vector<2x8xf32> to vector<2x8x1xf32>
    %80 = vector.broadcast %79 : vector<2x8x1xf32> to vector<2x8x8xf32>
    %81 = arith.divf %77, %80 : vector<2x8x8xf32>
    "tpu.trace_start"() <{level = 10 : i32, message = "bqk,bkd->bqd"}> : () -> ()
    %cst_33 = arith.constant dense<0.000000e+00> : vector<2x8x8xf32>
    %82 = tpu.matmul %81, %67, %cst_33 {dimension_numbers = #tpu.dot_dimension_numbers<[2], [1], [1], [2], [0, 0, 0, 1, 1, 2], [0], [0]>} : vector<2x8x8xf32>, vector<2x8x8xf32>, vector<2x8x8xf32> -> vector<2x8x8xf32>
    "tpu.trace_stop"() : () -> ()
    %83 = vector.extract_strided_slice %24 {offsets = [0, 0, 24], sizes = [2, 8, 8], strides = [1, 1, 1]} : vector<2x8x32xf32> to vector<2x8x8xf32>
    %84 = vector.extract_strided_slice %26 {offsets = [0, 0, 24], sizes = [2, 8, 8], strides = [1, 1, 1]} : vector<2x8x32xf32> to vector<2x8x8xf32>
    %85 = vector.extract_strided_slice %28 {offsets = [0, 0, 24], sizes = [2, 8, 8], strides = [1, 1, 1]} : vector<2x8x32xf32> to vector<2x8x8xf32>
    "tpu.trace_start"() <{level = 10 : i32, message = "bqd,bkd->bqk"}> : () -> ()
    %cst_34 = arith.constant dense<0.000000e+00> : vector<2x8x8xf32>
    %86 = tpu.matmul %83, %84, %cst_34 {dimension_numbers = #tpu.dot_dimension_numbers<[2], [2], [1], [1], [0, 0, 0, 1, 1, 1], [0], [0]>} : vector<2x8x8xf32>, vector<2x8x8xf32>, vector<2x8x8xf32> -> vector<2x8x8xf32>
    "tpu.trace_stop"() : () -> ()
    %cst_35 = arith.constant 0.353553385 : f32
    %87 = vector.broadcast %cst_35 : f32 to vector<2x8x8xf32>
    %88 = arith.mulf %86, %87 : vector<2x8x8xf32>
    %89 = vector.broadcast %19 : vector<2x1x8xf32> to vector<2x8x8xf32>
    %90 = arith.addf %88, %89 : vector<2x8x8xf32>
    %cst_36 = arith.constant dense<0xFF800000> : vector<2x8xf32>
    %91 = vector.multi_reduction <maximumf>, %90, %cst_36 [2] : vector<2x8x8xf32> to vector<2x8xf32>
    %92 = vector.shape_cast %91 : vector<2x8xf32> to vector<2x8x1xf32>
    %93 = vector.broadcast %92 : vector<2x8x1xf32> to vector<2x8x8xf32>
    %94 = arith.subf %90, %93 : vector<2x8x8xf32>
    %95 = math.exp %94 : vector<2x8x8xf32>
    %cst_37 = arith.constant dense<0.000000e+00> : vector<2x8xf32>
    %96 = vector.multi_reduction <add>, %95, %cst_37 [2] : vector<2x8x8xf32> to vector<2x8xf32>
    %97 = vector.shape_cast %96 : vector<2x8xf32> to vector<2x8x1xf32>
    %98 = vector.broadcast %97 : vector<2x8x1xf32> to vector<2x8x8xf32>
    %99 = arith.divf %95, %98 : vector<2x8x8xf32>
    "tpu.trace_start"() <{level = 10 : i32, message = "bqk,bkd->bqd"}> : () -> ()
    %cst_38 = arith.constant dense<0.000000e+00> : vector<2x8x8xf32>
    %100 = tpu.matmul %99, %85, %cst_38 {dimension_numbers = #tpu.dot_dimension_numbers<[2], [1], [1], [2], [0, 0, 0, 1, 1, 2], [0], [0]>} : vector<2x8x8xf32>, vector<2x8x8xf32>, vector<2x8x8xf32> -> vector<2x8x8xf32>
    "tpu.trace_stop"() : () -> ()
    %101 = tpu.concatenate %46, %64, %82, %100 in 2 : vector<2x8x8xf32>, vector<2x8x8xf32>, vector<2x8x8xf32>, vector<2x8x8xf32> -> vector<2x8x32xf32>
    %102 = vector.shape_cast %101 : vector<2x8x32xf32> to vector<16x32xf32>
    %cst_39 = arith.constant dense<0.000000e+00> : vector<16x32xf32>
    %103 = tpu.matmul %102, %4, %cst_39 {dimension_numbers = #tpu.dot_dimension_numbers<[1], [0], [0], [1], [0, 0, 1, 1], [], []>} : vector<16x32xf32>, vector<32x32xf32>, vector<16x32xf32> -> vector<16x32xf32>
    %104 = vector.broadcast %9 : vector<1x32xf32> to vector<16x32xf32>
    %105 = arith.addf %103, %104 : vector<16x32xf32>
    %106 = arith.addf %18, %105 : vector<16x32xf32>
    %cst_40 = arith.constant dense<0.000000e+00> : vector<16xf32>
    %107 = vector.multi_reduction <add>, %106, %cst_40 [1] : vector<16x32xf32> to vector<16xf32>
    %108 = vector.shape_cast %107 : vector<16xf32> to vector<16x1xf32>
    %cst_41 = arith.constant 3.200000e+01 : f32
    %109 = vector.broadcast %cst_41 : f32 to vector<16x1xf32>
    %110 = arith.divf %108, %109 : vector<16x1xf32>
    %111 = vector.broadcast %110 : vector<16x1xf32> to vector<16x32xf32>
    %112 = arith.subf %106, %111 : vector<16x32xf32>
    %113 = arith.mulf %112, %112 : vector<16x32xf32>
    %cst_42 = arith.constant dense<0.000000e+00> : vector<16xf32>
    %114 = vector.multi_reduction <add>, %113, %cst_42 [1] : vector<16x32xf32> to vector<16xf32>
    %115 = vector.shape_cast %114 : vector<16xf32> to vector<16x1xf32>
    %cst_43 = arith.constant 3.200000e+01 : f32
    %116 = vector.broadcast %cst_43 : f32 to vector<16x1xf32>
    %117 = arith.divf %115, %116 : vector<16x1xf32>
    %118 = vector.broadcast %110 : vector<16x1xf32> to vector<16x32xf32>
    %119 = arith.subf %106, %118 : vector<16x32xf32>
    %cst_44 = arith.constant 9.99999996E-13 : f32
    %120 = vector.broadcast %cst_44 : f32 to vector<16x1xf32>
    %121 = arith.addf %117, %120 : vector<16x1xf32>
    %122 = math.rsqrt %121 : vector<16x1xf32>
    %123 = vector.broadcast %122 : vector<16x1xf32> to vector<16x32xf32>
    %124 = arith.mulf %119, %123 : vector<16x32xf32>
    %125 = vector.broadcast %10 : vector<1x32xf32> to vector<16x32xf32>
    %126 = arith.mulf %124, %125 : vector<16x32xf32>
    %127 = vector.broadcast %11 : vector<1x32xf32> to vector<16x32xf32>
    %128 = arith.addf %126, %127 : vector<16x32xf32>
    %cst_45 = arith.constant dense<0.000000e+00> : vector<16x64xf32>
    %129 = tpu.matmul %128, %5, %cst_45 {dimension_numbers = #tpu.dot_dimension_numbers<[1], [0], [0], [1], [0, 0, 1, 1], [], []>} : vector<16x32xf32>, vector<32x64xf32>, vector<16x64xf32> -> vector<16x64xf32>
    %130 = vector.broadcast %12 : vector<1x64xf32> to vector<16x64xf32>
    %131 = arith.addf %129, %130 : vector<16x64xf32>
    %cst_46 = arith.constant 5.000000e-01 : f32
    %132 = vector.broadcast %cst_46 : f32 to vector<16x64xf32>
    %133 = arith.mulf %132, %131 : vector<16x64xf32>
    %cst_47 = arith.constant 4.471500e-02 : f32
    %134 = vector.broadcast %cst_47 : f32 to vector<16x64xf32>
    %135 = arith.mulf %134, %131 : vector<16x64xf32>
    %136 = arith.mulf %135, %131 : vector<16x64xf32>
    %137 = arith.mulf %136, %131 : vector<16x64xf32>
    %138 = arith.addf %131, %137 : vector<16x64xf32>
    %cst_48 = arith.constant 0.797884583 : f32
    %139 = vector.broadcast %cst_48 : f32 to vector<16x64xf32>
    %140 = arith.mulf %139, %138 : vector<16x64xf32>
    %141 = math.tanh %140 : vector<16x64xf32>
    %cst_49 = arith.constant 1.000000e+00 : f32
    %142 = vector.broadcast %cst_49 : f32 to vector<16x64xf32>
    %143 = arith.addf %142, %141 : vector<16x64xf32>
    %144 = arith.mulf %133, %143 : vector<16x64xf32>
    %cst_50 = arith.constant dense<0.000000e+00> : vector<16x32xf32>
    %145 = tpu.matmul %144, %6, %cst_50 {dimension_numbers = #tpu.dot_dimension_numbers<[1], [0], [0], [1], [0, 0, 1, 1], [], []>} : vector<16x64xf32>, vector<64x32xf32>, vector<16x32xf32> -> vector<16x32xf32>
    %146 = vector.broadcast %13 : vector<1x32xf32> to vector<16x32xf32>
    %147 = arith.addf %145, %146 : vector<16x32xf32>
    %148 = arith.addf %147, %128 : vector<16x32xf32>
    %cst_51 = arith.constant dense<0.000000e+00> : vector<16xf32>
    %149 = vector.multi_reduction <add>, %148, %cst_51 [1] : vector<16x32xf32> to vector<16xf32>
    %150 = vector.shape_cast %149 : vector<16xf32> to vector<16x1xf32>
    %cst_52 = arith.constant 3.200000e+01 : f32
    %151 = vector.broadcast %cst_52 : f32 to vector<16x1xf32>
    %152 = arith.divf %150, %151 : vector<16x1xf32>
    %153 = vector.broadcast %152 : vector<16x1xf32> to vector<16x32xf32>
    %154 = arith.subf %148, %153 : vector<16x32xf32>
    %155 = arith.mulf %154, %154 : vector<16x32xf32>
    %cst_53 = arith.constant dense<0.000000e+00> : vector<16xf32>
    %156 = vector.multi_reduction <add>, %155, %cst_53 [1] : vector<16x32xf32> to vector<16xf32>
    %157 = vector.shape_cast %156 : vector<16xf32> to vector<16x1xf32>
    %cst_54 = arith.constant 3.200000e+01 : f32
    %158 = vector.broadcast %cst_54 : f32 to vector<16x1xf32>
    %159 = arith.divf %157, %158 : vector<16x1xf32>
    %160 = vector.broadcast %152 : vector<16x1xf32> to vector<16x32xf32>
    %161 = arith.subf %148, %160 : vector<16x32xf32>
    %cst_55 = arith.constant 9.99999996E-13 : f32
    %162 = vector.broadcast %cst_55 : f32 to vector<16x1xf32>
    %163 = arith.addf %159, %162 : vector<16x1xf32>
    %164 = math.rsqrt %163 : vector<16x1xf32>
    %165 = vector.broadcast %164 : vector<16x1xf32> to vector<16x32xf32>
    %166 = arith.mulf %161, %165 : vector<16x32xf32>
    %167 = vector.broadcast %14 : vector<1x32xf32> to vector<16x32xf32>
    %168 = arith.mulf %166, %167 : vector<16x32xf32>
    %169 = vector.broadcast %15 : vector<1x32xf32> to vector<16x32xf32>
    %170 = arith.addf %168, %169 : vector<16x32xf32>
    %c1_i32 = arith.constant 1 : i32
    %cst_56 = arith.constant dense<0.000000e+00> : vector<16x96xf32>
    %171 = tpu.matmul %170, %3, %cst_56 {dimension_numbers = #tpu.dot_dimension_numbers<[1], [0], [0], [1], [0, 0, 1, 1], [], []>} : vector<16x32xf32>, vector<32x96xf32>, vector<16x96xf32> -> vector<16x96xf32>
    %172 = vector.broadcast %8 : vector<1x96xf32> to vector<16x96xf32>
    %173 = arith.addf %171, %172 : vector<16x96xf32>
    %174 = vector.extract_strided_slice %173 {offsets = [0, 0], sizes = [16, 32], strides = [1, 1]} : vector<16x96xf32> to vector<16x32xf32>
    %175 = vector.shape_cast %174 : vector<16x32xf32> to vector<2x8x32xf32>
    %176 = vector.extract_strided_slice %173 {offsets = [0, 32], sizes = [16, 32], strides = [1, 1]} : vector<16x96xf32> to vector<16x32xf32>
    %177 = vector.shape_cast %176 : vector<16x32xf32> to vector<2x8x32xf32>
    %178 = vector.extract_strided_slice %173 {offsets = [0, 64], sizes = [16, 32], strides = [1, 1]} : vector<16x96xf32> to vector<16x32xf32>
    %179 = vector.shape_cast %178 : vector<16x32xf32> to vector<2x8x32xf32>
    %180 = vector.extract_strided_slice %175 {offsets = [0, 0, 0], sizes = [2, 8, 8], strides = [1, 1, 1]} : vector<2x8x32xf32> to vector<2x8x8xf32>
    %181 = vector.extract_strided_slice %177 {offsets = [0, 0, 0], sizes = [2, 8, 8], strides = [1, 1, 1]} : vector<2x8x32xf32> to vector<2x8x8xf32>
    %182 = vector.extract_strided_slice %179 {offsets = [0, 0, 0], sizes = [2, 8, 8], strides = [1, 1, 1]} : vector<2x8x32xf32> to vector<2x8x8xf32>
    "tpu.trace_start"() <{level = 10 : i32, message = "bqd,bkd->bqk"}> : () -> ()
    %cst_57 = arith.constant dense<0.000000e+00> : vector<2x8x8xf32>
    %183 = tpu.matmul %180, %181, %cst_57 {dimension_numbers = #tpu.dot_dimension_numbers<[2], [2], [1], [1], [0, 0, 0, 1, 1, 1], [0], [0]>} : vector<2x8x8xf32>, vector<2x8x8xf32>, vector<2x8x8xf32> -> vector<2x8x8xf32>
    "tpu.trace_stop"() : () -> ()
    %cst_58 = arith.constant 0.353553385 : f32
    %184 = vector.broadcast %cst_58 : f32 to vector<2x8x8xf32>
    %185 = arith.mulf %183, %184 : vector<2x8x8xf32>
    %186 = vector.broadcast %19 : vector<2x1x8xf32> to vector<2x8x8xf32>
    %187 = arith.addf %185, %186 : vector<2x8x8xf32>
    %cst_59 = arith.constant dense<0xFF800000> : vector<2x8xf32>
    %188 = vector.multi_reduction <maximumf>, %187, %cst_59 [2] : vector<2x8x8xf32> to vector<2x8xf32>
    %189 = vector.shape_cast %188 : vector<2x8xf32> to vector<2x8x1xf32>
    %190 = vector.broadcast %189 : vector<2x8x1xf32> to vector<2x8x8xf32>
    %191 = arith.subf %187, %190 : vector<2x8x8xf32>
    %192 = math.exp %191 : vector<2x8x8xf32>
    %cst_60 = arith.constant dense<0.000000e+00> : vector<2x8xf32>
    %193 = vector.multi_reduction <add>, %192, %cst_60 [2] : vector<2x8x8xf32> to vector<2x8xf32>
    %194 = vector.shape_cast %193 : vector<2x8xf32> to vector<2x8x1xf32>
    %195 = vector.broadcast %194 : vector<2x8x1xf32> to vector<2x8x8xf32>
    %196 = arith.divf %192, %195 : vector<2x8x8xf32>
    "tpu.trace_start"() <{level = 10 : i32, message = "bqk,bkd->bqd"}> : () -> ()
    %cst_61 = arith.constant dense<0.000000e+00> : vector<2x8x8xf32>
    %197 = tpu.matmul %196, %182, %cst_61 {dimension_numbers = #tpu.dot_dimension_numbers<[2], [1], [1], [2], [0, 0, 0, 1, 1, 2], [0], [0]>} : vector<2x8x8xf32>, vector<2x8x8xf32>, vector<2x8x8xf32> -> vector<2x8x8xf32>
    "tpu.trace_stop"() : () -> ()
    %198 = vector.extract_strided_slice %175 {offsets = [0, 0, 8], sizes = [2, 8, 8], strides = [1, 1, 1]} : vector<2x8x32xf32> to vector<2x8x8xf32>
    %199 = vector.extract_strided_slice %177 {offsets = [0, 0, 8], sizes = [2, 8, 8], strides = [1, 1, 1]} : vector<2x8x32xf32> to vector<2x8x8xf32>
    %200 = vector.extract_strided_slice %179 {offsets = [0, 0, 8], sizes = [2, 8, 8], strides = [1, 1, 1]} : vector<2x8x32xf32> to vector<2x8x8xf32>
    "tpu.trace_start"() <{level = 10 : i32, message = "bqd,bkd->bqk"}> : () -> ()
    %cst_62 = arith.constant dense<0.000000e+00> : vector<2x8x8xf32>
    %201 = tpu.matmul %198, %199, %cst_62 {dimension_numbers = #tpu.dot_dimension_numbers<[2], [2], [1], [1], [0, 0, 0, 1, 1, 1], [0], [0]>} : vector<2x8x8xf32>, vector<2x8x8xf32>, vector<2x8x8xf32> -> vector<2x8x8xf32>
    "tpu.trace_stop"() : () -> ()
    %cst_63 = arith.constant 0.353553385 : f32
    %202 = vector.broadcast %cst_63 : f32 to vector<2x8x8xf32>
    %203 = arith.mulf %201, %202 : vector<2x8x8xf32>
    %204 = vector.broadcast %19 : vector<2x1x8xf32> to vector<2x8x8xf32>
    %205 = arith.addf %203, %204 : vector<2x8x8xf32>
    %cst_64 = arith.constant dense<0xFF800000> : vector<2x8xf32>
    %206 = vector.multi_reduction <maximumf>, %205, %cst_64 [2] : vector<2x8x8xf32> to vector<2x8xf32>
    %207 = vector.shape_cast %206 : vector<2x8xf32> to vector<2x8x1xf32>
    %208 = vector.broadcast %207 : vector<2x8x1xf32> to vector<2x8x8xf32>
    %209 = arith.subf %205, %208 : vector<2x8x8xf32>
    %210 = math.exp %209 : vector<2x8x8xf32>
    %cst_65 = arith.constant dense<0.000000e+00> : vector<2x8xf32>
    %211 = vector.multi_reduction <add>, %210, %cst_65 [2] : vector<2x8x8xf32> to vector<2x8xf32>
    %212 = vector.shape_cast %211 : vector<2x8xf32> to vector<2x8x1xf32>
    %213 = vector.broadcast %212 : vector<2x8x1xf32> to vector<2x8x8xf32>
    %214 = arith.divf %210, %213 : vector<2x8x8xf32>
    "tpu.trace_start"() <{level = 10 : i32, message = "bqk,bkd->bqd"}> : () -> ()
    %cst_66 = arith.constant dense<0.000000e+00> : vector<2x8x8xf32>
    %215 = tpu.matmul %214, %200, %cst_66 {dimension_numbers = #tpu.dot_dimension_numbers<[2], [1], [1], [2], [0, 0, 0, 1, 1, 2], [0], [0]>} : vector<2x8x8xf32>, vector<2x8x8xf32>, vector<2x8x8xf32> -> vector<2x8x8xf32>
    "tpu.trace_stop"() : () -> ()
    %216 = vector.extract_strided_slice %175 {offsets = [0, 0, 16], sizes = [2, 8, 8], strides = [1, 1, 1]} : vector<2x8x32xf32> to vector<2x8x8xf32>
    %217 = vector.extract_strided_slice %177 {offsets = [0, 0, 16], sizes = [2, 8, 8], strides = [1, 1, 1]} : vector<2x8x32xf32> to vector<2x8x8xf32>
    %218 = vector.extract_strided_slice %179 {offsets = [0, 0, 16], sizes = [2, 8, 8], strides = [1, 1, 1]} : vector<2x8x32xf32> to vector<2x8x8xf32>
    "tpu.trace_start"() <{level = 10 : i32, message = "bqd,bkd->bqk"}> : () -> ()
    %cst_67 = arith.constant dense<0.000000e+00> : vector<2x8x8xf32>
    %219 = tpu.matmul %216, %217, %cst_67 {dimension_numbers = #tpu.dot_dimension_numbers<[2], [2], [1], [1], [0, 0, 0, 1, 1, 1], [0], [0]>} : vector<2x8x8xf32>, vector<2x8x8xf32>, vector<2x8x8xf32> -> vector<2x8x8xf32>
    "tpu.trace_stop"() : () -> ()
    %cst_68 = arith.constant 0.353553385 : f32
    %220 = vector.broadcast %cst_68 : f32 to vector<2x8x8xf32>
    %221 = arith.mulf %219, %220 : vector<2x8x8xf32>
    %222 = vector.broadcast %19 : vector<2x1x8xf32> to vector<2x8x8xf32>
    %223 = arith.addf %221, %222 : vector<2x8x8xf32>
    %cst_69 = arith.constant dense<0xFF800000> : vector<2x8xf32>
    %224 = vector.multi_reduction <maximumf>, %223, %cst_69 [2] : vector<2x8x8xf32> to vector<2x8xf32>
    %225 = vector.shape_cast %224 : vector<2x8xf32> to vector<2x8x1xf32>
    %226 = vector.broadcast %225 : vector<2x8x1xf32> to vector<2x8x8xf32>
    %227 = arith.subf %223, %226 : vector<2x8x8xf32>
    %228 = math.exp %227 : vector<2x8x8xf32>
    %cst_70 = arith.constant dense<0.000000e+00> : vector<2x8xf32>
    %229 = vector.multi_reduction <add>, %228, %cst_70 [2] : vector<2x8x8xf32> to vector<2x8xf32>
    %230 = vector.shape_cast %229 : vector<2x8xf32> to vector<2x8x1xf32>
    %231 = vector.broadcast %230 : vector<2x8x1xf32> to vector<2x8x8xf32>
    %232 = arith.divf %228, %231 : vector<2x8x8xf32>
    "tpu.trace_start"() <{level = 10 : i32, message = "bqk,bkd->bqd"}> : () -> ()
    %cst_71 = arith.constant dense<0.000000e+00> : vector<2x8x8xf32>
    %233 = tpu.matmul %232, %218, %cst_71 {dimension_numbers = #tpu.dot_dimension_numbers<[2], [1], [1], [2], [0, 0, 0, 1, 1, 2], [0], [0]>} : vector<2x8x8xf32>, vector<2x8x8xf32>, vector<2x8x8xf32> -> vector<2x8x8xf32>
    "tpu.trace_stop"() : () -> ()
    %234 = vector.extract_strided_slice %175 {offsets = [0, 0, 24], sizes = [2, 8, 8], strides = [1, 1, 1]} : vector<2x8x32xf32> to vector<2x8x8xf32>
    %235 = vector.extract_strided_slice %177 {offsets = [0, 0, 24], sizes = [2, 8, 8], strides = [1, 1, 1]} : vector<2x8x32xf32> to vector<2x8x8xf32>
    %236 = vector.extract_strided_slice %179 {offsets = [0, 0, 24], sizes = [2, 8, 8], strides = [1, 1, 1]} : vector<2x8x32xf32> to vector<2x8x8xf32>
    "tpu.trace_start"() <{level = 10 : i32, message = "bqd,bkd->bqk"}> : () -> ()
    %cst_72 = arith.constant dense<0.000000e+00> : vector<2x8x8xf32>
    %237 = tpu.matmul %234, %235, %cst_72 {dimension_numbers = #tpu.dot_dimension_numbers<[2], [2], [1], [1], [0, 0, 0, 1, 1, 1], [0], [0]>} : vector<2x8x8xf32>, vector<2x8x8xf32>, vector<2x8x8xf32> -> vector<2x8x8xf32>
    "tpu.trace_stop"() : () -> ()
    %cst_73 = arith.constant 0.353553385 : f32
    %238 = vector.broadcast %cst_73 : f32 to vector<2x8x8xf32>
    %239 = arith.mulf %237, %238 : vector<2x8x8xf32>
    %240 = vector.broadcast %19 : vector<2x1x8xf32> to vector<2x8x8xf32>
    %241 = arith.addf %239, %240 : vector<2x8x8xf32>
    %cst_74 = arith.constant dense<0xFF800000> : vector<2x8xf32>
    %242 = vector.multi_reduction <maximumf>, %241, %cst_74 [2] : vector<2x8x8xf32> to vector<2x8xf32>
    %243 = vector.shape_cast %242 : vector<2x8xf32> to vector<2x8x1xf32>
    %244 = vector.broadcast %243 : vector<2x8x1xf32> to vector<2x8x8xf32>
    %245 = arith.subf %241, %244 : vector<2x8x8xf32>
    %246 = math.exp %245 : vector<2x8x8xf32>
    %cst_75 = arith.constant dense<0.000000e+00> : vector<2x8xf32>
    %247 = vector.multi_reduction <add>, %246, %cst_75 [2] : vector<2x8x8xf32> to vector<2x8xf32>
    %248 = vector.shape_cast %247 : vector<2x8xf32> to vector<2x8x1xf32>
    %249 = vector.broadcast %248 : vector<2x8x1xf32> to vector<2x8x8xf32>
    %250 = arith.divf %246, %249 : vector<2x8x8xf32>
    "tpu.trace_start"() <{level = 10 : i32, message = "bqk,bkd->bqd"}> : () -> ()
    %cst_76 = arith.constant dense<0.000000e+00> : vector<2x8x8xf32>
    %251 = tpu.matmul %250, %236, %cst_76 {dimension_numbers = #tpu.dot_dimension_numbers<[2], [1], [1], [2], [0, 0, 0, 1, 1, 2], [0], [0]>} : vector<2x8x8xf32>, vector<2x8x8xf32>, vector<2x8x8xf32> -> vector<2x8x8xf32>
    "tpu.trace_stop"() : () -> ()
    %252 = tpu.concatenate %197, %215, %233, %251 in 2 : vector<2x8x8xf32>, vector<2x8x8xf32>, vector<2x8x8xf32>, vector<2x8x8xf32> -> vector<2x8x32xf32>
    %253 = vector.shape_cast %252 : vector<2x8x32xf32> to vector<16x32xf32>
    %cst_77 = arith.constant dense<0.000000e+00> : vector<16x32xf32>
    %254 = tpu.matmul %253, %4, %cst_77 {dimension_numbers = #tpu.dot_dimension_numbers<[1], [0], [0], [1], [0, 0, 1, 1], [], []>} : vector<16x32xf32>, vector<32x32xf32>, vector<16x32xf32> -> vector<16x32xf32>
    %255 = vector.broadcast %9 : vector<1x32xf32> to vector<16x32xf32>
    %256 = arith.addf %254, %255 : vector<16x32xf32>
    %257 = arith.addf %170, %256 : vector<16x32xf32>
    %cst_78 = arith.constant dense<0.000000e+00> : vector<16xf32>
    %258 = vector.multi_reduction <add>, %257, %cst_78 [1] : vector<16x32xf32> to vector<16xf32>
    %259 = vector.shape_cast %258 : vector<16xf32> to vector<16x1xf32>
    %cst_79 = arith.constant 3.200000e+01 : f32
    %260 = vector.broadcast %cst_79 : f32 to vector<16x1xf32>
    %261 = arith.divf %259, %260 : vector<16x1xf32>
    %262 = vector.broadcast %261 : vector<16x1xf32> to vector<16x32xf32>
    %263 = arith.subf %257, %262 : vector<16x32xf32>
    %264 = arith.mulf %263, %263 : vector<16x32xf32>
    %cst_80 = arith.constant dense<0.000000e+00> : vector<16xf32>
    %265 = vector.multi_reduction <add>, %264, %cst_80 [1] : vector<16x32xf32> to vector<16xf32>
    %266 = vector.shape_cast %265 : vector<16xf32> to vector<16x1xf32>
    %cst_81 = arith.constant 3.200000e+01 : f32
    %267 = vector.broadcast %cst_81 : f32 to vector<16x1xf32>
    %268 = arith.divf %266, %267 : vector<16x1xf32>
    %269 = vector.broadcast %261 : vector<16x1xf32> to vector<16x32xf32>
    %270 = arith.subf %257, %269 : vector<16x32xf32>
    %cst_82 = arith.constant 9.99999996E-13 : f32
    %271 = vector.broadcast %cst_82 : f32 to vector<16x1xf32>
    %272 = arith.addf %268, %271 : vector<16x1xf32>
    %273 = math.rsqrt %272 : vector<16x1xf32>
    %274 = vector.broadcast %273 : vector<16x1xf32> to vector<16x32xf32>
    %275 = arith.mulf %270, %274 : vector<16x32xf32>
    %276 = vector.broadcast %10 : vector<1x32xf32> to vector<16x32xf32>
    %277 = arith.mulf %275, %276 : vector<16x32xf32>
    %278 = vector.broadcast %11 : vector<1x32xf32> to vector<16x32xf32>
    %279 = arith.addf %277, %278 : vector<16x32xf32>
    %cst_83 = arith.constant dense<0.000000e+00> : vector<16x64xf32>
    %280 = tpu.matmul %279, %5, %cst_83 {dimension_numbers = #tpu.dot_dimension_numbers<[1], [0], [0], [1], [0, 0, 1, 1], [], []>} : vector<16x32xf32>, vector<32x64xf32>, vector<16x64xf32> -> vector<16x64xf32>
    %281 = vector.broadcast %12 : vector<1x64xf32> to vector<16x64xf32>
    %282 = arith.addf %280, %281 : vector<16x64xf32>
    %cst_84 = arith.constant 5.000000e-01 : f32
    %283 = vector.broadcast %cst_84 : f32 to vector<16x64xf32>
    %284 = arith.mulf %283, %282 : vector<16x64xf32>
    %cst_85 = arith.constant 4.471500e-02 : f32
    %285 = vector.broadcast %cst_85 : f32 to vector<16x64xf32>
    %286 = arith.mulf %285, %282 : vector<16x64xf32>
    %287 = arith.mulf %286, %282 : vector<16x64xf32>
    %288 = arith.mulf %287, %282 : vector<16x64xf32>
    %289 = arith.addf %282, %288 : vector<16x64xf32>
    %cst_86 = arith.constant 0.797884583 : f32
    %290 = vector.broadcast %cst_86 : f32 to vector<16x64xf32>
    %291 = arith.mulf %290, %289 : vector<16x64xf32>
    %292 = math.tanh %291 : vector<16x64xf32>
    %cst_87 = arith.constant 1.000000e+00 : f32
    %293 = vector.broadcast %cst_87 : f32 to vector<16x64xf32>
    %294 = arith.addf %293, %292 : vector<16x64xf32>
    %295 = arith.mulf %284, %294 : vector<16x64xf32>
    %cst_88 = arith.constant dense<0.000000e+00> : vector<16x32xf32>
    %296 = tpu.matmul %295, %6, %cst_88 {dimension_numbers = #tpu.dot_dimension_numbers<[1], [0], [0], [1], [0, 0, 1, 1], [], []>} : vector<16x64xf32>, vector<64x32xf32>, vector<16x32xf32> -> vector<16x32xf32>
    %297 = vector.broadcast %13 : vector<1x32xf32> to vector<16x32xf32>
    %298 = arith.addf %296, %297 : vector<16x32xf32>
    %299 = arith.addf %298, %279 : vector<16x32xf32>
    %cst_89 = arith.constant dense<0.000000e+00> : vector<16xf32>
    %300 = vector.multi_reduction <add>, %299, %cst_89 [1] : vector<16x32xf32> to vector<16xf32>
    %301 = vector.shape_cast %300 : vector<16xf32> to vector<16x1xf32>
    %cst_90 = arith.constant 3.200000e+01 : f32
    %302 = vector.broadcast %cst_90 : f32 to vector<16x1xf32>
    %303 = arith.divf %301, %302 : vector<16x1xf32>
    %304 = vector.broadcast %303 : vector<16x1xf32> to vector<16x32xf32>
    %305 = arith.subf %299, %304 : vector<16x32xf32>
    %306 = arith.mulf %305, %305 : vector<16x32xf32>
    %cst_91 = arith.constant dense<0.000000e+00> : vector<16xf32>
    %307 = vector.multi_reduction <add>, %306, %cst_91 [1] : vector<16x32xf32> to vector<16xf32>
    %308 = vector.shape_cast %307 : vector<16xf32> to vector<16x1xf32>
    %cst_92 = arith.constant 3.200000e+01 : f32
    %309 = vector.broadcast %cst_92 : f32 to vector<16x1xf32>
    %310 = arith.divf %308, %309 : vector<16x1xf32>
    %311 = vector.broadcast %303 : vector<16x1xf32> to vector<16x32xf32>
    %312 = arith.subf %299, %311 : vector<16x32xf32>
    %cst_93 = arith.constant 9.99999996E-13 : f32
    %313 = vector.broadcast %cst_93 : f32 to vector<16x1xf32>
    %314 = arith.addf %310, %313 : vector<16x1xf32>
    %315 = math.rsqrt %314 : vector<16x1xf32>
    %316 = vector.broadcast %315 : vector<16x1xf32> to vector<16x32xf32>
    %317 = arith.mulf %312, %316 : vector<16x32xf32>
    %318 = vector.broadcast %14 : vector<1x32xf32> to vector<16x32xf32>
    %319 = arith.mulf %317, %318 : vector<16x32xf32>
    %320 = vector.broadcast %15 : vector<1x32xf32> to vector<16x32xf32>
    %321 = arith.addf %319, %320 : vector<16x32xf32>
    %c0_94 = arith.constant 0 : index
    %c0_95 = arith.constant 0 : index
    %322 = vector.load %arg3[%c0_94, %c0_95] : memref<16x32xf32, #tpu.memory_space<vmem>>, vector<16x32xf32>
    tpu.vector_store %arg3[%c0_94, %c0_95], %321 {strides = array<i32>} : memref<16x32xf32, #tpu.memory_space<vmem>>, vector<16x32xf32>,
    return
  }
}

</mosaic_0001>

<llo_original>
// kernel: tpu_custom_call.1
$region0: #{tpu_custom_call.1}
  #allocation0 [shape = 'u32[]', space=smem, size = 0x4, offset = 0x4, fixed_abs, tag = 'smem constant byte address 0x4 - core index']
  #allocation1 [shape = 'u32[144,128]{1,0:T(1,128)}', space=vmem, size = 0x12000, scoped, tag = 'internal scratch']
  %s0 = inlined_call_operand.hbm [shape: f32[16,16], index: 0, kind: input, shape index: {}]
  %s1 = inlined_call_operand.vmem [shape: f32[2,8], index: 1, kind: input, shape index: {}]
  %s2 = inlined_call_operand.hbm [shape: f32[192,128], index: 2, kind: input, shape index: {}]
  %s3 = inlined_call_operand.hbm [shape: f32[16,32], index: 3, kind: output, shape index: {}]
  %s4 = sld [smem:[#allocation0]]
  $region30: #{tpu_custom_call.1} parent=0
    _
  %s6 = ssub.s32 1, %s4
  %s7 = scalar_select 0, %s6, %s4
  $region1: #{tpu_custom_call.1} parent=0
    #allocation2 [shape = 'u8[8192]{0}', space=vmem, size = 0x2000, scoped, tag = 'input window, operand 0, single buffered']
    #allocation3 [shape = 's32[1]{0}', space=sflag, size = 0x4, scoped, tag = 'scoped memory for tpu_custom_call.1']
    #allocation4 [shape = 's32[1]{0}', space=sflag, size = 0x4, scoped, tag = 'scoped memory for tpu_custom_call.1']
    #allocation5 [shape = 'u8[98304]{0}', space=vmem, size = 0x18000, scoped, tag = 'input window, operand 2, single buffered']
    #allocation6 [shape = 's32[1]{0}', space=sflag, size = 0x4, scoped, tag = 'scoped memory for tpu_custom_call.1']
    #allocation7 [shape = 'u8[8192]{0}', space=vmem, size = 0x2000, scoped, tag = 'output window, operand 0, single buffered']
    %8 = vsyncpa [#allocation3], 0
    %9 = vsyncpa [#allocation6], 0
    %10 = vsyncpa [#allocation4], 0
    // Predicated region
    $region2: #{tpu_custom_call.1} parent=1 // pred_check
      _
    $region3: #{tpu_custom_call.1} parent=1 // pred_check_branch
      %12 = sbr.rel (0) target = $region5
    $region4: #{tpu_custom_call.1} parent=1 // pred_region
      %s14 = ssub.s32 256, 256
      %15 = vsyncadd [#allocation3], %s14
      %s16 = sshll.u32 [#allocation2], 4
      %s17 = int_to_ptr.vmem [resolvable:$true] %s16
      %22 = dma.hbm_to_vmem [thread:$0]  %s0, 256, %s17, [#allocation3], 128, 128, 8
    $region5: #{tpu_custom_call.1} parent=1 // pred_fallthru
      _
    // Predicated region
    $region6: #{tpu_custom_call.1} parent=1 // pred_check
      _
    $region7: #{tpu_custom_call.1} parent=1 // pred_check_branch
      %24 = sbr.rel (0) target = $region9
    $region8: #{tpu_custom_call.1} parent=1 // pred_region
      _
    $region9: #{tpu_custom_call.1} parent=1 // pred_fallthru
      _
    // Predicated region
    $region10: #{tpu_custom_call.1} parent=1 // pred_check
      _
    $region11: #{tpu_custom_call.1} parent=1 // pred_check_branch
      %26 = sbr.rel (0) target = $region13
    $region12: #{tpu_custom_call.1} parent=1 // pred_region
      %s28 = ssub.s32 3072, 3072
      %29 = vsyncadd [#allocation6], %s28
      %s30 = sshll.u32 [#allocation5], 4
      %s31 = int_to_ptr.vmem [resolvable:$true] %s30
      %36 = dma.hbm_to_vmem [thread:$0]  %s2, 3072, %s31, [#allocation6], 128, 128, 8
    $region13: #{tpu_custom_call.1} parent=1 // pred_fallthru
      _
    // Predicated region
    $region14: #{tpu_custom_call.1} parent=1 // pred_check
      _
    $region15: #{tpu_custom_call.1} parent=1 // pred_check_branch
      %38 = sbr.rel (0) target = $region17
    $region16: #{tpu_custom_call.1} parent=1 // pred_region
      %39 = dma.done [#allocation3], 256
    $region17: #{tpu_custom_call.1} parent=1 // pred_fallthru
      _
    // Predicated region
    $region18: #{tpu_custom_call.1} parent=1 // pred_check
      _
    $region19: #{tpu_custom_call.1} parent=1 // pred_check_branch
      %41 = sbr.rel (0) target = $region21
    $region20: #{tpu_custom_call.1} parent=1 // pred_region
      %42 = dma.done [#allocation6], 3072
    $region21: #{tpu_custom_call.1} parent=1 // pred_fallthru
      _
    %v43 = vld [vmem:[#allocation2] sm:$0xff]
    %v44 = vld [vmem:[#allocation2 + $0x8] sm:$0xff]
    %v45 = vld [vmem:[%s1] sm:$0x3]
    %v46 = vld [vmem:[#allocation5] sm:$0xff]
    %v47 = vld [vmem:[#allocation5 + $0x8] sm:$0xff]
    %v48 = vld [vmem:[#allocation5 + $0x10] sm:$0xff]
    %v49 = vld [vmem:[#allocation5 + $0x18] sm:$0xff]
    %v50 = vld [vmem:[#allocation5 + $0x20] sm:$0xff]
    %v51 = vld [vmem:[#allocation5 + $0x28] sm:$0xff]
    %v52 = vld [vmem:[#allocation5 + $0x30] sm:$0xff]
    %v53 = vld [vmem:[#allocation5 + $0x38] sm:$0xff]
    %v54 = vld [vmem:[#allocation5 + $0x40] sm:$0xff]
    %v55 = vld [vmem:[#allocation5 + $0x48] sm:$0xff]
    %v56 = vld [vmem:[#allocation5 + $0x50] sm:$0xff]
    %v57 = vld [vmem:[#allocation5 + $0x58] sm:$0xff]
    %v58 = vld [vmem:[#allocation5 + $0x60] sm:$0xff]
    %v59 = vld [vmem:[#allocation5 + $0x68] sm:$0xff]
    %v60 = vld [vmem:[#allocation5 + $0x70] sm:$0xff]
    %v61 = vld [vmem:[#allocation5 + $0x78] sm:$0xff]
    %v62 = vld [vmem:[#allocation5 + $0x80] sm:$0xff]
    %v63 = vld [vmem:[#allocation5 + $0x88] sm:$0xff]
    %v64 = vld [vmem:[#allocation5 + $0x90] sm:$0xff]
    %v65 = vld [vmem:[#allocation5 + $0x98] sm:$0xff]
    %v66 = vld [vmem:[#allocation5 + $0xa0] sm:$0xff]
    %v67 = vld [vmem:[#allocation5 + $0xa8] sm:$0xff]
    %v68 = vld [vmem:[#allocation5 + $0xb0] sm:$0x1]
    %v69 = vld [vmem:[#allocation5 + $0xb1] sm:$0x1]
    %v70 = vld [vmem:[#allocation5 + $0xb2] sm:$0x1]
    %v71 = vld [vmem:[#allocation5 + $0xb3] sm:$0x1]
    %v72 = vld [vmem:[#allocation5 + $0xb4] sm:$0x1]
    %v73 = vld [vmem:[#allocation5 + $0xb5] sm:$0x1]
    %v74 = vld [vmem:[#allocation5 + $0xb6] sm:$0x1]
    %v75 = vld [vmem:[#allocation5 + $0xb7] sm:$0x1]
    %v76 = vld [vmem:[#allocation5 + $0xb8] sm:$0x1]
    %v77 = vlaneseq
    %v78 = vshrl.u32 %v77, 7
    %v79 = vsub.s32 0, %v78
    %v80 = vrot.slane %v68, %v79
    %vm81 = vcmask 130048
    %v83 = vsel %vm81, %v43, 0
    %v86 = vsel %vm81, %v44, 0
    %88 = vmatprep.subr.mxu0 0.0
    %89 = vmatpush1.msra.mxu0 %v46
    %90 = vmatprep.subr.mxu0 0.0
    %91 = vmatpush1.msra.mxu0 %v47
    %92 = vmatprep.subr.mxu0 0.0
    %93 = vmatpush1.msra.mxu0 0.0
    %94 = vmatprep.subr.mxu0 0.0
    %95 = vmatpush1.msra.mxu0 0.0
    %96 = vmatprep.subr.mxu0 0.0
    %97 = vmatpush1.msra.mxu0 0.0
    %98 = vmatprep.subr.mxu0 0.0
    %99 = vmatpush1.msra.mxu0 0.0
    %100 = vmatprep.subr.mxu0 0.0
    %101 = vmatpush1.msra.mxu0 0.0
    %102 = vmatprep.subr.mxu0 0.0
    %103 = vmatpush1.msra.mxu0 0.0
    %104 = vmatprep.subr.mxu0 0.0
    %105 = vmatpush1.msra.mxu0 0.0
    %106 = vmatprep.subr.mxu0 0.0
    %107 = vmatpush1.msra.mxu0 0.0
    %108 = vmatprep.subr.mxu0 0.0
    %109 = vmatpush1.msra.mxu0 0.0
    %110 = vmatprep.subr.mxu0 0.0
    %111 = vmatpush1.msra.mxu0 0.0
    %112 = vmatprep.subr.mxu0 0.0
    %113 = vmatpush1.msra.mxu0 0.0
    %114 = vmatprep.subr.mxu0 0.0
    %115 = vmatpush1.msra.mxu0 0.0
    %116 = vmatprep.subr.mxu0 0.0
    %117 = vmatpush1.msra.mxu0 0.0
    %118 = vmatprep.subr.mxu0 0.0
    %119 = vmatpush1.msra.mxu0 0.0
    %120 = vmatprep.subr.mxu0 0.0
    %121 = vmatpush1.msra.mxu0 0.0
    %122 = vmatprep.subr.mxu0 0.0
    %123 = vmatpush1.msra.mxu0 0.0
    %124 = vmatprep.subr.mxu0 0.0
    %125 = vmatpush1.msra.mxu0 0.0
    %126 = vmatprep.subr.mxu0 0.0
    %127 = vmatpush1.msra.mxu0 0.0
    %128 = vmatprep.subr.mxu0 0.0
    %129 = vmatpush1.msra.mxu0 0.0
    %130 = vmatprep.subr.mxu0 0.0
    %131 = vmatpush1.msra.mxu0 0.0
    %132 = vmatprep.subr.mxu0 0.0
    %133 = vmatpush1.msra.mxu0 0.0
    %134 = vmatprep.subr.mxu0 0.0
    %135 = vmatpush1.msra.mxu0 0.0
    %136 = vmatprep.subr.mxu0 0.0
    %137 = vmatpush1.msra.mxu0 0.0
    %138 = vmatprep.subr.mxu0 0.0
    %139 = vmatpush1.msra.mxu0 0.0
    %140 = vmatprep.subr.mxu0 0.0
    %141 = vmatpush1.msra.mxu0 0.0
    %142 = vmatprep.subr.mxu0 0.0
    %143 = vmatpush1.msra.mxu0 0.0
    %144 = vmatprep.subr.mxu0 0.0
    %145 = vmatpush1.msra.mxu0 0.0
    %146 = vmatprep.subr.mxu0 0.0
    %147 = vmatpush1.msra.mxu0 0.0
    %148 = vmatprep.subr.mxu0 0.0
    %149 = vmatpush1.msra.mxu0 0.0
    %150 = vmatprep.subr.mxu0 0.0
    %151 = vmatpush1.msra.mxu0 0.0
    %152 = vmatprep.mubr.f32.mxu0 0.0
    %153 = vmatmul.mubr.f32.gmra.mrb[0].mxu0 %v83
    %v154 = vpop.f32.mrb[0].mxu0
    %v155 = vadd.f32 %v80, %v154
    %v156 = vpop.f32.mrb[0].mxu0
    %157 = vmatprep.mubr.f32.mxu0 0.0
    %158 = vmatmul.mubr.f32.gmra.mrb[0].mxu0 %v86
    %v159 = vpop.f32.mrb[0].mxu0
    %v160 = vadd.f32 %v80, %v159
    %v161 = vpop.f32.mrb[0].mxu0
    %162 = vdwg.mxu0
    %v165 = vunpack.c.l.s4 1966171168
    %v166 = vunpack.c.0.s8 %v165
    %v167 = vlaneseq
    %v168 = vshrl.u32 %v167, 7
    %v169 = vsub.s32 %v166, %v168
    %v170 = vrot.slane %v45, %v169
    %v171 = vcombine.high %v170, %v170
    %v173 = vunpack.c.l.s4 1966171168
    %v174 = vunpack.c.0.s8 %v173
    %v175 = vlaneseq
    %v176 = vshrl.u32 %v175, 7
    %v177 = vsub.s32 %v174, %v176
    %v178 = vrot.slane %v170, %v177
    %v180 = vunpack.c.l.s4 1966171168
    %v181 = vunpack.c.0.s8 %v180
    %v182 = vlaneseq
    %v183 = vshrl.u32 %v182, 7
    %v184 = vsub.s32 %v181, %v183
    %v185 = vrot.slane %v171, %v184
    %v186 = vlaneseq
    %v187 = vshrl.u32 %v186, 7
    %v188 = vsub.s32 0, %v187
    %v189 = vrot.slane %v69, %v188
    %vm190 = vcmask 261120
    %v192 = vsel %vm190, %v155, 0
    %v195 = vsel %vm190, %v160, 0
    %197 = vmatprep.subr.mxu0 0.0
    %198 = vmatpush1.msra.mxu0 %v48
    %199 = vmatprep.subr.mxu0 0.0
    %200 = vmatpush1.msra.mxu0 %v49
    %201 = vmatprep.subr.mxu0 0.0
    %202 = vmatpush1.msra.mxu0 %v50
    %203 = vmatprep.subr.mxu0 0.0
    %204 = vmatpush1.msra.mxu0 %v51
    %205 = vmatprep.subr.mxu0 0.0
    %206 = vmatpush1.msra.mxu0 0.0
    %207 = vmatprep.subr.mxu0 0.0
    %208 = vmatpush1.msra.mxu0 0.0
    %209 = vmatprep.subr.mxu0 0.0
    %210 = vmatpush1.msra.mxu0 0.0
    %211 = vmatprep.subr.mxu0 0.0
    %212 = vmatpush1.msra.mxu0 0.0
    %213 = vmatprep.subr.mxu0 0.0
    %214 = vmatpush1.msra.mxu0 0.0
    %215 = vmatprep.subr.mxu0 0.0
    %216 = vmatpush1.msra.mxu0 0.0
    %217 = vmatprep.subr.mxu0 0.0
    %218 = vmatpush1.msra.mxu0 0.0
    %219 = vmatprep.subr.mxu0 0.0
    %220 = vmatpush1.msra.mxu0 0.0
    %221 = vmatprep.subr.mxu0 0.0
    %222 = vmatpush1.msra.mxu0 0.0
    %223 = vmatprep.subr.mxu0 0.0
    %224 = vmatpush1.msra.mxu0 0.0
    %225 = vmatprep.subr.mxu0 0.0
    %226 = vmatpush1.msra.mxu0 0.0
    %227 = vmatprep.subr.mxu0 0.0
    %228 = vmatpush1.msra.mxu0 0.0
    %229 = vmatprep.subr.mxu0 0.0
    %230 = vmatpush1.msra.mxu0 0.0
    %231 = vmatprep.subr.mxu0 0.0
    %232 = vmatpush1.msra.mxu0 0.0
    %233 = vmatprep.subr.mxu0 0.0
    %234 = vmatpush1.msra.mxu0 0.0
    %235 = vmatprep.subr.mxu0 0.0
    %236 = vmatpush1.msra.mxu0 0.0
    %237 = vmatprep.subr.mxu0 0.0
    %238 = vmatpush1.msra.mxu0 0.0
    %239 = vmatprep.subr.mxu0 0.0
    %240 = vmatpush1.msra.mxu0 0.0
    %241 = vmatprep.subr.mxu0 0.0
    %242 = vmatpush1.msra.mxu0 0.0
    %243 = vmatprep.subr.mxu0 0.0
    %244 = vmatpush1.msra.mxu0 0.0
    %245 = vmatprep.subr.mxu0 0.0
    %246 = vmatpush1.msra.mxu0 0.0
    %247 = vmatprep.subr.mxu0 0.0
    %248 = vmatpush1.msra.mxu0 0.0
    %249 = vmatprep.subr.mxu0 0.0
    %250 = vmatpush1.msra.mxu0 0.0
    %251 = vmatprep.subr.mxu0 0.0
    %252 = vmatpush1.msra.mxu0 0.0
    %253 = vmatprep.subr.mxu0 0.0
    %254 = vmatpush1.msra.mxu0 0.0
    %255 = vmatprep.subr.mxu0 0.0
    %256 = vmatpush1.msra.mxu0 0.0
    %257 = vmatprep.subr.mxu0 0.0
    %258 = vmatpush1.msra.mxu0 0.0
    %259 = vmatprep.subr.mxu0 0.0
    %260 = vmatpush1.msra.mxu0 0.0
    %261 = vmatprep.mubr.f32.mxu0 0.0
    %262 = vmatmul.mubr.f32.gmra.mrb[0].mxu0 %v192
    %v263 = vpop.f32.mrb[0].mxu0
    %v264 = vadd.f32 %v189, %v263
    %v265 = vpop.f32.mrb[0].mxu0
    %266 = vmatprep.mubr.f32.mxu0 0.0
    %267 = vmatmul.mubr.f32.gmra.mrb[0].mxu0 %v195
    %v268 = vpop.f32.mrb[0].mxu0
    %v269 = vadd.f32 %v189, %v268
    %v270 = vpop.f32.mrb[0].mxu0
    %271 = vdwg.mxu0
    %273 = vrot.lane.b32.xlu0 %v264, 96
    %v274 = vpop.permute.xlu0 %273
    %vm275 = vcmask 64512
    %v276 = vsel %vm275, %v264, 0
    %v278 = vsel %vm275, %v274, 0
    %280 = vmatprep.subr.mxu0 0.0
    %281 = vmatpush1.xpose.msra.mxu0 %v278
    %282 = vmatprep.subr.mxu0 0.0
    %283 = vmatpush1.xpose.msra.mxu0 0.0
    %284 = vmatprep.subr.mxu0 0.0
    %285 = vmatpush1.xpose.msra.mxu0 0.0
    %286 = vmatprep.subr.mxu0 0.0
    %287 = vmatpush1.xpose.msra.mxu0 0.0
    %288 = vmatprep.subr.mxu0 0.0
    %289 = vmatpush1.xpose.msra.mxu0 0.0
    %290 = vmatprep.subr.mxu0 0.0
    %291 = vmatpush1.xpose.msra.mxu0 0.0
    %292 = vmatprep.subr.mxu0 0.0
    %293 = vmatpush1.xpose.msra.mxu0 0.0
    %294 = vmatprep.subr.mxu0 0.0
    %295 = vmatpush1.xpose.msra.mxu0 0.0
    %296 = vmatprep.subr.mxu0 0.0
    %297 = vmatpush1.xpose.msra.mxu0 0.0
    %298 = vmatprep.subr.mxu0 0.0
    %299 = vmatpush1.xpose.msra.mxu0 0.0
    %300 = vmatprep.subr.mxu0 0.0
    %301 = vmatpush1.xpose.msra.mxu0 0.0
    %302 = vmatprep.subr.mxu0 0.0
    %303 = vmatpush1.xpose.msra.mxu0 0.0
    %304 = vmatprep.subr.mxu0 0.0
    %305 = vmatpush1.xpose.msra.mxu0 0.0
    %306 = vmatprep.subr.mxu0 0.0
    %307 = vmatpush1.xpose.msra.mxu0 0.0
    %308 = vmatprep.subr.mxu0 0.0
    %309 = vmatpush1.xpose.msra.mxu0 0.0
    %310 = vmatprep.subr.mxu0 0.0
    %311 = vmatpush1.xpose.msra.mxu0 0.0
    %312 = vmatprep.subr.mxu0 0.0
    %313 = vmatpush1.xpose.msra.mxu0 0.0
    %314 = vmatprep.subr.mxu0 0.0
    %315 = vmatpush1.xpose.msra.mxu0 0.0
    %316 = vmatprep.subr.mxu0 0.0
    %317 = vmatpush1.xpose.msra.mxu0 0.0
    %318 = vmatprep.subr.mxu0 0.0
    %319 = vmatpush1.xpose.msra.mxu0 0.0
    %320 = vmatprep.subr.mxu0 0.0
    %321 = vmatpush1.xpose.msra.mxu0 0.0
    %322 = vmatprep.subr.mxu0 0.0
    %323 = vmatpush1.xpose.msra.mxu0 0.0
    %324 = vmatprep.subr.mxu0 0.0
    %325 = vmatpush1.xpose.msra.mxu0 0.0
    %326 = vmatprep.subr.mxu0 0.0
    %327 = vmatpush1.xpose.msra.mxu0 0.0
    %328 = vmatprep.subr.mxu0 0.0
    %329 = vmatpush1.xpose.msra.mxu0 0.0
    %330 = vmatprep.subr.mxu0 0.0
    %331 = vmatpush1.xpose.msra.mxu0 0.0
    %332 = vmatprep.subr.mxu0 0.0
    %333 = vmatpush1.xpose.msra.mxu0 0.0
    %334 = vmatprep.subr.mxu0 0.0
    %335 = vmatpush1.xpose.msra.mxu0 0.0
    %336 = vmatprep.subr.mxu0 0.0
    %337 = vmatpush1.xpose.msra.mxu0 0.0
    %338 = vmatprep.subr.mxu0 0.0
    %339 = vmatpush1.xpose.msra.mxu0 0.0
    %340 = vmatprep.subr.mxu0 0.0
    %341 = vmatpush1.xpose.msra.mxu0 0.0
    %342 = vmatprep.subr.mxu0 0.0
    %343 = vmatpush1.xpose.msra.mxu0 0.0
    %344 = vmatprep.mubr.f32.mxu0 0.0
    %345 = vmatmul.mubr.f32.gmra.mrb[0].mxu0 %v276
    %v346 = vpop.f32.mrb[0].mxu0
    %v347 = vadd.f32 0.0, %v346
    %v348 = vpop.f32.mrb[0].mxu0
    %349 = vdwg.mxu0
    %351 = vrot.lane.b32.xlu0 %v269, 96
    %v352 = vpop.permute.xlu0 %351
    %v353 = vsel %vm275, %v269, 0
    %v355 = vsel %vm275, %v352, 0
    %357 = vmatprep.subr.mxu0 0.0
    %358 = vmatpush1.xpose.msra.mxu0 %v355
    %359 = vmatprep.subr.mxu0 0.0
    %360 = vmatpush1.xpose.msra.mxu0 0.0
    %361 = vmatprep.subr.mxu0 0.0
    %362 = vmatpush1.xpose.msra.mxu0 0.0
    %363 = vmatprep.subr.mxu0 0.0
    %364 = vmatpush1.xpose.msra.mxu0 0.0
    %365 = vmatprep.subr.mxu0 0.0
    %366 = vmatpush1.xpose.msra.mxu0 0.0
    %367 = vmatprep.subr.mxu0 0.0
    %368 = vmatpush1.xpose.msra.mxu0 0.0
    %369 = vmatprep.subr.mxu0 0.0
    %370 = vmatpush1.xpose.msra.mxu0 0.0
    %371 = vmatprep.subr.mxu0 0.0
    %372 = vmatpush1.xpose.msra.mxu0 0.0
    %373 = vmatprep.subr.mxu0 0.0
    %374 = vmatpush1.xpose.msra.mxu0 0.0
    %375 = vmatprep.subr.mxu0 0.0
    %376 = vmatpush1.xpose.msra.mxu0 0.0
    %377 = vmatprep.subr.mxu0 0.0
    %378 = vmatpush1.xpose.msra.mxu0 0.0
    %379 = vmatprep.subr.mxu0 0.0
    %380 = vmatpush1.xpose.msra.mxu0 0.0
    %381 = vmatprep.subr.mxu0 0.0
    %382 = vmatpush1.xpose.msra.mxu0 0.0
    %383 = vmatprep.subr.mxu0 0.0
    %384 = vmatpush1.xpose.msra.mxu0 0.0
    %385 = vmatprep.subr.mxu0 0.0
    %386 = vmatpush1.xpose.msra.mxu0 0.0
    %387 = vmatprep.subr.mxu0 0.0
    %388 = vmatpush1.xpose.msra.mxu0 0.0
    %389 = vmatprep.subr.mxu0 0.0
    %390 = vmatpush1.xpose.msra.mxu0 0.0
    %391 = vmatprep.subr.mxu0 0.0
    %392 = vmatpush1.xpose.msra.mxu0 0.0
    %393 = vmatprep.subr.mxu0 0.0
    %394 = vmatpush1.xpose.msra.mxu0 0.0
    %395 = vmatprep.subr.mxu0 0.0
    %396 = vmatpush1.xpose.msra.mxu0 0.0
    %397 = vmatprep.subr.mxu0 0.0
    %398 = vmatpush1.xpose.msra.mxu0 0.0
    %399 = vmatprep.subr.mxu0 0.0
    %400 = vmatpush1.xpose.msra.mxu0 0.0
    %401 = vmatprep.subr.mxu0 0.0
    %402 = vmatpush1.xpose.msra.mxu0 0.0
    %403 = vmatprep.subr.mxu0 0.0
    %404 = vmatpush1.xpose.msra.mxu0 0.0
    %405 = vmatprep.subr.mxu0 0.0
    %406 = vmatpush1.xpose.msra.mxu0 0.0
    %407 = vmatprep.subr.mxu0 0.0
    %408 = vmatpush1.xpose.msra.mxu0 0.0
    %409 = vmatprep.subr.mxu0 0.0
    %410 = vmatpush1.xpose.msra.mxu0 0.0
    %411 = vmatprep.subr.mxu0 0.0
    %412 = vmatpush1.xpose.msra.mxu0 0.0
    %413 = vmatprep.subr.mxu0 0.0
    %414 = vmatpush1.xpose.msra.mxu0 0.0
    %415 = vmatprep.subr.mxu0 0.0
    %416 = vmatpush1.xpose.msra.mxu0 0.0
    %417 = vmatprep.subr.mxu0 0.0
    %418 = vmatpush1.xpose.msra.mxu0 0.0
    %419 = vmatprep.subr.mxu0 0.0
    %420 = vmatpush1.xpose.msra.mxu0 0.0
    %421 = vmatprep.mubr.f32.mxu0 0.0
    %422 = vmatmul.mubr.f32.gmra.mrb[0].mxu0 %v353
    %v423 = vpop.f32.mrb[0].mxu0
    %v424 = vadd.f32 0.0, %v423
    %v425 = vpop.f32.mrb[0].mxu0
    %426 = vdwg.mxu0
    %v427 = vmul.f32 %v347, 0.35355338
    %v428 = vmul.f32 %v424, 0.35355338
    %v429 = vlaneseq
    %v430 = vshrl.u32 %v429, 7
    %v431 = vsub.s32 0, %v430
    %v432 = vrot.slane %v178, %v431
    %v433 = vlaneseq
    %v434 = vshrl.u32 %v433, 7
    %v435 = vsub.s32 0, %v434
    %v436 = vrot.slane %v185, %v435
    %v439 = vadd.f32 %v427, %v432
    %v440 = vadd.f32 %v428, %v436
    %v441 = vsel %vm275, %v439, -inf
    %442 = vmax.xlane.f32.xlu0 %v441
    %v443 = vpop.xlane.xlu0 %442
    %v444 = vsel %vm275, %v440, -inf
    %445 = vmax.xlane.f32.xlu0 %v444
    %v446 = vpop.xlane.xlu0 %445
    %v447 = vsub.f32 %v439, %v443
    %v448 = vsub.f32 %v440, %v446
    %v449 = vmul.f32 %v447, 1.442695
    %v450 = vpow.pop %v449
    %v451 = vmul.f32 %v448, 1.442695
    %v452 = vpow.pop %v451
    %v453 = vsel %vm275, %v450, 0.0
    %454 = vadd.xlane.f32.xlu0 %v453
    %v455 = vpop.xlane.xlu0 %454
    %v456 = vsel %vm275, %v452, 0.0
    %457 = vadd.xlane.f32.xlu0 %v456
    %v458 = vpop.xlane.xlu0 %457
    %v459 = vrcp.pop %v455
    %v460 = vmul.f32 %v450, %v459
    %v461 = vrcp.pop %v458
    %v462 = vmul.f32 %v452, %v461
    %463 = vrot.lane.b32.xlu0 %v264, 64
    %v464 = vpop.permute.xlu0 %463
    %v467 = vsel %vm275, %v460, 0
    %469 = vmatprep.subr.mxu0 0.0
    %470 = vmatpush1.msra.mxu0 %v464
    %471 = vmatprep.subr.mxu0 0.0
    %472 = vmatpush1.msra.mxu0 0.0
    %473 = vmatprep.subr.mxu0 0.0
    %474 = vmatpush1.msra.mxu0 0.0
    %475 = vmatprep.subr.mxu0 0.0
    %476 = vmatpush1.msra.mxu0 0.0
    %477 = vmatprep.subr.mxu0 0.0
    %478 = vmatpush1.msra.mxu0 0.0
    %479 = vmatprep.subr.mxu0 0.0
    %480 = vmatpush1.msra.mxu0 0.0
    %481 = vmatprep.subr.mxu0 0.0
    %482 = vmatpush1.msra.mxu0 0.0
    %483 = vmatprep.subr.mxu0 0.0
    %484 = vmatpush1.msra.mxu0 0.0
    %485 = vmatprep.subr.mxu0 0.0
    %486 = vmatpush1.msra.mxu0 0.0
    %487 = vmatprep.subr.mxu0 0.0
    %488 = vmatpush1.msra.mxu0 0.0
    %489 = vmatprep.subr.mxu0 0.0
    %490 = vmatpush1.msra.mxu0 0.0
    %491 = vmatprep.subr.mxu0 0.0
    %492 = vmatpush1.msra.mxu0 0.0
    %493 = vmatprep.subr.mxu0 0.0
    %494 = vmatpush1.msra.mxu0 0.0
    %495 = vmatprep.subr.mxu0 0.0
    %496 = vmatpush1.msra.mxu0 0.0
    %497 = vmatprep.subr.mxu0 0.0
    %498 = vmatpush1.msra.mxu0 0.0
    %499 = vmatprep.subr.mxu0 0.0
    %500 = vmatpush1.msra.mxu0 0.0
    %501 = vmatprep.subr.mxu0 0.0
    %502 = vmatpush1.msra.mxu0 0.0
    %503 = vmatprep.subr.mxu0 0.0
    %504 = vmatpush1.msra.mxu0 0.0
    %505 = vmatprep.subr.mxu0 0.0
    %506 = vmatpush1.msra.mxu0 0.0
    %507 = vmatprep.subr.mxu0 0.0
    %508 = vmatpush1.msra.mxu0 0.0
    %509 = vmatprep.subr.mxu0 0.0
    %510 = vmatpush1.msra.mxu0 0.0
    %511 = vmatprep.subr.mxu0 0.0
    %512 = vmatpush1.msra.mxu0 0.0
    %513 = vmatprep.subr.mxu0 0.0
    %514 = vmatpush1.msra.mxu0 0.0
    %515 = vmatprep.subr.mxu0 0.0
    %516 = vmatpush1.msra.mxu0 0.0
    %517 = vmatprep.subr.mxu0 0.0
    %518 = vmatpush1.msra.mxu0 0.0
    %519 = vmatprep.subr.mxu0 0.0
    %520 = vmatpush1.msra.mxu0 0.0
    %521 = vmatprep.subr.mxu0 0.0
    %522 = vmatpush1.msra.mxu0 0.0
    %523 = vmatprep.subr.mxu0 0.0
    %524 = vmatpush1.msra.mxu0 0.0
    %525 = vmatprep.subr.mxu0 0.0
    %526 = vmatpush1.msra.mxu0 0.0
    %527 = vmatprep.subr.mxu0 0.0
    %528 = vmatpush1.msra.mxu0 0.0
    %529 = vmatprep.subr.mxu0 0.0
    %530 = vmatpush1.msra.mxu0 0.0
    %531 = vmatprep.subr.mxu0 0.0
    %532 = vmatpush1.msra.mxu0 0.0
    %533 = vmatprep.mubr.f32.mxu0 0.0
    %534 = vmatmul.mubr.f32.gmra.mrb[0].mxu0 %v467
    %v535 = vpop.f32.mrb[0].mxu0
    %v536 = vadd.f32 0.0, %v535
    %v537 = vpop.f32.mrb[0].mxu0
    %538 = vdwg.mxu0
    %539 = vrot.lane.b32.xlu0 %v269, 64
    %v540 = vpop.permute.xlu0 %539
    %v543 = vsel %vm275, %v462, 0
    %545 = vmatprep.subr.mxu0 0.0
    %546 = vmatpush1.msra.mxu0 %v540
    %547 = vmatprep.subr.mxu0 0.0
    %548 = vmatpush1.msra.mxu0 0.0
    %549 = vmatprep.subr.mxu0 0.0
    %550 = vmatpush1.msra.mxu0 0.0
    %551 = vmatprep.subr.mxu0 0.0
    %552 = vmatpush1.msra.mxu0 0.0
    %553 = vmatprep.subr.mxu0 0.0
    %554 = vmatpush1.msra.mxu0 0.0
    %555 = vmatprep.subr.mxu0 0.0
    %556 = vmatpush1.msra.mxu0 0.0
    %557 = vmatprep.subr.mxu0 0.0
    %558 = vmatpush1.msra.mxu0 0.0
    %559 = vmatprep.subr.mxu0 0.0
    %560 = vmatpush1.msra.mxu0 0.0
    %561 = vmatprep.subr.mxu0 0.0
    %562 = vmatpush1.msra.mxu0 0.0
    %563 = vmatprep.subr.mxu0 0.0
    %564 = vmatpush1.msra.mxu0 0.0
    %565 = vmatprep.subr.mxu0 0.0
    %566 = vmatpush1.msra.mxu0 0.0
    %567 = vmatprep.subr.mxu0 0.0
    %568 = vmatpush1.msra.mxu0 0.0
    %569 = vmatprep.subr.mxu0 0.0
    %570 = vmatpush1.msra.mxu0 0.0
    %571 = vmatprep.subr.mxu0 0.0
    %572 = vmatpush1.msra.mxu0 0.0
    %573 = vmatprep.subr.mxu0 0.0
    %574 = vmatpush1.msra.mxu0 0.0
    %575 = vmatprep.subr.mxu0 0.0
    %576 = vmatpush1.msra.mxu0 0.0
    %577 = vmatprep.subr.mxu0 0.0
    %578 = vmatpush1.msra.mxu0 0.0
    %579 = vmatprep.subr.mxu0 0.0
    %580 = vmatpush1.msra.mxu0 0.0
    %581 = vmatprep.subr.mxu0 0.0
    %582 = vmatpush1.msra.mxu0 0.0
    %583 = vmatprep.subr.mxu0 0.0
    %584 = vmatpush1.msra.mxu0 0.0
    %585 = vmatprep.subr.mxu0 0.0
    %586 = vmatpush1.msra.mxu0 0.0
    %587 = vmatprep.subr.mxu0 0.0
    %588 = vmatpush1.msra.mxu0 0.0
    %589 = vmatprep.subr.mxu0 0.0
    %590 = vmatpush1.msra.mxu0 0.0
    %591 = vmatprep.subr.mxu0 0.0
    %592 = vmatpush1.msra.mxu0 0.0
    %593 = vmatprep.subr.mxu0 0.0
    %594 = vmatpush1.msra.mxu0 0.0
    %595 = vmatprep.subr.mxu0 0.0
    %596 = vmatpush1.msra.mxu0 0.0
    %597 = vmatprep.subr.mxu0 0.0
    %598 = vmatpush1.msra.mxu0 0.0
    %599 = vmatprep.subr.mxu0 0.0
    %600 = vmatpush1.msra.mxu0 0.0
    %601 = vmatprep.subr.mxu0 0.0
    %602 = vmatpush1.msra.mxu0 0.0
    %603 = vmatprep.subr.mxu0 0.0
    %604 = vmatpush1.msra.mxu0 0.0
    %605 = vmatprep.subr.mxu0 0.0
    %606 = vmatpush1.msra.mxu0 0.0
    %607 = vmatprep.subr.mxu0 0.0
    %608 = vmatpush1.msra.mxu0 0.0
    %609 = vmatprep.mubr.f32.mxu0 0.0
    %610 = vmatmul.mubr.f32.gmra.mrb[0].mxu0 %v543
    %v611 = vpop.f32.mrb[0].mxu0
    %v612 = vadd.f32 0.0, %v611
    %v613 = vpop.f32.mrb[0].mxu0
    %614 = vdwg.mxu0
    %615 = vrot.lane.b32.xlu0 %v264, 120
    %v616 = vpop.permute.xlu0 %615
    %617 = vrot.lane.b32.xlu0 %v264, 88
    %v618 = vpop.permute.xlu0 %617
    %v619 = vsel %vm275, %v616, 0
    %v621 = vsel %vm275, %v618, 0
    %623 = vmatprep.subr.mxu0 0.0
    %624 = vmatpush1.xpose.msra.mxu0 %v621
    %625 = vmatprep.subr.mxu0 0.0
    %626 = vmatpush1.xpose.msra.mxu0 0.0
    %627 = vmatprep.subr.mxu0 0.0
    %628 = vmatpush1.xpose.msra.mxu0 0.0
    %629 = vmatprep.subr.mxu0 0.0
    %630 = vmatpush1.xpose.msra.mxu0 0.0
    %631 = vmatprep.subr.mxu0 0.0
    %632 = vmatpush1.xpose.msra.mxu0 0.0
    %633 = vmatprep.subr.mxu0 0.0
    %634 = vmatpush1.xpose.msra.mxu0 0.0
    %635 = vmatprep.subr.mxu0 0.0
    %636 = vmatpush1.xpose.msra.mxu0 0.0
    %637 = vmatprep.subr.mxu0 0.0
    %638 = vmatpush1.xpose.msra.mxu0 0.0
    %639 = vmatprep.subr.mxu0 0.0
    %640 = vmatpush1.xpose.msra.mxu0 0.0
    %641 = vmatprep.subr.mxu0 0.0
    %642 = vmatpush1.xpose.msra.mxu0 0.0
    %643 = vmatprep.subr.mxu0 0.0
    %644 = vmatpush1.xpose.msra.mxu0 0.0
    %645 = vmatprep.subr.mxu0 0.0
    %646 = vmatpush1.xpose.msra.mxu0 0.0
    %647 = vmatprep.subr.mxu0 0.0
    %648 = vmatpush1.xpose.msra.mxu0 0.0
    %649 = vmatprep.subr.mxu0 0.0
    %650 = vmatpush1.xpose.msra.mxu0 0.0
    %651 = vmatprep.subr.mxu0 0.0
    %652 = vmatpush1.xpose.msra.mxu0 0.0
    %653 = vmatprep.subr.mxu0 0.0
    %654 = vmatpush1.xpose.msra.mxu0 0.0
    %655 = vmatprep.subr.mxu0 0.0
    %656 = vmatpush1.xpose.msra.mxu0 0.0
    %657 = vmatprep.subr.mxu0 0.0
    %658 = vmatpush1.xpose.msra.mxu0 0.0
    %659 = vmatprep.subr.mxu0 0.0
    %660 = vmatpush1.xpose.msra.mxu0 0.0
    %661 = vmatprep.subr.mxu0 0.0
    %662 = vmatpush1.xpose.msra.mxu0 0.0
    %663 = vmatprep.subr.mxu0 0.0
    %664 = vmatpush1.xpose.msra.mxu0 0.0
    %665 = vmatprep.subr.mxu0 0.0
    %666 = vmatpush1.xpose.msra.mxu0 0.0
    %667 = vmatprep.subr.mxu0 0.0
    %668 = vmatpush1.xpose.msra.mxu0 0.0
    %669 = vmatprep.subr.mxu0 0.0
    %670 = vmatpush1.xpose.msra.mxu0 0.0
    %671 = vmatprep.subr.mxu0 0.0
    %672 = vmatpush1.xpose.msra.mxu0 0.0
    %673 = vmatprep.subr.mxu0 0.0
    %674 = vmatpush1.xpose.msra.mxu0 0.0
    %675 = vmatprep.subr.mxu0 0.0
    %676 = vmatpush1.xpose.msra.mxu0 0.0
    %677 = vmatprep.subr.mxu0 0.0
    %678 = vmatpush1.xpose.msra.mxu0 0.0
    %679 = vmatprep.subr.mxu0 0.0
    %680 = vmatpush1.xpose.msra.mxu0 0.0
    %681 = vmatprep.subr.mxu0 0.0
    %682 = vmatpush1.xpose.msra.mxu0 0.0
    %683 = vmatprep.subr.mxu0 0.0
    %684 = vmatpush1.xpose.msra.mxu0 0.0
    %685 = vmatprep.subr.mxu0 0.0
    %686 = vmatpush1.xpose.msra.mxu0 0.0
    %687 = vmatprep.mubr.f32.mxu0 0.0
    %688 = vmatmul.mubr.f32.gmra.mrb[0].mxu0 %v619
    %v689 = vpop.f32.mrb[0].mxu0
    %v690 = vadd.f32 0.0, %v689
    %v691 = vpop.f32.mrb[0].mxu0
    %692 = vdwg.mxu0
    %693 = vrot.lane.b32.xlu0 %v269, 120
    %v694 = vpop.permute.xlu0 %693
    %695 = vrot.lane.b32.xlu0 %v269, 88
    %v696 = vpop.permute.xlu0 %695
    %v697 = vsel %vm275, %v694, 0
    %v699 = vsel %vm275, %v696, 0
    %701 = vmatprep.subr.mxu0 0.0
    %702 = vmatpush1.xpose.msra.mxu0 %v699
    %703 = vmatprep.subr.mxu0 0.0
    %704 = vmatpush1.xpose.msra.mxu0 0.0
    %705 = vmatprep.subr.mxu0 0.0
    %706 = vmatpush1.xpose.msra.mxu0 0.0
    %707 = vmatprep.subr.mxu0 0.0
    %708 = vmatpush1.xpose.msra.mxu0 0.0
    %709 = vmatprep.subr.mxu0 0.0
    %710 = vmatpush1.xpose.msra.mxu0 0.0
    %711 = vmatprep.subr.mxu0 0.0
    %712 = vmatpush1.xpose.msra.mxu0 0.0
    %713 = vmatprep.subr.mxu0 0.0
    %714 = vmatpush1.xpose.msra.mxu0 0.0
    %715 = vmatprep.subr.mxu0 0.0
    %716 = vmatpush1.xpose.msra.mxu0 0.0
    %717 = vmatprep.subr.mxu0 0.0
    %718 = vmatpush1.xpose.msra.mxu0 0.0
    %719 = vmatprep.subr.mxu0 0.0
    %720 = vmatpush1.xpose.msra.mxu0 0.0
    %721 = vmatprep.subr.mxu0 0.0
    %722 = vmatpush1.xpose.msra.mxu0 0.0
    %723 = vmatprep.subr.mxu0 0.0
    %724 = vmatpush1.xpose.msra.mxu0 0.0
    %725 = vmatprep.subr.mxu0 0.0
    %726 = vmatpush1.xpose.msra.mxu0 0.0
    %727 = vmatprep.subr.mxu0 0.0
    %728 = vmatpush1.xpose.msra.mxu0 0.0
    %729 = vmatprep.subr.mxu0 0.0
    %730 = vmatpush1.xpose.msra.mxu0 0.0
    %731 = vmatprep.subr.mxu0 0.0
    %732 = vmatpush1.xpose.msra.mxu0 0.0
    %733 = vmatprep.subr.mxu0 0.0
    %734 = vmatpush1.xpose.msra.mxu0 0.0
    %735 = vmatprep.subr.mxu0 0.0
    %736 = vmatpush1.xpose.msra.mxu0 0.0
    %737 = vmatprep.subr.mxu0 0.0
    %738 = vmatpush1.xpose.msra.mxu0 0.0
    %739 = vmatprep.subr.mxu0 0.0
    %740 = vmatpush1.xpose.msra.mxu0 0.0
    %741 = vmatprep.subr.mxu0 0.0
    %742 = vmatpush1.xpose.msra.mxu0 0.0
    %743 = vmatprep.subr.mxu0 0.0
    %744 = vmatpush1.xpose.msra.mxu0 0.0
    %745 = vmatprep.subr.mxu0 0.0
    %746 = vmatpush1.xpose.msra.mxu0 0.0
    %747 = vmatprep.subr.mxu0 0.0
    %748 = vmatpush1.xpose.msra.mxu0 0.0
    %749 = vmatprep.subr.mxu0 0.0
    %750 = vmatpush1.xpose.msra.mxu0 0.0
    %751 = vmatprep.subr.mxu0 0.0
    %752 = vmatpush1.xpose.msra.mxu0 0.0
    %753 = vmatprep.subr.mxu0 0.0
    %754 = vmatpush1.xpose.msra.mxu0 0.0
    %755 = vmatprep.subr.mxu0 0.0
    %756 = vmatpush1.xpose.msra.mxu0 0.0
    %757 = vmatprep.subr.mxu0 0.0
    %758 = vmatpush1.xpose.msra.mxu0 0.0
    %759 = vmatprep.subr.mxu0 0.0
    %760 = vmatpush1.xpose.msra.mxu0 0.0
    %761 = vmatprep.subr.mxu0 0.0
    %762 = vmatpush1.xpose.msra.mxu0 0.0
    %763 = vmatprep.subr.mxu0 0.0
    %764 = vmatpush1.xpose.msra.mxu0 0.0
    %765 = vmatprep.mubr.f32.mxu0 0.0
    %766 = vmatmul.mubr.f32.gmra.mrb[0].mxu0 %v697
    %v767 = vpop.f32.mrb[0].mxu0
    %v768 = vadd.f32 0.0, %v767
    %v769 = vpop.f32.mrb[0].mxu0
    %770 = vdwg.mxu0
    %v771 = vmul.f32 %v690, 0.35355338
    %v772 = vmul.f32 %v768, 0.35355338
    %v773 = vadd.f32 %v771, %v432
    %v774 = vadd.f32 %v772, %v436
    %v775 = vsel %vm275, %v773, -inf
    %776 = vmax.xlane.f32.xlu0 %v775
    %v777 = vpop.xlane.xlu0 %776
    %v778 = vsel %vm275, %v774, -inf
    %779 = vmax.xlane.f32.xlu0 %v778
    %v780 = vpop.xlane.xlu0 %779
    %v781 = vsub.f32 %v773, %v777
    %v782 = vsub.f32 %v774, %v780
    %v783 = vmul.f32 %v781, 1.442695
    %v784 = vpow.pop %v783
    %v785 = vmul.f32 %v782, 1.442695
    %v786 = vpow.pop %v785
    %v787 = vsel %vm275, %v784, 0.0
    %788 = vadd.xlane.f32.xlu0 %v787
    %v789 = vpop.xlane.xlu0 %788
    %v790 = vsel %vm275, %v786, 0.0
    %791 = vadd.xlane.f32.xlu0 %v790
    %v792 = vpop.xlane.xlu0 %791
    %v793 = vrcp.pop %v789
    %v794 = vmul.f32 %v784, %v793
    %v795 = vrcp.pop %v792
    %v796 = vmul.f32 %v786, %v795
    %797 = vrot.lane.b32.xlu0 %v264, 56
    %v798 = vpop.permute.xlu0 %797
    %v801 = vsel %vm275, %v794, 0
    %803 = vmatprep.subr.mxu0 0.0
    %804 = vmatpush1.msra.mxu0 %v798
    %805 = vmatprep.subr.mxu0 0.0
    %806 = vmatpush1.msra.mxu0 0.0
    %807 = vmatprep.subr.mxu0 0.0
    %808 = vmatpush1.msra.mxu0 0.0
    %809 = vmatprep.subr.mxu0 0.0
    %810 = vmatpush1.msra.mxu0 0.0
    %811 = vmatprep.subr.mxu0 0.0
    %812 = vmatpush1.msra.mxu0 0.0
    %813 = vmatprep.subr.mxu0 0.0
    %814 = vmatpush1.msra.mxu0 0.0
    %815 = vmatprep.subr.mxu0 0.0
    %816 = vmatpush1.msra.mxu0 0.0
    %817 = vmatprep.subr.mxu0 0.0
    %818 = vmatpush1.msra.mxu0 0.0
    %819 = vmatprep.subr.mxu0 0.0
    %820 = vmatpush1.msra.mxu0 0.0
    %821 = vmatprep.subr.mxu0 0.0
    %822 = vmatpush1.msra.mxu0 0.0
    %823 = vmatprep.subr.mxu0 0.0
    %824 = vmatpush1.msra.mxu0 0.0
    %825 = vmatprep.subr.mxu0 0.0
    %826 = vmatpush1.msra.mxu0 0.0
    %827 = vmatprep.subr.mxu0 0.0
    %828 = vmatpush1.msra.mxu0 0.0
    %829 = vmatprep.subr.mxu0 0.0
    %830 = vmatpush1.msra.mxu0 0.0
    %831 = vmatprep.subr.mxu0 0.0
    %832 = vmatpush1.msra.mxu0 0.0
    %833 = vmatprep.subr.mxu0 0.0
    %834 = vmatpush1.msra.mxu0 0.0
    %835 = vmatprep.subr.mxu0 0.0
    %836 = vmatpush1.msra.mxu0 0.0
    %837 = vmatprep.subr.mxu0 0.0
    %838 = vmatpush1.msra.mxu0 0.0
    %839 = vmatprep.subr.mxu0 0.0
    %840 = vmatpush1.msra.mxu0 0.0
    %841 = vmatprep.subr.mxu0 0.0
    %842 = vmatpush1.msra.mxu0 0.0
    %843 = vmatprep.subr.mxu0 0.0
    %844 = vmatpush1.msra.mxu0 0.0
    %845 = vmatprep.subr.mxu0 0.0
    %846 = vmatpush1.msra.mxu0 0.0
    %847 = vmatprep.subr.mxu0 0.0
    %848 = vmatpush1.msra.mxu0 0.0
    %849 = vmatprep.subr.mxu0 0.0
    %850 = vmatpush1.msra.mxu0 0.0
    %851 = vmatprep.subr.mxu0 0.0
    %852 = vmatpush1.msra.mxu0 0.0
    %853 = vmatprep.subr.mxu0 0.0
    %854 = vmatpush1.msra.mxu0 0.0
    %855 = vmatprep.subr.mxu0 0.0
    %856 = vmatpush1.msra.mxu0 0.0
    %857 = vmatprep.subr.mxu0 0.0
    %858 = vmatpush1.msra.mxu0 0.0
    %859 = vmatprep.subr.mxu0 0.0
    %860 = vmatpush1.msra.mxu0 0.0
    %861 = vmatprep.subr.mxu0 0.0
    %862 = vmatpush1.msra.mxu0 0.0
    %863 = vmatprep.subr.mxu0 0.0
    %864 = vmatpush1.msra.mxu0 0.0
    %865 = vmatprep.subr.mxu0 0.0
    %866 = vmatpush1.msra.mxu0 0.0
    %867 = vmatprep.mubr.f32.mxu0 0.0
    %868 = vmatmul.mubr.f32.gmra.mrb[0].mxu0 %v801
    %v869 = vpop.f32.mrb[0].mxu0
    %v870 = vadd.f32 0.0, %v869
    %v871 = vpop.f32.mrb[0].mxu0
    %872 = vdwg.mxu0
    %873 = vrot.lane.b32.xlu0 %v269, 56
    %v874 = vpop.permute.xlu0 %873
    %v877 = vsel %vm275, %v796, 0
    %879 = vmatprep.subr.mxu0 0.0
    %880 = vmatpush1.msra.mxu0 %v874
    %881 = vmatprep.subr.mxu0 0.0
    %882 = vmatpush1.msra.mxu0 0.0
    %883 = vmatprep.subr.mxu0 0.0
    %884 = vmatpush1.msra.mxu0 0.0
    %885 = vmatprep.subr.mxu0 0.0
    %886 = vmatpush1.msra.mxu0 0.0
    %887 = vmatprep.subr.mxu0 0.0
    %888 = vmatpush1.msra.mxu0 0.0
    %889 = vmatprep.subr.mxu0 0.0
    %890 = vmatpush1.msra.mxu0 0.0
    %891 = vmatprep.subr.mxu0 0.0
    %892 = vmatpush1.msra.mxu0 0.0
    %893 = vmatprep.subr.mxu0 0.0
    %894 = vmatpush1.msra.mxu0 0.0
    %895 = vmatprep.subr.mxu0 0.0
    %896 = vmatpush1.msra.mxu0 0.0
    %897 = vmatprep.subr.mxu0 0.0
    %898 = vmatpush1.msra.mxu0 0.0
    %899 = vmatprep.subr.mxu0 0.0
    %900 = vmatpush1.msra.mxu0 0.0
    %901 = vmatprep.subr.mxu0 0.0
    %902 = vmatpush1.msra.mxu0 0.0
    %903 = vmatprep.subr.mxu0 0.0
    %904 = vmatpush1.msra.mxu0 0.0
    %905 = vmatprep.subr.mxu0 0.0
    %906 = vmatpush1.msra.mxu0 0.0
    %907 = vmatprep.subr.mxu0 0.0
    %908 = vmatpush1.msra.mxu0 0.0
    %909 = vmatprep.subr.mxu0 0.0
    %910 = vmatpush1.msra.mxu0 0.0
    %911 = vmatprep.subr.mxu0 0.0
    %912 = vmatpush1.msra.mxu0 0.0
    %913 = vmatprep.subr.mxu0 0.0
    %914 = vmatpush1.msra.mxu0 0.0
    %915 = vmatprep.subr.mxu0 0.0
    %916 = vmatpush1.msra.mxu0 0.0
    %917 = vmatprep.subr.mxu0 0.0
    %918 = vmatpush1.msra.mxu0 0.0
    %919 = vmatprep.subr.mxu0 0.0
    %920 = vmatpush1.msra.mxu0 0.0
    %921 = vmatprep.subr.mxu0 0.0
    %922 = vmatpush1.msra.mxu0 0.0
    %923 = vmatprep.subr.mxu0 0.0
    %924 = vmatpush1.msra.mxu0 0.0
    %925 = vmatprep.subr.mxu0 0.0
    %926 = vmatpush1.msra.mxu0 0.0
    %927 = vmatprep.subr.mxu0 0.0
    %928 = vmatpush1.msra.mxu0 0.0
    %929 = vmatprep.subr.mxu0 0.0
    %930 = vmatpush1.msra.mxu0 0.0
    %931 = vmatprep.subr.mxu0 0.0
    %932 = vmatpush1.msra.mxu0 0.0
    %933 = vmatprep.subr.mxu0 0.0
    %934 = vmatpush1.msra.mxu0 0.0
    %935 = vmatprep.subr.mxu0 0.0
    %936 = vmatpush1.msra.mxu0 0.0
    %937 = vmatprep.subr.mxu0 0.0
    %938 = vmatpush1.msra.mxu0 0.0
    %939 = vmatprep.subr.mxu0 0.0
    %940 = vmatpush1.msra.mxu0 0.0
    %941 = vmatprep.subr.mxu0 0.0
    %942 = vmatpush1.msra.mxu0 0.0
    %943 = vmatprep.mubr.f32.mxu0 0.0
    %944 = vmatmul.mubr.f32.gmra.mrb[0].mxu0 %v877
    %v945 = vpop.f32.mrb[0].mxu0
    %v946 = vadd.f32 0.0, %v945
    %v947 = vpop.f32.mrb[0].mxu0
    %948 = vdwg.mxu0
    %949 = vrot.lane.b32.xlu0 %v264, 112
    %v950 = vpop.permute.xlu0 %949
    %951 = vrot.lane.b32.xlu0 %v264, 80
    %v952 = vpop.permute.xlu0 %951
    %v953 = vsel %vm275, %v950, 0
    %v955 = vsel %vm275, %v952, 0
    %957 = vmatprep.subr.mxu0 0.0
    %958 = vmatpush1.xpose.msra.mxu0 %v955
    %959 = vmatprep.subr.mxu0 0.0
    %960 = vmatpush1.xpose.msra.mxu0 0.0
    %961 = vmatprep.subr.mxu0 0.0
    %962 = vmatpush1.xpose.msra.mxu0 0.0
    %963 = vmatprep.subr.mxu0 0.0
    %964 = vmatpush1.xpose.msra.mxu0 0.0
    %965 = vmatprep.subr.mxu0 0.0
    %966 = vmatpush1.xpose.msra.mxu0 0.0
    %967 = vmatprep.subr.mxu0 0.0
    %968 = vmatpush1.xpose.msra.mxu0 0.0
    %969 = vmatprep.subr.mxu0 0.0
    %970 = vmatpush1.xpose.msra.mxu0 0.0
    %971 = vmatprep.subr.mxu0 0.0
    %972 = vmatpush1.xpose.msra.mxu0 0.0
    %973 = vmatprep.subr.mxu0 0.0
    %974 = vmatpush1.xpose.msra.mxu0 0.0
    %975 = vmatprep.subr.mxu0 0.0
    %976 = vmatpush1.xpose.msra.mxu0 0.0
    %977 = vmatprep.subr.mxu0 0.0
    %978 = vmatpush1.xpose.msra.mxu0 0.0
    %979 = vmatprep.subr.mxu0 0.0
    %980 = vmatpush1.xpose.msra.mxu0 0.0
    %981 = vmatprep.subr.mxu0 0.0
    %982 = vmatpush1.xpose.msra.mxu0 0.0
    %983 = vmatprep.subr.mxu0 0.0
    %984 = vmatpush1.xpose.msra.mxu0 0.0
    %985 = vmatprep.subr.mxu0 0.0
    %986 = vmatpush1.xpose.msra.mxu0 0.0
    %987 = vmatprep.subr.mxu0 0.0
    %988 = vmatpush1.xpose.msra.mxu0 0.0
    %989 = vmatprep.subr.mxu0 0.0
    %990 = vmatpush1.xpose.msra.mxu0 0.0
    %991 = vmatprep.subr.mxu0 0.0
    %992 = vmatpush1.xpose.msra.mxu0 0.0
    %993 = vmatprep.subr.mxu0 0.0
    %994 = vmatpush1.xpose.msra.mxu0 0.0
    %995 = vmatprep.subr.mxu0 0.0
    %996 = vmatpush1.xpose.msra.mxu0 0.0
    %997 = vmatprep.subr.mxu0 0.0
    %998 = vmatpush1.xpose.msra.mxu0 0.0
    %999 = vmatprep.subr.mxu0 0.0
    %1000 = vmatpush1.xpose.msra.mxu0 0.0
    %1001 = vmatprep.subr.mxu0 0.0
    %1002 = vmatpush1.xpose.msra.mxu0 0.0
    %1003 = vmatprep.subr.mxu0 0.0
    %1004 = vmatpush1.xpose.msra.mxu0 0.0
    %1005 = vmatprep.subr.mxu0 0.0
    %1006 = vmatpush1.xpose.msra.mxu0 0.0
    %1007 = vmatprep.subr.mxu0 0.0
    %1008 = vmatpush1.xpose.msra.mxu0 0.0
    %1009 = vmatprep.subr.mxu0 0.0
    %1010 = vmatpush1.xpose.msra.mxu0 0.0
    %1011 = vmatprep.subr.mxu0 0.0
    %1012 = vmatpush1.xpose.msra.mxu0 0.0
    %1013 = vmatprep.subr.mxu0 0.0
    %1014 = vmatpush1.xpose.msra.mxu0 0.0
    %1015 = vmatprep.subr.mxu0 0.0
    %1016 = vmatpush1.xpose.msra.mxu0 0.0
    %1017 = vmatprep.subr.mxu0 0.0
    %1018 = vmatpush1.xpose.msra.mxu0 0.0
    %1019 = vmatprep.subr.mxu0 0.0
    %1020 = vmatpush1.xpose.msra.mxu0 0.0
    %1021 = vmatprep.mubr.f32.mxu0 0.0
    %1022 = vmatmul.mubr.f32.gmra.mrb[0].mxu0 %v953
    %v1023 = vpop.f32.mrb[0].mxu0
    %v1024 = vadd.f32 0.0, %v1023
    %v1025 = vpop.f32.mrb[0].mxu0
    %1026 = vdwg.mxu0
    %1027 = vrot.lane.b32.xlu0 %v269, 112
    %v1028 = vpop.permute.xlu0 %1027
    %1029 = vrot.lane.b32.xlu0 %v269, 80
    %v1030 = vpop.permute.xlu0 %1029
    %v1031 = vsel %vm275, %v1028, 0
    %v1033 = vsel %vm275, %v1030, 0
    %1035 = vmatprep.subr.mxu0 0.0
    %1036 = vmatpush1.xpose.msra.mxu0 %v1033
    %1037 = vmatprep.subr.mxu0 0.0
    %1038 = vmatpush1.xpose.msra.mxu0 0.0
    %1039 = vmatprep.subr.mxu0 0.0
    %1040 = vmatpush1.xpose.msra.mxu0 0.0
    %1041 = vmatprep.subr.mxu0 0.0
    %1042 = vmatpush1.xpose.msra.mxu0 0.0
    %1043 = vmatprep.subr.mxu0 0.0
    %1044 = vmatpush1.xpose.msra.mxu0 0.0
    %1045 = vmatprep.subr.mxu0 0.0
    %1046 = vmatpush1.xpose.msra.mxu0 0.0
    %1047 = vmatprep.subr.mxu0 0.0
    %1048 = vmatpush1.xpose.msra.mxu0 0.0
    %1049 = vmatprep.subr.mxu0 0.0
    %1050 = vmatpush1.xpose.msra.mxu0 0.0
    %1051 = vmatprep.subr.mxu0 0.0
    %1052 = vmatpush1.xpose.msra.mxu0 0.0
    %1053 = vmatprep.subr.mxu0 0.0
    %1054 = vmatpush1.xpose.msra.mxu0 0.0
    %1055 = vmatprep.subr.mxu0 0.0
    %1056 = vmatpush1.xpose.msra.mxu0 0.0
    %1057 = vmatprep.subr.mxu0 0.0
    %1058 = vmatpush1.xpose.msra.mxu0 0.0
    %1059 = vmatprep.subr.mxu0 0.0
    %1060 = vmatpush1.xpose.msra.mxu0 0.0
    %1061 = vmatprep.subr.mxu0 0.0
    %1062 = vmatpush1.xpose.msra.mxu0 0.0
    %1063 = vmatprep.subr.mxu0 0.0
    %1064 = vmatpush1.xpose.msra.mxu0 0.0
    %1065 = vmatprep.subr.mxu0 0.0
    %1066 = vmatpush1.xpose.msra.mxu0 0.0
    %1067 = vmatprep.subr.mxu0 0.0
    %1068 = vmatpush1.xpose.msra.mxu0 0.0
    %1069 = vmatprep.subr.mxu0 0.0
    %1070 = vmatpush1.xpose.msra.mxu0 0.0
    %1071 = vmatprep.subr.mxu0 0.0
    %1072 = vmatpush1.xpose.msra.mxu0 0.0
    %1073 = vmatprep.subr.mxu0 0.0
    %1074 = vmatpush1.xpose.msra.mxu0 0.0
    %1075 = vmatprep.subr.mxu0 0.0
    %1076 = vmatpush1.xpose.msra.mxu0 0.0
    %1077 = vmatprep.subr.mxu0 0.0
    %1078 = vmatpush1.xpose.msra.mxu0 0.0
    %1079 = vmatprep.subr.mxu0 0.0
    %1080 = vmatpush1.xpose.msra.mxu0 0.0
    %1081 = vmatprep.subr.mxu0 0.0
    %1082 = vmatpush1.xpose.msra.mxu0 0.0
    %1083 = vmatprep.subr.mxu0 0.0
    %1084 = vmatpush1.xpose.msra.mxu0 0.0
    %1085 = vmatprep.subr.mxu0 0.0
    %1086 = vmatpush1.xpose.msra.mxu0 0.0
    %1087 = vmatprep.subr.mxu0 0.0
    %1088 = vmatpush1.xpose.msra.mxu0 0.0
    %1089 = vmatprep.subr.mxu0 0.0
    %1090 = vmatpush1.xpose.msra.mxu0 0.0
    %1091 = vmatprep.subr.mxu0 0.0
    %1092 = vmatpush1.xpose.msra.mxu0 0.0
    %1093 = vmatprep.subr.mxu0 0.0
    %1094 = vmatpush1.xpose.msra.mxu0 0.0
    %1095 = vmatprep.subr.mxu0 0.0
    %1096 = vmatpush1.xpose.msra.mxu0 0.0
    %1097 = vmatprep.subr.mxu0 0.0
    %1098 = vmatpush1.xpose.msra.mxu0 0.0
    %1099 = vmatprep.mubr.f32.mxu0 0.0
    %1100 = vmatmul.mubr.f32.gmra.mrb[0].mxu0 %v1031
    %v1101 = vpop.f32.mrb[0].mxu0
    %v1102 = vadd.f32 0.0, %v1101
    %v1103 = vpop.f32.mrb[0].mxu0
    %1104 = vdwg.mxu0
    %v1105 = vmul.f32 %v1024, 0.35355338
    %v1106 = vmul.f32 %v1102, 0.35355338
    %v1107 = vadd.f32 %v1105, %v432
    %v1108 = vadd.f32 %v1106, %v436
    %v1109 = vsel %vm275, %v1107, -inf
    %1110 = vmax.xlane.f32.xlu0 %v1109
    %v1111 = vpop.xlane.xlu0 %1110
    %v1112 = vsel %vm275, %v1108, -inf
    %1113 = vmax.xlane.f32.xlu0 %v1112
    %v1114 = vpop.xlane.xlu0 %1113
    %v1115 = vsub.f32 %v1107, %v1111
    %v1116 = vsub.f32 %v1108, %v1114
    %v1117 = vmul.f32 %v1115, 1.442695
    %v1118 = vpow.pop %v1117
    %v1119 = vmul.f32 %v1116, 1.442695
    %v1120 = vpow.pop %v1119
    %v1121 = vsel %vm275, %v1118, 0.0
    %1122 = vadd.xlane.f32.xlu0 %v1121
    %v1123 = vpop.xlane.xlu0 %1122
    %v1124 = vsel %vm275, %v1120, 0.0
    %1125 = vadd.xlane.f32.xlu0 %v1124
    %v1126 = vpop.xlane.xlu0 %1125
    %v1127 = vrcp.pop %v1123
    %v1128 = vmul.f32 %v1118, %v1127
    %v1129 = vrcp.pop %v1126
    %v1130 = vmul.f32 %v1120, %v1129
    %1131 = vrot.lane.b32.xlu0 %v264, 48
    %v1132 = vpop.permute.xlu0 %1131
    %v1135 = vsel %vm275, %v1128, 0
    %1137 = vmatprep.subr.mxu0 0.0
    %1138 = vmatpush1.msra.mxu0 %v1132
    %1139 = vmatprep.subr.mxu0 0.0
    %1140 = vmatpush1.msra.mxu0 0.0
    %1141 = vmatprep.subr.mxu0 0.0
    %1142 = vmatpush1.msra.mxu0 0.0
    %1143 = vmatprep.subr.mxu0 0.0
    %1144 = vmatpush1.msra.mxu0 0.0
    %1145 = vmatprep.subr.mxu0 0.0
    %1146 = vmatpush1.msra.mxu0 0.0
    %1147 = vmatprep.subr.mxu0 0.0
    %1148 = vmatpush1.msra.mxu0 0.0
    %1149 = vmatprep.subr.mxu0 0.0
    %1150 = vmatpush1.msra.mxu0 0.0
    %1151 = vmatprep.subr.mxu0 0.0
    %1152 = vmatpush1.msra.mxu0 0.0
    %1153 = vmatprep.subr.mxu0 0.0
    %1154 = vmatpush1.msra.mxu0 0.0
    %1155 = vmatprep.subr.mxu0 0.0
    %1156 = vmatpush1.msra.mxu0 0.0
    %1157 = vmatprep.subr.mxu0 0.0
    %1158 = vmatpush1.msra.mxu0 0.0
    %1159 = vmatprep.subr.mxu0 0.0
    %1160 = vmatpush1.msra.mxu0 0.0
    %1161 = vmatprep.subr.mxu0 0.0
    %1162 = vmatpush1.msra.mxu0 0.0
    %1163 = vmatprep.subr.mxu0 0.0
    %1164 = vmatpush1.msra.mxu0 0.0
    %1165 = vmatprep.subr.mxu0 0.0
    %1166 = vmatpush1.msra.mxu0 0.0
    %1167 = vmatprep.subr.mxu0 0.0
    %1168 = vmatpush1.msra.mxu0 0.0
    %1169 = vmatprep.subr.mxu0 0.0
    %1170 = vmatpush1.msra.mxu0 0.0
    %1171 = vmatprep.subr.mxu0 0.0
    %1172 = vmatpush1.msra.mxu0 0.0
    %1173 = vmatprep.subr.mxu0 0.0
    %1174 = vmatpush1.msra.mxu0 0.0
    %1175 = vmatprep.subr.mxu0 0.0
    %1176 = vmatpush1.msra.mxu0 0.0
    %1177 = vmatprep.subr.mxu0 0.0
    %1178 = vmatpush1.msra.mxu0 0.0
    %1179 = vmatprep.subr.mxu0 0.0
    %1180 = vmatpush1.msra.mxu0 0.0
    %1181 = vmatprep.subr.mxu0 0.0
    %1182 = vmatpush1.msra.mxu0 0.0
    %1183 = vmatprep.subr.mxu0 0.0
    %1184 = vmatpush1.msra.mxu0 0.0
    %1185 = vmatprep.subr.mxu0 0.0
    %1186 = vmatpush1.msra.mxu0 0.0
    %1187 = vmatprep.subr.mxu0 0.0
    %1188 = vmatpush1.msra.mxu0 0.0
    %1189 = vmatprep.subr.mxu0 0.0
    %1190 = vmatpush1.msra.mxu0 0.0
    %1191 = vmatprep.subr.mxu0 0.0
    %1192 = vmatpush1.msra.mxu0 0.0
    %1193 = vmatprep.subr.mxu0 0.0
    %1194 = vmatpush1.msra.mxu0 0.0
    %1195 = vmatprep.subr.mxu0 0.0
    %1196 = vmatpush1.msra.mxu0 0.0
    %1197 = vmatprep.subr.mxu0 0.0
    %1198 = vmatpush1.msra.mxu0 0.0
    %1199 = vmatprep.subr.mxu0 0.0
    %1200 = vmatpush1.msra.mxu0 0.0
    %1201 = vmatprep.mubr.f32.mxu0 0.0
    %1202 = vmatmul.mubr.f32.gmra.mrb[0].mxu0 %v1135
    %v1203 = vpop.f32.mrb[0].mxu0
    %v1204 = vadd.f32 0.0, %v1203
    %v1205 = vpop.f32.mrb[0].mxu0
    %1206 = vdwg.mxu0
    %1207 = vrot.lane.b32.xlu0 %v269, 48
    %v1208 = vpop.permute.xlu0 %1207
    %v1211 = vsel %vm275, %v1130, 0
    %1213 = vmatprep.subr.mxu0 0.0
    %1214 = vmatpush1.msra.mxu0 %v1208
    %1215 = vmatprep.subr.mxu0 0.0
    %1216 = vmatpush1.msra.mxu0 0.0
    %1217 = vmatprep.subr.mxu0 0.0
    %1218 = vmatpush1.msra.mxu0 0.0
    %1219 = vmatprep.subr.mxu0 0.0
    %1220 = vmatpush1.msra.mxu0 0.0
    %1221 = vmatprep.subr.mxu0 0.0
    %1222 = vmatpush1.msra.mxu0 0.0
    %1223 = vmatprep.subr.mxu0 0.0
    %1224 = vmatpush1.msra.mxu0 0.0
    %1225 = vmatprep.subr.mxu0 0.0
    %1226 = vmatpush1.msra.mxu0 0.0
    %1227 = vmatprep.subr.mxu0 0.0
    %1228 = vmatpush1.msra.mxu0 0.0
    %1229 = vmatprep.subr.mxu0 0.0
    %1230 = vmatpush1.msra.mxu0 0.0
    %1231 = vmatprep.subr.mxu0 0.0
    %1232 = vmatpush1.msra.mxu0 0.0
    %1233 = vmatprep.subr.mxu0 0.0
    %1234 = vmatpush1.msra.mxu0 0.0
    %1235 = vmatprep.subr.mxu0 0.0
    %1236 = vmatpush1.msra.mxu0 0.0
    %1237 = vmatprep.subr.mxu0 0.0
    %1238 = vmatpush1.msra.mxu0 0.0
    %1239 = vmatprep.subr.mxu0 0.0
    %1240 = vmatpush1.msra.mxu0 0.0
    %1241 = vmatprep.subr.mxu0 0.0
    %1242 = vmatpush1.msra.mxu0 0.0
    %1243 = vmatprep.subr.mxu0 0.0
    %1244 = vmatpush1.msra.mxu0 0.0
    %1245 = vmatprep.subr.mxu0 0.0
    %1246 = vmatpush1.msra.mxu0 0.0
    %1247 = vmatprep.subr.mxu0 0.0
    %1248 = vmatpush1.msra.mxu0 0.0
    %1249 = vmatprep.subr.mxu0 0.0
    %1250 = vmatpush1.msra.mxu0 0.0
    %1251 = vmatprep.subr.mxu0 0.0
    %1252 = vmatpush1.msra.mxu0 0.0
    %1253 = vmatprep.subr.mxu0 0.0
    %1254 = vmatpush1.msra.mxu0 0.0
    %1255 = vmatprep.subr.mxu0 0.0
    %1256 = vmatpush1.msra.mxu0 0.0
    %1257 = vmatprep.subr.mxu0 0.0
    %1258 = vmatpush1.msra.mxu0 0.0
    %1259 = vmatprep.subr.mxu0 0.0
    %1260 = vmatpush1.msra.mxu0 0.0
    %1261 = vmatprep.subr.mxu0 0.0
    %1262 = vmatpush1.msra.mxu0 0.0
    %1263 = vmatprep.subr.mxu0 0.0
    %1264 = vmatpush1.msra.mxu0 0.0
    %1265 = vmatprep.subr.mxu0 0.0
    %1266 = vmatpush1.msra.mxu0 0.0
    %1267 = vmatprep.subr.mxu0 0.0
    %1268 = vmatpush1.msra.mxu0 0.0
    %1269 = vmatprep.subr.mxu0 0.0
    %1270 = vmatpush1.msra.mxu0 0.0
    %1271 = vmatprep.subr.mxu0 0.0
    %1272 = vmatpush1.msra.mxu0 0.0
    %1273 = vmatprep.subr.mxu0 0.0
    %1274 = vmatpush1.msra.mxu0 0.0
    %1275 = vmatprep.subr.mxu0 0.0
    %1276 = vmatpush1.msra.mxu0 0.0
    %1277 = vmatprep.mubr.f32.mxu0 0.0
    %1278 = vmatmul.mubr.f32.gmra.mrb[0].mxu0 %v1211
    %v1279 = vpop.f32.mrb[0].mxu0
    %v1280 = vadd.f32 0.0, %v1279
    %v1281 = vpop.f32.mrb[0].mxu0
    %1282 = vdwg.mxu0
    %1283 = vrot.lane.b32.xlu0 %v264, 104
    %v1284 = vpop.permute.xlu0 %1283
    %1285 = vrot.lane.b32.xlu0 %v264, 72
    %v1286 = vpop.permute.xlu0 %1285
    %v1287 = vsel %vm275, %v1284, 0
    %v1289 = vsel %vm275, %v1286, 0
    %1291 = vmatprep.subr.mxu0 0.0
    %1292 = vmatpush1.xpose.msra.mxu0 %v1289
    %1293 = vmatprep.subr.mxu0 0.0
    %1294 = vmatpush1.xpose.msra.mxu0 0.0
    %1295 = vmatprep.subr.mxu0 0.0
    %1296 = vmatpush1.xpose.msra.mxu0 0.0
    %1297 = vmatprep.subr.mxu0 0.0
    %1298 = vmatpush1.xpose.msra.mxu0 0.0
    %1299 = vmatprep.subr.mxu0 0.0
    %1300 = vmatpush1.xpose.msra.mxu0 0.0
    %1301 = vmatprep.subr.mxu0 0.0
    %1302 = vmatpush1.xpose.msra.mxu0 0.0
    %1303 = vmatprep.subr.mxu0 0.0
    %1304 = vmatpush1.xpose.msra.mxu0 0.0
    %1305 = vmatprep.subr.mxu0 0.0
    %1306 = vmatpush1.xpose.msra.mxu0 0.0
    %1307 = vmatprep.subr.mxu0 0.0
    %1308 = vmatpush1.xpose.msra.mxu0 0.0
    %1309 = vmatprep.subr.mxu0 0.0
    %1310 = vmatpush1.xpose.msra.mxu0 0.0
    %1311 = vmatprep.subr.mxu0 0.0
    %1312 = vmatpush1.xpose.msra.mxu0 0.0
    %1313 = vmatprep.subr.mxu0 0.0
    %1314 = vmatpush1.xpose.msra.mxu0 0.0
    %1315 = vmatprep.subr.mxu0 0.0
    %1316 = vmatpush1.xpose.msra.mxu0 0.0
    %1317 = vmatprep.subr.mxu0 0.0
    %1318 = vmatpush1.xpose.msra.mxu0 0.0
    %1319 = vmatprep.subr.mxu0 0.0
    %1320 = vmatpush1.xpose.msra.mxu0 0.0
    %1321 = vmatprep.subr.mxu0 0.0
    %1322 = vmatpush1.xpose.msra.mxu0 0.0
    %1323 = vmatprep.subr.mxu0 0.0
    %1324 = vmatpush1.xpose.msra.mxu0 0.0
    %1325 = vmatprep.subr.mxu0 0.0
    %1326 = vmatpush1.xpose.msra.mxu0 0.0
    %1327 = vmatprep.subr.mxu0 0.0
    %1328 = vmatpush1.xpose.msra.mxu0 0.0
    %1329 = vmatprep.subr.mxu0 0.0
    %1330 = vmatpush1.xpose.msra.mxu0 0.0
    %1331 = vmatprep.subr.mxu0 0.0
    %1332 = vmatpush1.xpose.msra.mxu0 0.0
    %1333 = vmatprep.subr.mxu0 0.0
    %1334 = vmatpush1.xpose.msra.mxu0 0.0
    %1335 = vmatprep.subr.mxu0 0.0
    %1336 = vmatpush1.xpose.msra.mxu0 0.0
    %1337 = vmatprep.subr.mxu0 0.0
    %1338 = vmatpush1.xpose.msra.mxu0 0.0
    %1339 = vmatprep.subr.mxu0 0.0
    %1340 = vmatpush1.xpose.msra.mxu0 0.0
    %1341 = vmatprep.subr.mxu0 0.0
    %1342 = vmatpush1.xpose.msra.mxu0 0.0
    %1343 = vmatprep.subr.mxu0 0.0
    %1344 = vmatpush1.xpose.msra.mxu0 0.0
    %1345 = vmatprep.subr.mxu0 0.0
    %1346 = vmatpush1.xpose.msra.mxu0 0.0
    %1347 = vmatprep.subr.mxu0 0.0
    %1348 = vmatpush1.xpose.msra.mxu0 0.0
    %1349 = vmatprep.subr.mxu0 0.0
    %1350 = vmatpush1.xpose.msra.mxu0 0.0
    %1351 = vmatprep.subr.mxu0 0.0
    %1352 = vmatpush1.xpose.msra.mxu0 0.0
    %1353 = vmatprep.subr.mxu0 0.0
    %1354 = vmatpush1.xpose.msra.mxu0 0.0
    %1355 = vmatprep.mubr.f32.mxu0 0.0
    %1356 = vmatmul.mubr.f32.gmra.mrb[0].mxu0 %v1287
    %v1357 = vpop.f32.mrb[0].mxu0
    %v1358 = vadd.f32 0.0, %v1357
    %v1359 = vpop.f32.mrb[0].mxu0
    %1360 = vdwg.mxu0
    %1361 = vrot.lane.b32.xlu0 %v269, 104
    %v1362 = vpop.permute.xlu0 %1361
    %1363 = vrot.lane.b32.xlu0 %v269, 72
    %v1364 = vpop.permute.xlu0 %1363
    %v1365 = vsel %vm275, %v1362, 0
    %v1367 = vsel %vm275, %v1364, 0
    %1369 = vmatprep.subr.mxu0 0.0
    %1370 = vmatpush1.xpose.msra.mxu0 %v1367
    %1371 = vmatprep.subr.mxu0 0.0
    %1372 = vmatpush1.xpose.msra.mxu0 0.0
    %1373 = vmatprep.subr.mxu0 0.0
    %1374 = vmatpush1.xpose.msra.mxu0 0.0
    %1375 = vmatprep.subr.mxu0 0.0
    %1376 = vmatpush1.xpose.msra.mxu0 0.0
    %1377 = vmatprep.subr.mxu0 0.0
    %1378 = vmatpush1.xpose.msra.mxu0 0.0
    %1379 = vmatprep.subr.mxu0 0.0
    %1380 = vmatpush1.xpose.msra.mxu0 0.0
    %1381 = vmatprep.subr.mxu0 0.0
    %1382 = vmatpush1.xpose.msra.mxu0 0.0
    %1383 = vmatprep.subr.mxu0 0.0
    %1384 = vmatpush1.xpose.msra.mxu0 0.0
    %1385 = vmatprep.subr.mxu0 0.0
    %1386 = vmatpush1.xpose.msra.mxu0 0.0
    %1387 = vmatprep.subr.mxu0 0.0
    %1388 = vmatpush1.xpose.msra.mxu0 0.0
    %1389 = vmatprep.subr.mxu0 0.0
    %1390 = vmatpush1.xpose.msra.mxu0 0.0
    %1391 = vmatprep.subr.mxu0 0.0
    %1392 = vmatpush1.xpose.msra.mxu0 0.0
    %1393 = vmatprep.subr.mxu0 0.0
    %1394 = vmatpush1.xpose.msra.mxu0 0.0
    %1395 = vmatprep.subr.mxu0 0.0
    %1396 = vmatpush1.xpose.msra.mxu0 0.0
    %1397 = vmatprep.subr.mxu0 0.0
    %1398 = vmatpush1.xpose.msra.mxu0 0.0
    %1399 = vmatprep.subr.mxu0 0.0
    %1400 = vmatpush1.xpose.msra.mxu0 0.0
    %1401 = vmatprep.subr.mxu0 0.0
    %1402 = vmatpush1.xpose.msra.mxu0 0.0
    %1403 = vmatprep.subr.mxu0 0.0
    %1404 = vmatpush1.xpose.msra.mxu0 0.0
    %1405 = vmatprep.subr.mxu0 0.0
    %1406 = vmatpush1.xpose.msra.mxu0 0.0
    %1407 = vmatprep.subr.mxu0 0.0
    %1408 = vmatpush1.xpose.msra.mxu0 0.0
    %1409 = vmatprep.subr.mxu0 0.0
    %1410 = vmatpush1.xpose.msra.mxu0 0.0
    %1411 = vmatprep.subr.mxu0 0.0
    %1412 = vmatpush1.xpose.msra.mxu0 0.0
    %1413 = vmatprep.subr.mxu0 0.0
    %1414 = vmatpush1.xpose.msra.mxu0 0.0
    %1415 = vmatprep.subr.mxu0 0.0
    %1416 = vmatpush1.xpose.msra.mxu0 0.0
    %1417 = vmatprep.subr.mxu0 0.0
    %1418 = vmatpush1.xpose.msra.mxu0 0.0
    %1419 = vmatprep.subr.mxu0 0.0
    %1420 = vmatpush1.xpose.msra.mxu0 0.0
    %1421 = vmatprep.subr.mxu0 0.0
    %1422 = vmatpush1.xpose.msra.mxu0 0.0
    %1423 = vmatprep.subr.mxu0 0.0
    %1424 = vmatpush1.xpose.msra.mxu0 0.0
    %1425 = vmatprep.subr.mxu0 0.0
    %1426 = vmatpush1.xpose.msra.mxu0 0.0
    %1427 = vmatprep.subr.mxu0 0.0
    %1428 = vmatpush1.xpose.msra.mxu0 0.0
    %1429 = vmatprep.subr.mxu0 0.0
    %1430 = vmatpush1.xpose.msra.mxu0 0.0
    %1431 = vmatprep.subr.mxu0 0.0
    %1432 = vmatpush1.xpose.msra.mxu0 0.0
    %1433 = vmatprep.mubr.f32.mxu0 0.0
    %1434 = vmatmul.mubr.f32.gmra.mrb[0].mxu0 %v1365
    %v1435 = vpop.f32.mrb[0].mxu0
    %v1436 = vadd.f32 0.0, %v1435
    %v1437 = vpop.f32.mrb[0].mxu0
    %1438 = vdwg.mxu0
    %v1439 = vmul.f32 %v1358, 0.35355338
    %v1440 = vmul.f32 %v1436, 0.35355338
    %v1441 = vadd.f32 %v1439, %v432
    %v1442 = vadd.f32 %v1440, %v436
    %v1443 = vsel %vm275, %v1441, -inf
    %1444 = vmax.xlane.f32.xlu0 %v1443
    %v1445 = vpop.xlane.xlu0 %1444
    %v1446 = vsel %vm275, %v1442, -inf
    %1447 = vmax.xlane.f32.xlu0 %v1446
    %v1448 = vpop.xlane.xlu0 %1447
    %v1449 = vsub.f32 %v1441, %v1445
    %v1450 = vsub.f32 %v1442, %v1448
    %v1451 = vmul.f32 %v1449, 1.442695
    %v1452 = vpow.pop %v1451
    %v1453 = vmul.f32 %v1450, 1.442695
    %v1454 = vpow.pop %v1453
    %v1455 = vsel %vm275, %v1452, 0.0
    %1456 = vadd.xlane.f32.xlu0 %v1455
    %v1457 = vpop.xlane.xlu0 %1456
    %v1458 = vsel %vm275, %v1454, 0.0
    %1459 = vadd.xlane.f32.xlu0 %v1458
    %v1460 = vpop.xlane.xlu0 %1459
    %v1461 = vrcp.pop %v1457
    %v1462 = vmul.f32 %v1452, %v1461
    %v1463 = vrcp.pop %v1460
    %v1464 = vmul.f32 %v1454, %v1463
    %1465 = vrot.lane.b32.xlu0 %v264, 40
    %v1466 = vpop.permute.xlu0 %1465
    %v1469 = vsel %vm275, %v1462, 0
    %1471 = vmatprep.subr.mxu0 0.0
    %1472 = vmatpush1.msra.mxu0 %v1466
    %1473 = vmatprep.subr.mxu0 0.0
    %1474 = vmatpush1.msra.mxu0 0.0
    %1475 = vmatprep.subr.mxu0 0.0
    %1476 = vmatpush1.msra.mxu0 0.0
    %1477 = vmatprep.subr.mxu0 0.0
    %1478 = vmatpush1.msra.mxu0 0.0
    %1479 = vmatprep.subr.mxu0 0.0
    %1480 = vmatpush1.msra.mxu0 0.0
    %1481 = vmatprep.subr.mxu0 0.0
    %1482 = vmatpush1.msra.mxu0 0.0
    %1483 = vmatprep.subr.mxu0 0.0
    %1484 = vmatpush1.msra.mxu0 0.0
    %1485 = vmatprep.subr.mxu0 0.0
    %1486 = vmatpush1.msra.mxu0 0.0
    %1487 = vmatprep.subr.mxu0 0.0
    %1488 = vmatpush1.msra.mxu0 0.0
    %1489 = vmatprep.subr.mxu0 0.0
    %1490 = vmatpush1.msra.mxu0 0.0
    %1491 = vmatprep.subr.mxu0 0.0
    %1492 = vmatpush1.msra.mxu0 0.0
    %1493 = vmatprep.subr.mxu0 0.0
    %1494 = vmatpush1.msra.mxu0 0.0
    %1495 = vmatprep.subr.mxu0 0.0
    %1496 = vmatpush1.msra.mxu0 0.0
    %1497 = vmatprep.subr.mxu0 0.0
    %1498 = vmatpush1.msra.mxu0 0.0
    %1499 = vmatprep.subr.mxu0 0.0
    %1500 = vmatpush1.msra.mxu0 0.0
    %1501 = vmatprep.subr.mxu0 0.0
    %1502 = vmatpush1.msra.mxu0 0.0
    %1503 = vmatprep.subr.mxu0 0.0
    %1504 = vmatpush1.msra.mxu0 0.0
    %1505 = vmatprep.subr.mxu0 0.0
    %1506 = vmatpush1.msra.mxu0 0.0
    %1507 = vmatprep.subr.mxu0 0.0
    %1508 = vmatpush1.msra.mxu0 0.0
    %1509 = vmatprep.subr.mxu0 0.0
    %1510 = vmatpush1.msra.mxu0 0.0
    %1511 = vmatprep.subr.mxu0 0.0
    %1512 = vmatpush1.msra.mxu0 0.0
    %1513 = vmatprep.subr.mxu0 0.0
    %1514 = vmatpush1.msra.mxu0 0.0
    %1515 = vmatprep.subr.mxu0 0.0
    %1516 = vmatpush1.msra.mxu0 0.0
    %1517 = vmatprep.subr.mxu0 0.0
    %1518 = vmatpush1.msra.mxu0 0.0
    %1519 = vmatprep.subr.mxu0 0.0
    %1520 = vmatpush1.msra.mxu0 0.0
    %1521 = vmatprep.subr.mxu0 0.0
    %1522 = vmatpush1.msra.mxu0 0.0
    %1523 = vmatprep.subr.mxu0 0.0
    %1524 = vmatpush1.msra.mxu0 0.0
    %1525 = vmatprep.subr.mxu0 0.0
    %1526 = vmatpush1.msra.mxu0 0.0
    %1527 = vmatprep.subr.mxu0 0.0
    %1528 = vmatpush1.msra.mxu0 0.0
    %1529 = vmatprep.subr.mxu0 0.0
    %1530 = vmatpush1.msra.mxu0 0.0
    %1531 = vmatprep.subr.mxu0 0.0
    %1532 = vmatpush1.msra.mxu0 0.0
    %1533 = vmatprep.subr.mxu0 0.0
    %1534 = vmatpush1.msra.mxu0 0.0
    %1535 = vmatprep.mubr.f32.mxu0 0.0
    %1536 = vmatmul.mubr.f32.gmra.mrb[0].mxu0 %v1469
    %v1537 = vpop.f32.mrb[0].mxu0
    %v1538 = vadd.f32 0.0, %v1537
    %v1539 = vpop.f32.mrb[0].mxu0
    %1540 = vdwg.mxu0
    %1541 = vrot.lane.b32.xlu0 %v269, 40
    %v1542 = vpop.permute.xlu0 %1541
    %v1545 = vsel %vm275, %v1464, 0
    %1547 = vmatprep.subr.mxu0 0.0
    %1548 = vmatpush1.msra.mxu0 %v1542
    %1549 = vmatprep.subr.mxu0 0.0
    %1550 = vmatpush1.msra.mxu0 0.0
    %1551 = vmatprep.subr.mxu0 0.0
    %1552 = vmatpush1.msra.mxu0 0.0
    %1553 = vmatprep.subr.mxu0 0.0
    %1554 = vmatpush1.msra.mxu0 0.0
    %1555 = vmatprep.subr.mxu0 0.0
    %1556 = vmatpush1.msra.mxu0 0.0
    %1557 = vmatprep.subr.mxu0 0.0
    %1558 = vmatpush1.msra.mxu0 0.0
    %1559 = vmatprep.subr.mxu0 0.0
    %1560 = vmatpush1.msra.mxu0 0.0
    %1561 = vmatprep.subr.mxu0 0.0
    %1562 = vmatpush1.msra.mxu0 0.0
    %1563 = vmatprep.subr.mxu0 0.0
    %1564 = vmatpush1.msra.mxu0 0.0
    %1565 = vmatprep.subr.mxu0 0.0
    %1566 = vmatpush1.msra.mxu0 0.0
    %1567 = vmatprep.subr.mxu0 0.0
    %1568 = vmatpush1.msra.mxu0 0.0
    %1569 = vmatprep.subr.mxu0 0.0
    %1570 = vmatpush1.msra.mxu0 0.0
    %1571 = vmatprep.subr.mxu0 0.0
    %1572 = vmatpush1.msra.mxu0 0.0
    %1573 = vmatprep.subr.mxu0 0.0
    %1574 = vmatpush1.msra.mxu0 0.0
    %1575 = vmatprep.subr.mxu0 0.0
    %1576 = vmatpush1.msra.mxu0 0.0
    %1577 = vmatprep.subr.mxu0 0.0
    %1578 = vmatpush1.msra.mxu0 0.0
    %1579 = vmatprep.subr.mxu0 0.0
    %1580 = vmatpush1.msra.mxu0 0.0
    %1581 = vmatprep.subr.mxu0 0.0
    %1582 = vmatpush1.msra.mxu0 0.0
    %1583 = vmatprep.subr.mxu0 0.0
    %1584 = vmatpush1.msra.mxu0 0.0
    %1585 = vmatprep.subr.mxu0 0.0
    %1586 = vmatpush1.msra.mxu0 0.0
    %1587 = vmatprep.subr.mxu0 0.0
    %1588 = vmatpush1.msra.mxu0 0.0
    %1589 = vmatprep.subr.mxu0 0.0
    %1590 = vmatpush1.msra.mxu0 0.0
    %1591 = vmatprep.subr.mxu0 0.0
    %1592 = vmatpush1.msra.mxu0 0.0
    %1593 = vmatprep.subr.mxu0 0.0
    %1594 = vmatpush1.msra.mxu0 0.0
    %1595 = vmatprep.subr.mxu0 0.0
    %1596 = vmatpush1.msra.mxu0 0.0
    %1597 = vmatprep.subr.mxu0 0.0
    %1598 = vmatpush1.msra.mxu0 0.0
    %1599 = vmatprep.subr.mxu0 0.0
    %1600 = vmatpush1.msra.mxu0 0.0
    %1601 = vmatprep.subr.mxu0 0.0
    %1602 = vmatpush1.msra.mxu0 0.0
    %1603 = vmatprep.subr.mxu0 0.0
    %1604 = vmatpush1.msra.mxu0 0.0
    %1605 = vmatprep.subr.mxu0 0.0
    %1606 = vmatpush1.msra.mxu0 0.0
    %1607 = vmatprep.subr.mxu0 0.0
    %1608 = vmatpush1.msra.mxu0 0.0
    %1609 = vmatprep.subr.mxu0 0.0
    %1610 = vmatpush1.msra.mxu0 0.0
    %1611 = vmatprep.mubr.f32.mxu0 0.0
    %1612 = vmatmul.mubr.f32.gmra.mrb[0].mxu0 %v1545
    %v1613 = vpop.f32.mrb[0].mxu0
    %v1614 = vadd.f32 0.0, %v1613
    %v1615 = vpop.f32.mrb[0].mxu0
    %1616 = vdwg.mxu0
    %1619 = vrot.lane.b32.xlu0 %v870, 8
    %v1620 = vpop.permute.xlu0 %1619
    %1621 = vrot.lane.b32.xlu0 %v946, 8
    %v1622 = vpop.permute.xlu0 %1621
    %1627 = vrot.lane.b32.xlu0 %v1204, 16
    %v1628 = vpop.permute.xlu0 %1627
    %1629 = vrot.lane.b32.xlu0 %v1280, 16
    %v1630 = vpop.permute.xlu0 %1629
    %1635 = vrot.lane.b32.xlu0 %v1538, 24
    %v1636 = vpop.permute.xlu0 %1635
    %1637 = vrot.lane.b32.xlu0 %v1614, 24
    %v1638 = vpop.permute.xlu0 %1637
    %v1641 = vsel %vm275, %v536, %v1620
    %v1642 = vsel %vm275, %v612, %v1622
    %v1643 = vsel %vm81, %v1641, %v1628
    %v1644 = vsel %vm81, %v1642, %v1630
    %vm1645 = vcmask 195584
    %v1646 = vsel %vm1645, %v1643, %v1636
    %v1647 = vsel %vm1645, %v1644, %v1638
    %v1648 = vlaneseq
    %v1649 = vshrl.u32 %v1648, 7
    %v1650 = vsub.s32 0, %v1649
    %v1651 = vrot.slane %v70, %v1650
    %v1653 = vsel %vm190, %v1646, 0
    %v1656 = vsel %vm190, %v1647, 0
    %1658 = vmatprep.subr.mxu0 0.0
    %1659 = vmatpush1.msra.mxu0 %v52
    %1660 = vmatprep.subr.mxu0 0.0
    %1661 = vmatpush1.msra.mxu0 %v53
    %1662 = vmatprep.subr.mxu0 0.0
    %1663 = vmatpush1.msra.mxu0 %v54
    %1664 = vmatprep.subr.mxu0 0.0
    %1665 = vmatpush1.msra.mxu0 %v55
    %1666 = vmatprep.subr.mxu0 0.0
    %1667 = vmatpush1.msra.mxu0 0.0
    %1668 = vmatprep.subr.mxu0 0.0
    %1669 = vmatpush1.msra.mxu0 0.0
    %1670 = vmatprep.subr.mxu0 0.0
    %1671 = vmatpush1.msra.mxu0 0.0
    %1672 = vmatprep.subr.mxu0 0.0
    %1673 = vmatpush1.msra.mxu0 0.0
    %1674 = vmatprep.subr.mxu0 0.0
    %1675 = vmatpush1.msra.mxu0 0.0
    %1676 = vmatprep.subr.mxu0 0.0
    %1677 = vmatpush1.msra.mxu0 0.0
    %1678 = vmatprep.subr.mxu0 0.0
    %1679 = vmatpush1.msra.mxu0 0.0
    %1680 = vmatprep.subr.mxu0 0.0
    %1681 = vmatpush1.msra.mxu0 0.0
    %1682 = vmatprep.subr.mxu0 0.0
    %1683 = vmatpush1.msra.mxu0 0.0
    %1684 = vmatprep.subr.mxu0 0.0
    %1685 = vmatpush1.msra.mxu0 0.0
    %1686 = vmatprep.subr.mxu0 0.0
    %1687 = vmatpush1.msra.mxu0 0.0
    %1688 = vmatprep.subr.mxu0 0.0
    %1689 = vmatpush1.msra.mxu0 0.0
    %1690 = vmatprep.subr.mxu0 0.0
    %1691 = vmatpush1.msra.mxu0 0.0
    %1692 = vmatprep.subr.mxu0 0.0
    %1693 = vmatpush1.msra.mxu0 0.0
    %1694 = vmatprep.subr.mxu0 0.0
    %1695 = vmatpush1.msra.mxu0 0.0
    %1696 = vmatprep.subr.mxu0 0.0
    %1697 = vmatpush1.msra.mxu0 0.0
    %1698 = vmatprep.subr.mxu0 0.0
    %1699 = vmatpush1.msra.mxu0 0.0
    %1700 = vmatprep.subr.mxu0 0.0
    %1701 = vmatpush1.msra.mxu0 0.0
    %1702 = vmatprep.subr.mxu0 0.0
    %1703 = vmatpush1.msra.mxu0 0.0
    %1704 = vmatprep.subr.mxu0 0.0
    %1705 = vmatpush1.msra.mxu0 0.0
    %1706 = vmatprep.subr.mxu0 0.0
    %1707 = vmatpush1.msra.mxu0 0.0
    %1708 = vmatprep.subr.mxu0 0.0
    %1709 = vmatpush1.msra.mxu0 0.0
    %1710 = vmatprep.subr.mxu0 0.0
    %1711 = vmatpush1.msra.mxu0 0.0
    %1712 = vmatprep.subr.mxu0 0.0
    %1713 = vmatpush1.msra.mxu0 0.0
    %1714 = vmatprep.subr.mxu0 0.0
    %1715 = vmatpush1.msra.mxu0 0.0
    %1716 = vmatprep.subr.mxu0 0.0
    %1717 = vmatpush1.msra.mxu0 0.0
    %1718 = vmatprep.subr.mxu0 0.0
    %1719 = vmatpush1.msra.mxu0 0.0
    %1720 = vmatprep.subr.mxu0 0.0
    %1721 = vmatpush1.msra.mxu0 0.0
    %1722 = vmatprep.mubr.f32.mxu0 0.0
    %1723 = vmatmul.mubr.f32.gmra.mrb[0].mxu0 %v1653
    %v1724 = vpop.f32.mrb[0].mxu0
    %v1725 = vadd.f32 %v1651, %v1724
    %v1726 = vpop.f32.mrb[0].mxu0
    %1727 = vmatprep.mubr.f32.mxu0 0.0
    %1728 = vmatmul.mubr.f32.gmra.mrb[0].mxu0 %v1656
    %v1729 = vpop.f32.mrb[0].mxu0
    %v1730 = vadd.f32 %v1651, %v1729
    %v1731 = vpop.f32.mrb[0].mxu0
    %1732 = vdwg.mxu0
    %v1733 = vadd.f32 %v155, %v1725
    %v1734 = vadd.f32 %v160, %v1730
    %v1735 = vsel %vm190, %v1733, 0.0
    %1736 = vadd.xlane.f32.xlu0 %v1735
    %v1737 = vpop.xlane.xlu0 %1736
    %v1738 = vsel %vm190, %v1734, 0.0
    %1739 = vadd.xlane.f32.xlu0 %v1738
    %v1740 = vpop.xlane.xlu0 %1739
    %v1741 = vrcp.pop 32.0
    %v1742 = vmul.f32 %v1737, %v1741
    %v1743 = vmul.f32 %v1740, %v1741
    %v1744 = vsub.f32 %v1733, %v1742
    %v1745 = vsub.f32 %v1734, %v1743
    %v1746 = vmul.f32 %v1744, %v1744
    %v1747 = vmul.f32 %v1745, %v1745
    %v1748 = vsel %vm190, %v1746, 0.0
    %1749 = vadd.xlane.f32.xlu0 %v1748
    %v1750 = vpop.xlane.xlu0 %1749
    %v1751 = vsel %vm190, %v1747, 0.0
    %1752 = vadd.xlane.f32.xlu0 %v1751
    %v1753 = vpop.xlane.xlu0 %1752
    %v1754 = vmul.f32 %v1750, %v1741
    %v1755 = vmul.f32 %v1753, %v1741
    %v1756 = vadd.f32 %v1754, 1e-12
    %v1757 = vadd.f32 %v1755, 1e-12
    %v1758 = vrsqrt.pop %v1756
    %v1759 = vrsqrt.pop %v1757
    %v1760 = vmul.f32 %v1744, %v1758
    %v1761 = vmul.f32 %v1745, %v1759
    %v1762 = vlaneseq
    %v1763 = vshrl.u32 %v1762, 7
    %v1764 = vsub.s32 0, %v1763
    %v1765 = vrot.slane %v71, %v1764
    %v1766 = vmul.f32 %v1760, %v1765
    %v1767 = vmul.f32 %v1761, %v1765
    %v1768 = vlaneseq
    %v1769 = vshrl.u32 %v1768, 7
    %v1770 = vsub.s32 0, %v1769
    %v1771 = vrot.slane %v72, %v1770
    %v1772 = vadd.f32 %v1766, %v1771
    %v1773 = vadd.f32 %v1767, %v1771
    %v1774 = vlaneseq
    %v1775 = vshrl.u32 %v1774, 7
    %v1776 = vsub.s32 0, %v1775
    %v1777 = vrot.slane %v73, %v1776
    %v1779 = vsel %vm190, %v1772, 0
    %v1782 = vsel %vm190, %v1773, 0
    %1784 = vmatprep.subr.mxu0 0.0
    %1785 = vmatpush1.msra.mxu0 %v56
    %1786 = vmatprep.subr.mxu0 0.0
    %1787 = vmatpush1.msra.mxu0 %v57
    %1788 = vmatprep.subr.mxu0 0.0
    %1789 = vmatpush1.msra.mxu0 %v58
    %1790 = vmatprep.subr.mxu0 0.0
    %1791 = vmatpush1.msra.mxu0 %v59
    %1792 = vmatprep.subr.mxu0 0.0
    %1793 = vmatpush1.msra.mxu0 0.0
    %1794 = vmatprep.subr.mxu0 0.0
    %1795 = vmatpush1.msra.mxu0 0.0
    %1796 = vmatprep.subr.mxu0 0.0
    %1797 = vmatpush1.msra.mxu0 0.0
    %1798 = vmatprep.subr.mxu0 0.0
    %1799 = vmatpush1.msra.mxu0 0.0
    %1800 = vmatprep.subr.mxu0 0.0
    %1801 = vmatpush1.msra.mxu0 0.0
    %1802 = vmatprep.subr.mxu0 0.0
    %1803 = vmatpush1.msra.mxu0 0.0
    %1804 = vmatprep.subr.mxu0 0.0
    %1805 = vmatpush1.msra.mxu0 0.0
    %1806 = vmatprep.subr.mxu0 0.0
    %1807 = vmatpush1.msra.mxu0 0.0
    %1808 = vmatprep.subr.mxu0 0.0
    %1809 = vmatpush1.msra.mxu0 0.0
    %1810 = vmatprep.subr.mxu0 0.0
    %1811 = vmatpush1.msra.mxu0 0.0
    %1812 = vmatprep.subr.mxu0 0.0
    %1813 = vmatpush1.msra.mxu0 0.0
    %1814 = vmatprep.subr.mxu0 0.0
    %1815 = vmatpush1.msra.mxu0 0.0
    %1816 = vmatprep.subr.mxu0 0.0
    %1817 = vmatpush1.msra.mxu0 0.0
    %1818 = vmatprep.subr.mxu0 0.0
    %1819 = vmatpush1.msra.mxu0 0.0
    %1820 = vmatprep.subr.mxu0 0.0
    %1821 = vmatpush1.msra.mxu0 0.0
    %1822 = vmatprep.subr.mxu0 0.0
    %1823 = vmatpush1.msra.mxu0 0.0
    %1824 = vmatprep.subr.mxu0 0.0
    %1825 = vmatpush1.msra.mxu0 0.0
    %1826 = vmatprep.subr.mxu0 0.0
    %1827 = vmatpush1.msra.mxu0 0.0
    %1828 = vmatprep.subr.mxu0 0.0
    %1829 = vmatpush1.msra.mxu0 0.0
    %1830 = vmatprep.subr.mxu0 0.0
    %1831 = vmatpush1.msra.mxu0 0.0
    %1832 = vmatprep.subr.mxu0 0.0
    %1833 = vmatpush1.msra.mxu0 0.0
    %1834 = vmatprep.subr.mxu0 0.0
    %1835 = vmatpush1.msra.mxu0 0.0
    %1836 = vmatprep.subr.mxu0 0.0
    %1837 = vmatpush1.msra.mxu0 0.0
    %1838 = vmatprep.subr.mxu0 0.0
    %1839 = vmatpush1.msra.mxu0 0.0
    %1840 = vmatprep.subr.mxu0 0.0
    %1841 = vmatpush1.msra.mxu0 0.0
    %1842 = vmatprep.subr.mxu0 0.0
    %1843 = vmatpush1.msra.mxu0 0.0
    %1844 = vmatprep.subr.mxu0 0.0
    %1845 = vmatpush1.msra.mxu0 0.0
    %1846 = vmatprep.subr.mxu0 0.0
    %1847 = vmatpush1.msra.mxu0 0.0
    %1848 = vmatprep.mubr.f32.mxu0 0.0
    %1849 = vmatmul.mubr.f32.gmra.mrb[0].mxu0 %v1779
    %v1850 = vpop.f32.mrb[0].mxu0
    %v1851 = vadd.f32 %v1777, %v1850
    %v1852 = vpop.f32.mrb[0].mxu0
    %1853 = vmatprep.mubr.f32.mxu0 0.0
    %1854 = vmatmul.mubr.f32.gmra.mrb[0].mxu0 %v1782
    %v1855 = vpop.f32.mrb[0].mxu0
    %v1856 = vadd.f32 %v1777, %v1855
    %v1857 = vpop.f32.mrb[0].mxu0
    %1858 = vdwg.mxu0
    %v1859 = vmul.f32 %v1851, 0.5
    %v1860 = vmul.f32 %v1856, 0.5
    %v1861 = vmul.f32 %v1851, 0.044715
    %v1862 = vmul.f32 %v1856, 0.044715
    %v1863 = vmul.f32 %v1861, %v1851
    %v1864 = vmul.f32 %v1862, %v1856
    %v1865 = vmul.f32 %v1863, %v1851
    %v1866 = vmul.f32 %v1864, %v1856
    %v1867 = vadd.f32 %v1851, %v1865
    %v1868 = vadd.f32 %v1856, %v1866
    %v1869 = vmul.f32 %v1867, 0.7978846
    %v1870 = vmul.f32 %v1868, 0.7978846
    %v1871 = vtanh.pop %v1869
    %v1872 = vtanh.pop %v1870
    %v1873 = vadd.f32 %v1871, 1.0
    %v1874 = vadd.f32 %v1872, 1.0
    %v1875 = vmul.f32 %v1859, %v1873
    %v1876 = vmul.f32 %v1860, %v1874
    %v1877 = vlaneseq
    %v1878 = vshrl.u32 %v1877, 7
    %v1879 = vsub.s32 0, %v1878
    %v1880 = vrot.slane %v74, %v1879
    %vm1881 = vcmask 523264
    %v1883 = vsel %vm1881, %v1875, 0
    %v1886 = vsel %vm1881, %v1876, 0
    %1888 = vmatprep.subr.mxu0 0.0
    %1889 = vmatpush1.msra.mxu0 %v60
    %1890 = vmatprep.subr.mxu0 0.0
    %1891 = vmatpush1.msra.mxu0 %v61
    %1892 = vmatprep.subr.mxu0 0.0
    %1893 = vmatpush1.msra.mxu0 %v62
    %1894 = vmatprep.subr.mxu0 0.0
    %1895 = vmatpush1.msra.mxu0 %v63
    %1896 = vmatprep.subr.mxu0 0.0
    %1897 = vmatpush1.msra.mxu0 %v64
    %1898 = vmatprep.subr.mxu0 0.0
    %1899 = vmatpush1.msra.mxu0 %v65
    %1900 = vmatprep.subr.mxu0 0.0
    %1901 = vmatpush1.msra.mxu0 %v66
    %1902 = vmatprep.subr.mxu0 0.0
    %1903 = vmatpush1.msra.mxu0 %v67
    %1904 = vmatprep.subr.mxu0 0.0
    %1905 = vmatpush1.msra.mxu0 0.0
    %1906 = vmatprep.subr.mxu0 0.0
    %1907 = vmatpush1.msra.mxu0 0.0
    %1908 = vmatprep.subr.mxu0 0.0
    %1909 = vmatpush1.msra.mxu0 0.0
    %1910 = vmatprep.subr.mxu0 0.0
    %1911 = vmatpush1.msra.mxu0 0.0
    %1912 = vmatprep.subr.mxu0 0.0
    %1913 = vmatpush1.msra.mxu0 0.0
    %1914 = vmatprep.subr.mxu0 0.0
    %1915 = vmatpush1.msra.mxu0 0.0
    %1916 = vmatprep.subr.mxu0 0.0
    %1917 = vmatpush1.msra.mxu0 0.0
    %1918 = vmatprep.subr.mxu0 0.0
    %1919 = vmatpush1.msra.mxu0 0.0
    %1920 = vmatprep.subr.mxu0 0.0
    %1921 = vmatpush1.msra.mxu0 0.0
    %1922 = vmatprep.subr.mxu0 0.0
    %1923 = vmatpush1.msra.mxu0 0.0
    %1924 = vmatprep.subr.mxu0 0.0
    %1925 = vmatpush1.msra.mxu0 0.0
    %1926 = vmatprep.subr.mxu0 0.0
    %1927 = vmatpush1.msra.mxu0 0.0
    %1928 = vmatprep.subr.mxu0 0.0
    %1929 = vmatpush1.msra.mxu0 0.0
    %1930 = vmatprep.subr.mxu0 0.0
    %1931 = vmatpush1.msra.mxu0 0.0
    %1932 = vmatprep.subr.mxu0 0.0
    %1933 = vmatpush1.msra.mxu0 0.0
    %1934 = vmatprep.subr.mxu0 0.0
    %1935 = vmatpush1.msra.mxu0 0.0
    %1936 = vmatprep.subr.mxu0 0.0
    %1937 = vmatpush1.msra.mxu0 0.0
    %1938 = vmatprep.subr.mxu0 0.0
    %1939 = vmatpush1.msra.mxu0 0.0
    %1940 = vmatprep.subr.mxu0 0.0
    %1941 = vmatpush1.msra.mxu0 0.0
    %1942 = vmatprep.subr.mxu0 0.0
    %1943 = vmatpush1.msra.mxu0 0.0
    %1944 = vmatprep.subr.mxu0 0.0
    %1945 = vmatpush1.msra.mxu0 0.0
    %1946 = vmatprep.subr.mxu0 0.0
    %1947 = vmatpush1.msra.mxu0 0.0
    %1948 = vmatprep.subr.mxu0 0.0
    %1949 = vmatpush1.msra.mxu0 0.0
    %1950 = vmatprep.subr.mxu0 0.0
    %1951 = vmatpush1.msra.mxu0 0.0
    %1952 = vmatprep.mubr.f32.mxu0 0.0
    %1953 = vmatmul.mubr.f32.gmra.mrb[0].mxu0 %v1883
    %v1954 = vpop.f32.mrb[0].mxu0
    %v1955 = vadd.f32 %v1880, %v1954
    %v1956 = vpop.f32.mrb[0].mxu0
    %1957 = vmatprep.mubr.f32.mxu0 0.0
    %1958 = vmatmul.mubr.f32.gmra.mrb[0].mxu0 %v1886
    %v1959 = vpop.f32.mrb[0].mxu0
    %v1960 = vadd.f32 %v1880, %v1959
    %v1961 = vpop.f32.mrb[0].mxu0
    %1962 = vdwg.mxu0
    %v1963 = vadd.f32 %v1955, %v1772
    %v1964 = vadd.f32 %v1960, %v1773
    %v1965 = vsel %vm190, %v1963, 0.0
    %1966 = vadd.xlane.f32.xlu0 %v1965
    %v1967 = vpop.xlane.xlu0 %1966
    %v1968 = vsel %vm190, %v1964, 0.0
    %1969 = vadd.xlane.f32.xlu0 %v1968
    %v1970 = vpop.xlane.xlu0 %1969
    %v1971 = vmul.f32 %v1967, %v1741
    %v1972 = vmul.f32 %v1970, %v1741
    %v1973 = vsub.f32 %v1963, %v1971
    %v1974 = vsub.f32 %v1964, %v1972
    %v1975 = vmul.f32 %v1973, %v1973
    %v1976 = vmul.f32 %v1974, %v1974
    %v1977 = vsel %vm190, %v1975, 0.0
    %1978 = vadd.xlane.f32.xlu0 %v1977
    %v1979 = vpop.xlane.xlu0 %1978
    %v1980 = vsel %vm190, %v1976, 0.0
    %1981 = vadd.xlane.f32.xlu0 %v1980
    %v1982 = vpop.xlane.xlu0 %1981
    %v1983 = vmul.f32 %v1979, %v1741
    %v1984 = vmul.f32 %v1982, %v1741
    %v1985 = vadd.f32 %v1983, 1e-12
    %v1986 = vadd.f32 %v1984, 1e-12
    %v1987 = vrsqrt.pop %v1985
    %v1988 = vrsqrt.pop %v1986
    %v1989 = vmul.f32 %v1973, %v1987
    %v1990 = vmul.f32 %v1974, %v1988
    %v1991 = vlaneseq
    %v1992 = vshrl.u32 %v1991, 7
    %v1993 = vsub.s32 0, %v1992
    %v1994 = vrot.slane %v75, %v1993
    %v1995 = vmul.f32 %v1989, %v1994
    %v1996 = vmul.f32 %v1990, %v1994
    %v1997 = vlaneseq
    %v1998 = vshrl.u32 %v1997, 7
    %v1999 = vsub.s32 0, %v1998
    %v2000 = vrot.slane %v76, %v1999
    %v2001 = vadd.f32 %v1995, %v2000
    %v2002 = vadd.f32 %v1996, %v2000
    %v2004 = vsel %vm190, %v2001, 0
    %v2007 = vsel %vm190, %v2002, 0
    %2009 = vmatprep.subr.mxu0 0.0
    %2010 = vmatpush1.msra.mxu0 %v48
    %2011 = vmatprep.subr.mxu0 0.0
    %2012 = vmatpush1.msra.mxu0 %v49
    %2013 = vmatprep.subr.mxu0 0.0
    %2014 = vmatpush1.msra.mxu0 %v50
    %2015 = vmatprep.subr.mxu0 0.0
    %2016 = vmatpush1.msra.mxu0 %v51
    %2017 = vmatprep.subr.mxu0 0.0
    %2018 = vmatpush1.msra.mxu0 0.0
    %2019 = vmatprep.subr.mxu0 0.0
    %2020 = vmatpush1.msra.mxu0 0.0
    %2021 = vmatprep.subr.mxu0 0.0
    %2022 = vmatpush1.msra.mxu0 0.0
    %2023 = vmatprep.subr.mxu0 0.0
    %2024 = vmatpush1.msra.mxu0 0.0
    %2025 = vmatprep.subr.mxu0 0.0
    %2026 = vmatpush1.msra.mxu0 0.0
    %2027 = vmatprep.subr.mxu0 0.0
    %2028 = vmatpush1.msra.mxu0 0.0
    %2029 = vmatprep.subr.mxu0 0.0
    %2030 = vmatpush1.msra.mxu0 0.0
    %2031 = vmatprep.subr.mxu0 0.0
    %2032 = vmatpush1.msra.mxu0 0.0
    %2033 = vmatprep.subr.mxu0 0.0
    %2034 = vmatpush1.msra.mxu0 0.0
    %2035 = vmatprep.subr.mxu0 0.0
    %2036 = vmatpush1.msra.mxu0 0.0
    %2037 = vmatprep.subr.mxu0 0.0
    %2038 = vmatpush1.msra.mxu0 0.0
    %2039 = vmatprep.subr.mxu0 0.0
    %2040 = vmatpush1.msra.mxu0 0.0
    %2041 = vmatprep.subr.mxu0 0.0
    %2042 = vmatpush1.msra.mxu0 0.0
    %2043 = vmatprep.subr.mxu0 0.0
    %2044 = vmatpush1.msra.mxu0 0.0
    %2045 = vmatprep.subr.mxu0 0.0
    %2046 = vmatpush1.msra.mxu0 0.0
    %2047 = vmatprep.subr.mxu0 0.0
    %2048 = vmatpush1.msra.mxu0 0.0
    %2049 = vmatprep.subr.mxu0 0.0
    %2050 = vmatpush1.msra.mxu0 0.0
    %2051 = vmatprep.subr.mxu0 0.0
    %2052 = vmatpush1.msra.mxu0 0.0
    %2053 = vmatprep.subr.mxu0 0.0
    %2054 = vmatpush1.msra.mxu0 0.0
    %2055 = vmatprep.subr.mxu0 0.0
    %2056 = vmatpush1.msra.mxu0 0.0
    %2057 = vmatprep.subr.mxu0 0.0
    %2058 = vmatpush1.msra.mxu0 0.0
    %2059 = vmatprep.subr.mxu0 0.0
    %2060 = vmatpush1.msra.mxu0 0.0
    %2061 = vmatprep.subr.mxu0 0.0
    %2062 = vmatpush1.msra.mxu0 0.0
    %2063 = vmatprep.subr.mxu0 0.0
    %2064 = vmatpush1.msra.mxu0 0.0
    %2065 = vmatprep.subr.mxu0 0.0
    %2066 = vmatpush1.msra.mxu0 0.0
    %2067 = vmatprep.subr.mxu0 0.0
    %2068 = vmatpush1.msra.mxu0 0.0
    %2069 = vmatprep.subr.mxu0 0.0
    %2070 = vmatpush1.msra.mxu0 0.0
    %2071 = vmatprep.subr.mxu0 0.0
    %2072 = vmatpush1.msra.mxu0 0.0
    %2073 = vmatprep.mubr.f32.mxu0 0.0
    %2074 = vmatmul.mubr.f32.gmra.mrb[0].mxu0 %v2004
    %v2075 = vpop.f32.mrb[0].mxu0
    %v2076 = vadd.f32 %v189, %v2075
    %v2077 = vpop.f32.mrb[0].mxu0
    %2078 = vmatprep.mubr.f32.mxu0 0.0
    %2079 = vmatmul.mubr.f32.gmra.mrb[0].mxu0 %v2007
    %v2080 = vpop.f32.mrb[0].mxu0
    %v2081 = vadd.f32 %v189, %v2080
    %v2082 = vpop.f32.mrb[0].mxu0
    %2083 = vdwg.mxu0
    %2085 = vrot.lane.b32.xlu0 %v2076, 96
    %v2086 = vpop.permute.xlu0 %2085
    %v2087 = vsel %vm275, %v2076, 0
    %v2089 = vsel %vm275, %v2086, 0
    %2091 = vmatprep.subr.mxu0 0.0
    %2092 = vmatpush1.xpose.msra.mxu0 %v2089
    %2093 = vmatprep.subr.mxu0 0.0
    %2094 = vmatpush1.xpose.msra.mxu0 0.0
    %2095 = vmatprep.subr.mxu0 0.0
    %2096 = vmatpush1.xpose.msra.mxu0 0.0
    %2097 = vmatprep.subr.mxu0 0.0
    %2098 = vmatpush1.xpose.msra.mxu0 0.0
    %2099 = vmatprep.subr.mxu0 0.0
    %2100 = vmatpush1.xpose.msra.mxu0 0.0
    %2101 = vmatprep.subr.mxu0 0.0
    %2102 = vmatpush1.xpose.msra.mxu0 0.0
    %2103 = vmatprep.subr.mxu0 0.0
    %2104 = vmatpush1.xpose.msra.mxu0 0.0
    %2105 = vmatprep.subr.mxu0 0.0
    %2106 = vmatpush1.xpose.msra.mxu0 0.0
    %2107 = vmatprep.subr.mxu0 0.0
    %2108 = vmatpush1.xpose.msra.mxu0 0.0
    %2109 = vmatprep.subr.mxu0 0.0
    %2110 = vmatpush1.xpose.msra.mxu0 0.0
    %2111 = vmatprep.subr.mxu0 0.0
    %2112 = vmatpush1.xpose.msra.mxu0 0.0
    %2113 = vmatprep.subr.mxu0 0.0
    %2114 = vmatpush1.xpose.msra.mxu0 0.0
    %2115 = vmatprep.subr.mxu0 0.0
    %2116 = vmatpush1.xpose.msra.mxu0 0.0
    %2117 = vmatprep.subr.mxu0 0.0
    %2118 = vmatpush1.xpose.msra.mxu0 0.0
    %2119 = vmatprep.subr.mxu0 0.0
    %2120 = vmatpush1.xpose.msra.mxu0 0.0
    %2121 = vmatprep.subr.mxu0 0.0
    %2122 = vmatpush1.xpose.msra.mxu0 0.0
    %2123 = vmatprep.subr.mxu0 0.0
    %2124 = vmatpush1.xpose.msra.mxu0 0.0
    %2125 = vmatprep.subr.mxu0 0.0
    %2126 = vmatpush1.xpose.msra.mxu0 0.0
    %2127 = vmatprep.subr.mxu0 0.0
    %2128 = vmatpush1.xpose.msra.mxu0 0.0
    %2129 = vmatprep.subr.mxu0 0.0
    %2130 = vmatpush1.xpose.msra.mxu0 0.0
    %2131 = vmatprep.subr.mxu0 0.0
    %2132 = vmatpush1.xpose.msra.mxu0 0.0
    %2133 = vmatprep.subr.mxu0 0.0
    %2134 = vmatpush1.xpose.msra.mxu0 0.0
    %2135 = vmatprep.subr.mxu0 0.0
    %2136 = vmatpush1.xpose.msra.mxu0 0.0
    %2137 = vmatprep.subr.mxu0 0.0
    %2138 = vmatpush1.xpose.msra.mxu0 0.0
    %2139 = vmatprep.subr.mxu0 0.0
    %2140 = vmatpush1.xpose.msra.mxu0 0.0
    %2141 = vmatprep.subr.mxu0 0.0
    %2142 = vmatpush1.xpose.msra.mxu0 0.0
    %2143 = vmatprep.subr.mxu0 0.0
    %2144 = vmatpush1.xpose.msra.mxu0 0.0
    %2145 = vmatprep.subr.mxu0 0.0
    %2146 = vmatpush1.xpose.msra.mxu0 0.0
    %2147 = vmatprep.subr.mxu0 0.0
    %2148 = vmatpush1.xpose.msra.mxu0 0.0
    %2149 = vmatprep.subr.mxu0 0.0
    %2150 = vmatpush1.xpose.msra.mxu0 0.0
    %2151 = vmatprep.subr.mxu0 0.0
    %2152 = vmatpush1.xpose.msra.mxu0 0.0
    %2153 = vmatprep.subr.mxu0 0.0
    %2154 = vmatpush1.xpose.msra.mxu0 0.0
    %2155 = vmatprep.mubr.f32.mxu0 0.0
    %2156 = vmatmul.mubr.f32.gmra.mrb[0].mxu0 %v2087
    %v2157 = vpop.f32.mrb[0].mxu0
    %v2158 = vadd.f32 0.0, %v2157
    %v2159 = vpop.f32.mrb[0].mxu0
    %2160 = vdwg.mxu0
    %2162 = vrot.lane.b32.xlu0 %v2081, 96
    %v2163 = vpop.permute.xlu0 %2162
    %v2164 = vsel %vm275, %v2081, 0
    %v2166 = vsel %vm275, %v2163, 0
    %2168 = vmatprep.subr.mxu0 0.0
    %2169 = vmatpush1.xpose.msra.mxu0 %v2166
    %2170 = vmatprep.subr.mxu0 0.0
    %2171 = vmatpush1.xpose.msra.mxu0 0.0
    %2172 = vmatprep.subr.mxu0 0.0
    %2173 = vmatpush1.xpose.msra.mxu0 0.0
    %2174 = vmatprep.subr.mxu0 0.0
    %2175 = vmatpush1.xpose.msra.mxu0 0.0
    %2176 = vmatprep.subr.mxu0 0.0
    %2177 = vmatpush1.xpose.msra.mxu0 0.0
    %2178 = vmatprep.subr.mxu0 0.0
    %2179 = vmatpush1.xpose.msra.mxu0 0.0
    %2180 = vmatprep.subr.mxu0 0.0
    %2181 = vmatpush1.xpose.msra.mxu0 0.0
    %2182 = vmatprep.subr.mxu0 0.0
    %2183 = vmatpush1.xpose.msra.mxu0 0.0
    %2184 = vmatprep.subr.mxu0 0.0
    %2185 = vmatpush1.xpose.msra.mxu0 0.0
    %2186 = vmatprep.subr.mxu0 0.0
    %2187 = vmatpush1.xpose.msra.mxu0 0.0
    %2188 = vmatprep.subr.mxu0 0.0
    %2189 = vmatpush1.xpose.msra.mxu0 0.0
    %2190 = vmatprep.subr.mxu0 0.0
    %2191 = vmatpush1.xpose.msra.mxu0 0.0
    %2192 = vmatprep.subr.mxu0 0.0
    %2193 = vmatpush1.xpose.msra.mxu0 0.0
    %2194 = vmatprep.subr.mxu0 0.0
    %2195 = vmatpush1.xpose.msra.mxu0 0.0
    %2196 = vmatprep.subr.mxu0 0.0
    %2197 = vmatpush1.xpose.msra.mxu0 0.0
    %2198 = vmatprep.subr.mxu0 0.0
    %2199 = vmatpush1.xpose.msra.mxu0 0.0
    %2200 = vmatprep.subr.mxu0 0.0
    %2201 = vmatpush1.xpose.msra.mxu0 0.0
    %2202 = vmatprep.subr.mxu0 0.0
    %2203 = vmatpush1.xpose.msra.mxu0 0.0
    %2204 = vmatprep.subr.mxu0 0.0
    %2205 = vmatpush1.xpose.msra.mxu0 0.0
    %2206 = vmatprep.subr.mxu0 0.0
    %2207 = vmatpush1.xpose.msra.mxu0 0.0
    %2208 = vmatprep.subr.mxu0 0.0
    %2209 = vmatpush1.xpose.msra.mxu0 0.0
    %2210 = vmatprep.subr.mxu0 0.0
    %2211 = vmatpush1.xpose.msra.mxu0 0.0
    %2212 = vmatprep.subr.mxu0 0.0
    %2213 = vmatpush1.xpose.msra.mxu0 0.0
    %2214 = vmatprep.subr.mxu0 0.0
    %2215 = vmatpush1.xpose.msra.mxu0 0.0
    %2216 = vmatprep.subr.mxu0 0.0
    %2217 = vmatpush1.xpose.msra.mxu0 0.0
    %2218 = vmatprep.subr.mxu0 0.0
    %2219 = vmatpush1.xpose.msra.mxu0 0.0
    %2220 = vmatprep.subr.mxu0 0.0
    %2221 = vmatpush1.xpose.msra.mxu0 0.0
    %2222 = vmatprep.subr.mxu0 0.0
    %2223 = vmatpush1.xpose.msra.mxu0 0.0
    %2224 = vmatprep.subr.mxu0 0.0
    %2225 = vmatpush1.xpose.msra.mxu0 0.0
    %2226 = vmatprep.subr.mxu0 0.0
    %2227 = vmatpush1.xpose.msra.mxu0 0.0
    %2228 = vmatprep.subr.mxu0 0.0
    %2229 = vmatpush1.xpose.msra.mxu0 0.0
    %2230 = vmatprep.subr.mxu0 0.0
    %2231 = vmatpush1.xpose.msra.mxu0 0.0
    %2232 = vmatprep.mubr.f32.mxu0 0.0
    %2233 = vmatmul.mubr.f32.gmra.mrb[0].mxu0 %v2164
    %v2234 = vpop.f32.mrb[0].mxu0
    %v2235 = vadd.f32 0.0, %v2234
    %v2236 = vpop.f32.mrb[0].mxu0
    %2237 = vdwg.mxu0
    %v2238 = vmul.f32 %v2158, 0.35355338
    %v2239 = vmul.f32 %v2235, 0.35355338
    %v2240 = vadd.f32 %v2238, %v432
    %v2241 = vadd.f32 %v2239, %v436
    %v2242 = vsel %vm275, %v2240, -inf
    %2243 = vmax.xlane.f32.xlu0 %v2242
    %v2244 = vpop.xlane.xlu0 %2243
    %v2245 = vsel %vm275, %v2241, -inf
    %2246 = vmax.xlane.f32.xlu0 %v2245
    %v2247 = vpop.xlane.xlu0 %2246
    %v2248 = vsub.f32 %v2240, %v2244
    %v2249 = vsub.f32 %v2241, %v2247
    %v2250 = vmul.f32 %v2248, 1.442695
    %v2251 = vpow.pop %v2250
    %v2252 = vmul.f32 %v2249, 1.442695
    %v2253 = vpow.pop %v2252
    %v2254 = vsel %vm275, %v2251, 0.0
    %2255 = vadd.xlane.f32.xlu0 %v2254
    %v2256 = vpop.xlane.xlu0 %2255
    %v2257 = vsel %vm275, %v2253, 0.0
    %2258 = vadd.xlane.f32.xlu0 %v2257
    %v2259 = vpop.xlane.xlu0 %2258
    %v2260 = vrcp.pop %v2256
    %v2261 = vmul.f32 %v2251, %v2260
    %v2262 = vrcp.pop %v2259
    %v2263 = vmul.f32 %v2253, %v2262
    %2264 = vrot.lane.b32.xlu0 %v2076, 64
    %v2265 = vpop.permute.xlu0 %2264
    %v2268 = vsel %vm275, %v2261, 0
    %2270 = vmatprep.subr.mxu0 0.0
    %2271 = vmatpush1.msra.mxu0 %v2265
    %2272 = vmatprep.subr.mxu0 0.0
    %2273 = vmatpush1.msra.mxu0 0.0
    %2274 = vmatprep.subr.mxu0 0.0
    %2275 = vmatpush1.msra.mxu0 0.0
    %2276 = vmatprep.subr.mxu0 0.0
    %2277 = vmatpush1.msra.mxu0 0.0
    %2278 = vmatprep.subr.mxu0 0.0
    %2279 = vmatpush1.msra.mxu0 0.0
    %2280 = vmatprep.subr.mxu0 0.0
    %2281 = vmatpush1.msra.mxu0 0.0
    %2282 = vmatprep.subr.mxu0 0.0
    %2283 = vmatpush1.msra.mxu0 0.0
    %2284 = vmatprep.subr.mxu0 0.0
    %2285 = vmatpush1.msra.mxu0 0.0
    %2286 = vmatprep.subr.mxu0 0.0
    %2287 = vmatpush1.msra.mxu0 0.0
    %2288 = vmatprep.subr.mxu0 0.0
    %2289 = vmatpush1.msra.mxu0 0.0
    %2290 = vmatprep.subr.mxu0 0.0
    %2291 = vmatpush1.msra.mxu0 0.0
    %2292 = vmatprep.subr.mxu0 0.0
    %2293 = vmatpush1.msra.mxu0 0.0
    %2294 = vmatprep.subr.mxu0 0.0
    %2295 = vmatpush1.msra.mxu0 0.0
    %2296 = vmatprep.subr.mxu0 0.0
    %2297 = vmatpush1.msra.mxu0 0.0
    %2298 = vmatprep.subr.mxu0 0.0
    %2299 = vmatpush1.msra.mxu0 0.0
    %2300 = vmatprep.subr.mxu0 0.0
    %2301 = vmatpush1.msra.mxu0 0.0
    %2302 = vmatprep.subr.mxu0 0.0
    %2303 = vmatpush1.msra.mxu0 0.0
    %2304 = vmatprep.subr.mxu0 0.0
    %2305 = vmatpush1.msra.mxu0 0.0
    %2306 = vmatprep.subr.mxu0 0.0
    %2307 = vmatpush1.msra.mxu0 0.0
    %2308 = vmatprep.subr.mxu0 0.0
    %2309 = vmatpush1.msra.mxu0 0.0
    %2310 = vmatprep.subr.mxu0 0.0
    %2311 = vmatpush1.msra.mxu0 0.0
    %2312 = vmatprep.subr.mxu0 0.0
    %2313 = vmatpush1.msra.mxu0 0.0
    %2314 = vmatprep.subr.mxu0 0.0
    %2315 = vmatpush1.msra.mxu0 0.0
    %2316 = vmatprep.subr.mxu0 0.0
    %2317 = vmatpush1.msra.mxu0 0.0
    %2318 = vmatprep.subr.mxu0 0.0
    %2319 = vmatpush1.msra.mxu0 0.0
    %2320 = vmatprep.subr.mxu0 0.0
    %2321 = vmatpush1.msra.mxu0 0.0
    %2322 = vmatprep.subr.mxu0 0.0
    %2323 = vmatpush1.msra.mxu0 0.0
    %2324 = vmatprep.subr.mxu0 0.0
    %2325 = vmatpush1.msra.mxu0 0.0
    %2326 = vmatprep.subr.mxu0 0.0
    %2327 = vmatpush1.msra.mxu0 0.0
    %2328 = vmatprep.subr.mxu0 0.0
    %2329 = vmatpush1.msra.mxu0 0.0
    %2330 = vmatprep.subr.mxu0 0.0
    %2331 = vmatpush1.msra.mxu0 0.0
    %2332 = vmatprep.subr.mxu0 0.0
    %2333 = vmatpush1.msra.mxu0 0.0
    %2334 = vmatprep.mubr.f32.mxu0 0.0
    %2335 = vmatmul.mubr.f32.gmra.mrb[0].mxu0 %v2268
    %v2336 = vpop.f32.mrb[0].mxu0
    %v2337 = vadd.f32 0.0, %v2336
    %v2338 = vpop.f32.mrb[0].mxu0
    %2339 = vdwg.mxu0
    %2340 = vrot.lane.b32.xlu0 %v2081, 64
    %v2341 = vpop.permute.xlu0 %2340
    %v2344 = vsel %vm275, %v2263, 0
    %2346 = vmatprep.subr.mxu0 0.0
    %2347 = vmatpush1.msra.mxu0 %v2341
    %2348 = vmatprep.subr.mxu0 0.0
    %2349 = vmatpush1.msra.mxu0 0.0
    %2350 = vmatprep.subr.mxu0 0.0
    %2351 = vmatpush1.msra.mxu0 0.0
    %2352 = vmatprep.subr.mxu0 0.0
    %2353 = vmatpush1.msra.mxu0 0.0
    %2354 = vmatprep.subr.mxu0 0.0
    %2355 = vmatpush1.msra.mxu0 0.0
    %2356 = vmatprep.subr.mxu0 0.0
    %2357 = vmatpush1.msra.mxu0 0.0
    %2358 = vmatprep.subr.mxu0 0.0
    %2359 = vmatpush1.msra.mxu0 0.0
    %2360 = vmatprep.subr.mxu0 0.0
    %2361 = vmatpush1.msra.mxu0 0.0
    %2362 = vmatprep.subr.mxu0 0.0
    %2363 = vmatpush1.msra.mxu0 0.0
    %2364 = vmatprep.subr.mxu0 0.0
    %2365 = vmatpush1.msra.mxu0 0.0
    %2366 = vmatprep.subr.mxu0 0.0
    %2367 = vmatpush1.msra.mxu0 0.0
    %2368 = vmatprep.subr.mxu0 0.0
    %2369 = vmatpush1.msra.mxu0 0.0
    %2370 = vmatprep.subr.mxu0 0.0
    %2371 = vmatpush1.msra.mxu0 0.0
    %2372 = vmatprep.subr.mxu0 0.0
    %2373 = vmatpush1.msra.mxu0 0.0
    %2374 = vmatprep.subr.mxu0 0.0
    %2375 = vmatpush1.msra.mxu0 0.0
    %2376 = vmatprep.subr.mxu0 0.0
    %2377 = vmatpush1.msra.mxu0 0.0
    %2378 = vmatprep.subr.mxu0 0.0
    %2379 = vmatpush1.msra.mxu0 0.0
    %2380 = vmatprep.subr.mxu0 0.0
    %2381 = vmatpush1.msra.mxu0 0.0
    %2382 = vmatprep.subr.mxu0 0.0
    %2383 = vmatpush1.msra.mxu0 0.0
    %2384 = vmatprep.subr.mxu0 0.0
    %2385 = vmatpush1.msra.mxu0 0.0
    %2386 = vmatprep.subr.mxu0 0.0
    %2387 = vmatpush1.msra.mxu0 0.0
    %2388 = vmatprep.subr.mxu0 0.0
    %2389 = vmatpush1.msra.mxu0 0.0
    %2390 = vmatprep.subr.mxu0 0.0
    %2391 = vmatpush1.msra.mxu0 0.0
    %2392 = vmatprep.subr.mxu0 0.0
    %2393 = vmatpush1.msra.mxu0 0.0
    %2394 = vmatprep.subr.mxu0 0.0
    %2395 = vmatpush1.msra.mxu0 0.0
    %2396 = vmatprep.subr.mxu0 0.0
    %2397 = vmatpush1.msra.mxu0 0.0
    %2398 = vmatprep.subr.mxu0 0.0
    %2399 = vmatpush1.msra.mxu0 0.0
    %2400 = vmatprep.subr.mxu0 0.0
    %2401 = vmatpush1.msra.mxu0 0.0
    %2402 = vmatprep.subr.mxu0 0.0
    %2403 = vmatpush1.msra.mxu0 0.0
    %2404 = vmatprep.subr.mxu0 0.0
    %2405 = vmatpush1.msra.mxu0 0.0
    %2406 = vmatprep.subr.mxu0 0.0
    %2407 = vmatpush1.msra.mxu0 0.0
    %2408 = vmatprep.subr.mxu0 0.0
    %2409 = vmatpush1.msra.mxu0 0.0
    %2410 = vmatprep.mubr.f32.mxu0 0.0
    %2411 = vmatmul.mubr.f32.gmra.mrb[0].mxu0 %v2344
    %v2412 = vpop.f32.mrb[0].mxu0
    %v2413 = vadd.f32 0.0, %v2412
    %v2414 = vpop.f32.mrb[0].mxu0
    %2415 = vdwg.mxu0
    %2416 = vrot.lane.b32.xlu0 %v2076, 120
    %v2417 = vpop.permute.xlu0 %2416
    %2418 = vrot.lane.b32.xlu0 %v2076, 88
    %v2419 = vpop.permute.xlu0 %2418
    %v2420 = vsel %vm275, %v2417, 0
    %v2422 = vsel %vm275, %v2419, 0
    %2424 = vmatprep.subr.mxu0 0.0
    %2425 = vmatpush1.xpose.msra.mxu0 %v2422
    %2426 = vmatprep.subr.mxu0 0.0
    %2427 = vmatpush1.xpose.msra.mxu0 0.0
    %2428 = vmatprep.subr.mxu0 0.0
    %2429 = vmatpush1.xpose.msra.mxu0 0.0
    %2430 = vmatprep.subr.mxu0 0.0
    %2431 = vmatpush1.xpose.msra.mxu0 0.0
    %2432 = vmatprep.subr.mxu0 0.0
    %2433 = vmatpush1.xpose.msra.mxu0 0.0
    %2434 = vmatprep.subr.mxu0 0.0
    %2435 = vmatpush1.xpose.msra.mxu0 0.0
    %2436 = vmatprep.subr.mxu0 0.0
    %2437 = vmatpush1.xpose.msra.mxu0 0.0
    %2438 = vmatprep.subr.mxu0 0.0
    %2439 = vmatpush1.xpose.msra.mxu0 0.0
    %2440 = vmatprep.subr.mxu0 0.0
    %2441 = vmatpush1.xpose.msra.mxu0 0.0
    %2442 = vmatprep.subr.mxu0 0.0
    %2443 = vmatpush1.xpose.msra.mxu0 0.0
    %2444 = vmatprep.subr.mxu0 0.0
    %2445 = vmatpush1.xpose.msra.mxu0 0.0
    %2446 = vmatprep.subr.mxu0 0.0
    %2447 = vmatpush1.xpose.msra.mxu0 0.0
    %2448 = vmatprep.subr.mxu0 0.0
    %2449 = vmatpush1.xpose.msra.mxu0 0.0
    %2450 = vmatprep.subr.mxu0 0.0
    %2451 = vmatpush1.xpose.msra.mxu0 0.0
    %2452 = vmatprep.subr.mxu0 0.0
    %2453 = vmatpush1.xpose.msra.mxu0 0.0
    %2454 = vmatprep.subr.mxu0 0.0
    %2455 = vmatpush1.xpose.msra.mxu0 0.0
    %2456 = vmatprep.subr.mxu0 0.0
    %2457 = vmatpush1.xpose.msra.mxu0 0.0
    %2458 = vmatprep.subr.mxu0 0.0
    %2459 = vmatpush1.xpose.msra.mxu0 0.0
    %2460 = vmatprep.subr.mxu0 0.0
    %2461 = vmatpush1.xpose.msra.mxu0 0.0
    %2462 = vmatprep.subr.mxu0 0.0
    %2463 = vmatpush1.xpose.msra.mxu0 0.0
    %2464 = vmatprep.subr.mxu0 0.0
    %2465 = vmatpush1.xpose.msra.mxu0 0.0
    %2466 = vmatprep.subr.mxu0 0.0
    %2467 = vmatpush1.xpose.msra.mxu0 0.0
    %2468 = vmatprep.subr.mxu0 0.0
    %2469 = vmatpush1.xpose.msra.mxu0 0.0
    %2470 = vmatprep.subr.mxu0 0.0
    %2471 = vmatpush1.xpose.msra.mxu0 0.0
    %2472 = vmatprep.subr.mxu0 0.0
    %2473 = vmatpush1.xpose.msra.mxu0 0.0
    %2474 = vmatprep.subr.mxu0 0.0
    %2475 = vmatpush1.xpose.msra.mxu0 0.0
    %2476 = vmatprep.subr.mxu0 0.0
    %2477 = vmatpush1.xpose.msra.mxu0 0.0
    %2478 = vmatprep.subr.mxu0 0.0
    %2479 = vmatpush1.xpose.msra.mxu0 0.0
    %2480 = vmatprep.subr.mxu0 0.0
    %2481 = vmatpush1.xpose.msra.mxu0 0.0
    %2482 = vmatprep.subr.mxu0 0.0
    %2483 = vmatpush1.xpose.msra.mxu0 0.0
    %2484 = vmatprep.subr.mxu0 0.0
    %2485 = vmatpush1.xpose.msra.mxu0 0.0
    %2486 = vmatprep.subr.mxu0 0.0
    %2487 = vmatpush1.xpose.msra.mxu0 0.0
    %2488 = vmatprep.mubr.f32.mxu0 0.0
    %2489 = vmatmul.mubr.f32.gmra.mrb[0].mxu0 %v2420
    %v2490 = vpop.f32.mrb[0].mxu0
    %v2491 = vadd.f32 0.0, %v2490
    %v2492 = vpop.f32.mrb[0].mxu0
    %2493 = vdwg.mxu0
    %2494 = vrot.lane.b32.xlu0 %v2081, 120
    %v2495 = vpop.permute.xlu0 %2494
    %2496 = vrot.lane.b32.xlu0 %v2081, 88
    %v2497 = vpop.permute.xlu0 %2496
    %v2498 = vsel %vm275, %v2495, 0
    %v2500 = vsel %vm275, %v2497, 0
    %2502 = vmatprep.subr.mxu0 0.0
    %2503 = vmatpush1.xpose.msra.mxu0 %v2500
    %2504 = vmatprep.subr.mxu0 0.0
    %2505 = vmatpush1.xpose.msra.mxu0 0.0
    %2506 = vmatprep.subr.mxu0 0.0
    %2507 = vmatpush1.xpose.msra.mxu0 0.0
    %2508 = vmatprep.subr.mxu0 0.0
    %2509 = vmatpush1.xpose.msra.mxu0 0.0
    %2510 = vmatprep.subr.mxu0 0.0
    %2511 = vmatpush1.xpose.msra.mxu0 0.0
    %2512 = vmatprep.subr.mxu0 0.0
    %2513 = vmatpush1.xpose.msra.mxu0 0.0
    %2514 = vmatprep.subr.mxu0 0.0
    %2515 = vmatpush1.xpose.msra.mxu0 0.0
    %2516 = vmatprep.subr.mxu0 0.0
    %2517 = vmatpush1.xpose.msra.mxu0 0.0
    %2518 = vmatprep.subr.mxu0 0.0
    %2519 = vmatpush1.xpose.msra.mxu0 0.0
    %2520 = vmatprep.subr.mxu0 0.0
    %2521 = vmatpush1.xpose.msra.mxu0 0.0
    %2522 = vmatprep.subr.mxu0 0.0
    %2523 = vmatpush1.xpose.msra.mxu0 0.0
    %2524 = vmatprep.subr.mxu0 0.0
    %2525 = vmatpush1.xpose.msra.mxu0 0.0
    %2526 = vmatprep.subr.mxu0 0.0
    %2527 = vmatpush1.xpose.msra.mxu0 0.0
    %2528 = vmatprep.subr.mxu0 0.0
    %2529 = vmatpush1.xpose.msra.mxu0 0.0
    %2530 = vmatprep.subr.mxu0 0.0
    %2531 = vmatpush1.xpose.msra.mxu0 0.0
    %2532 = vmatprep.subr.mxu0 0.0
    %2533 = vmatpush1.xpose.msra.mxu0 0.0
    %2534 = vmatprep.subr.mxu0 0.0
    %2535 = vmatpush1.xpose.msra.mxu0 0.0
    %2536 = vmatprep.subr.mxu0 0.0
    %2537 = vmatpush1.xpose.msra.mxu0 0.0
    %2538 = vmatprep.subr.mxu0 0.0
    %2539 = vmatpush1.xpose.msra.mxu0 0.0
    %2540 = vmatprep.subr.mxu0 0.0
    %2541 = vmatpush1.xpose.msra.mxu0 0.0
    %2542 = vmatprep.subr.mxu0 0.0
    %2543 = vmatpush1.xpose.msra.mxu0 0.0
    %2544 = vmatprep.subr.mxu0 0.0
    %2545 = vmatpush1.xpose.msra.mxu0 0.0
    %2546 = vmatprep.subr.mxu0 0.0
    %2547 = vmatpush1.xpose.msra.mxu0 0.0
    %2548 = vmatprep.subr.mxu0 0.0
    %2549 = vmatpush1.xpose.msra.mxu0 0.0
    %2550 = vmatprep.subr.mxu0 0.0
    %2551 = vmatpush1.xpose.msra.mxu0 0.0
    %2552 = vmatprep.subr.mxu0 0.0
    %2553 = vmatpush1.xpose.msra.mxu0 0.0
    %2554 = vmatprep.subr.mxu0 0.0
    %2555 = vmatpush1.xpose.msra.mxu0 0.0
    %2556 = vmatprep.subr.mxu0 0.0
    %2557 = vmatpush1.xpose.msra.mxu0 0.0
    %2558 = vmatprep.subr.mxu0 0.0
    %2559 = vmatpush1.xpose.msra.mxu0 0.0
    %2560 = vmatprep.subr.mxu0 0.0
    %2561 = vmatpush1.xpose.msra.mxu0 0.0
    %2562 = vmatprep.subr.mxu0 0.0
    %2563 = vmatpush1.xpose.msra.mxu0 0.0
    %2564 = vmatprep.subr.mxu0 0.0
    %2565 = vmatpush1.xpose.msra.mxu0 0.0
    %2566 = vmatprep.mubr.f32.mxu0 0.0
    %2567 = vmatmul.mubr.f32.gmra.mrb[0].mxu0 %v2498
    %v2568 = vpop.f32.mrb[0].mxu0
    %v2569 = vadd.f32 0.0, %v2568
    %v2570 = vpop.f32.mrb[0].mxu0
    %2571 = vdwg.mxu0
    %v2572 = vmul.f32 %v2491, 0.35355338
    %v2573 = vmul.f32 %v2569, 0.35355338
    %v2574 = vadd.f32 %v2572, %v432
    %v2575 = vadd.f32 %v2573, %v436
    %v2576 = vsel %vm275, %v2574, -inf
    %2577 = vmax.xlane.f32.xlu0 %v2576
    %v2578 = vpop.xlane.xlu0 %2577
    %v2579 = vsel %vm275, %v2575, -inf
    %2580 = vmax.xlane.f32.xlu0 %v2579
    %v2581 = vpop.xlane.xlu0 %2580
    %v2582 = vsub.f32 %v2574, %v2578
    %v2583 = vsub.f32 %v2575, %v2581
    %v2584 = vmul.f32 %v2582, 1.442695
    %v2585 = vpow.pop %v2584
    %v2586 = vmul.f32 %v2583, 1.442695
    %v2587 = vpow.pop %v2586
    %v2588 = vsel %vm275, %v2585, 0.0
    %2589 = vadd.xlane.f32.xlu0 %v2588
    %v2590 = vpop.xlane.xlu0 %2589
    %v2591 = vsel %vm275, %v2587, 0.0
    %2592 = vadd.xlane.f32.xlu0 %v2591
    %v2593 = vpop.xlane.xlu0 %2592
    %v2594 = vrcp.pop %v2590
    %v2595 = vmul.f32 %v2585, %v2594
    %v2596 = vrcp.pop %v2593
    %v2597 = vmul.f32 %v2587, %v2596
    %2598 = vrot.lane.b32.xlu0 %v2076, 56
    %v2599 = vpop.permute.xlu0 %2598
    %v2602 = vsel %vm275, %v2595, 0
    %2604 = vmatprep.subr.mxu0 0.0
    %2605 = vmatpush1.msra.mxu0 %v2599
    %2606 = vmatprep.subr.mxu0 0.0
    %2607 = vmatpush1.msra.mxu0 0.0
    %2608 = vmatprep.subr.mxu0 0.0
    %2609 = vmatpush1.msra.mxu0 0.0
    %2610 = vmatprep.subr.mxu0 0.0
    %2611 = vmatpush1.msra.mxu0 0.0
    %2612 = vmatprep.subr.mxu0 0.0
    %2613 = vmatpush1.msra.mxu0 0.0
    %2614 = vmatprep.subr.mxu0 0.0
    %2615 = vmatpush1.msra.mxu0 0.0
    %2616 = vmatprep.subr.mxu0 0.0
    %2617 = vmatpush1.msra.mxu0 0.0
    %2618 = vmatprep.subr.mxu0 0.0
    %2619 = vmatpush1.msra.mxu0 0.0
    %2620 = vmatprep.subr.mxu0 0.0
    %2621 = vmatpush1.msra.mxu0 0.0
    %2622 = vmatprep.subr.mxu0 0.0
    %2623 = vmatpush1.msra.mxu0 0.0
    %2624 = vmatprep.subr.mxu0 0.0
    %2625 = vmatpush1.msra.mxu0 0.0
    %2626 = vmatprep.subr.mxu0 0.0
    %2627 = vmatpush1.msra.mxu0 0.0
    %2628 = vmatprep.subr.mxu0 0.0
    %2629 = vmatpush1.msra.mxu0 0.0
    %2630 = vmatprep.subr.mxu0 0.0
    %2631 = vmatpush1.msra.mxu0 0.0
    %2632 = vmatprep.subr.mxu0 0.0
    %2633 = vmatpush1.msra.mxu0 0.0
    %2634 = vmatprep.subr.mxu0 0.0
    %2635 = vmatpush1.msra.mxu0 0.0
    %2636 = vmatprep.subr.mxu0 0.0
    %2637 = vmatpush1.msra.mxu0 0.0
    %2638 = vmatprep.subr.mxu0 0.0
    %2639 = vmatpush1.msra.mxu0 0.0
    %2640 = vmatprep.subr.mxu0 0.0
    %2641 = vmatpush1.msra.mxu0 0.0
    %2642 = vmatprep.subr.mxu0 0.0
    %2643 = vmatpush1.msra.mxu0 0.0
    %2644 = vmatprep.subr.mxu0 0.0
    %2645 = vmatpush1.msra.mxu0 0.0
    %2646 = vmatprep.subr.mxu0 0.0
    %2647 = vmatpush1.msra.mxu0 0.0
    %2648 = vmatprep.subr.mxu0 0.0
    %2649 = vmatpush1.msra.mxu0 0.0
    %2650 = vmatprep.subr.mxu0 0.0
    %2651 = vmatpush1.msra.mxu0 0.0
    %2652 = vmatprep.subr.mxu0 0.0
    %2653 = vmatpush1.msra.mxu0 0.0
    %2654 = vmatprep.subr.mxu0 0.0
    %2655 = vmatpush1.msra.mxu0 0.0
    %2656 = vmatprep.subr.mxu0 0.0
    %2657 = vmatpush1.msra.mxu0 0.0
    %2658 = vmatprep.subr.mxu0 0.0
    %2659 = vmatpush1.msra.mxu0 0.0
    %2660 = vmatprep.subr.mxu0 0.0
    %2661 = vmatpush1.msra.mxu0 0.0
    %2662 = vmatprep.subr.mxu0 0.0
    %2663 = vmatpush1.msra.mxu0 0.0
    %2664 = vmatprep.subr.mxu0 0.0
    %2665 = vmatpush1.msra.mxu0 0.0
    %2666 = vmatprep.subr.mxu0 0.0
    %2667 = vmatpush1.msra.mxu0 0.0
    %2668 = vmatprep.mubr.f32.mxu0 0.0
    %2669 = vmatmul.mubr.f32.gmra.mrb[0].mxu0 %v2602
    %v2670 = vpop.f32.mrb[0].mxu0
    %v2671 = vadd.f32 0.0, %v2670
    %v2672 = vpop.f32.mrb[0].mxu0
    %2673 = vdwg.mxu0
    %2674 = vrot.lane.b32.xlu0 %v2081, 56
    %v2675 = vpop.permute.xlu0 %2674
    %v2678 = vsel %vm275, %v2597, 0
    %2680 = vmatprep.subr.mxu0 0.0
    %2681 = vmatpush1.msra.mxu0 %v2675
    %2682 = vmatprep.subr.mxu0 0.0
    %2683 = vmatpush1.msra.mxu0 0.0
    %2684 = vmatprep.subr.mxu0 0.0
    %2685 = vmatpush1.msra.mxu0 0.0
    %2686 = vmatprep.subr.mxu0 0.0
    %2687 = vmatpush1.msra.mxu0 0.0
    %2688 = vmatprep.subr.mxu0 0.0
    %2689 = vmatpush1.msra.mxu0 0.0
    %2690 = vmatprep.subr.mxu0 0.0
    %2691 = vmatpush1.msra.mxu0 0.0
    %2692 = vmatprep.subr.mxu0 0.0
    %2693 = vmatpush1.msra.mxu0 0.0
    %2694 = vmatprep.subr.mxu0 0.0
    %2695 = vmatpush1.msra.mxu0 0.0
    %2696 = vmatprep.subr.mxu0 0.0
    %2697 = vmatpush1.msra.mxu0 0.0
    %2698 = vmatprep.subr.mxu0 0.0
    %2699 = vmatpush1.msra.mxu0 0.0
    %2700 = vmatprep.subr.mxu0 0.0
    %2701 = vmatpush1.msra.mxu0 0.0
    %2702 = vmatprep.subr.mxu0 0.0
    %2703 = vmatpush1.msra.mxu0 0.0
    %2704 = vmatprep.subr.mxu0 0.0
    %2705 = vmatpush1.msra.mxu0 0.0
    %2706 = vmatprep.subr.mxu0 0.0
    %2707 = vmatpush1.msra.mxu0 0.0
    %2708 = vmatprep.subr.mxu0 0.0
    %2709 = vmatpush1.msra.mxu0 0.0
    %2710 = vmatprep.subr.mxu0 0.0
    %2711 = vmatpush1.msra.mxu0 0.0
    %2712 = vmatprep.subr.mxu0 0.0
    %2713 = vmatpush1.msra.mxu0 0.0
    %2714 = vmatprep.subr.mxu0 0.0
    %2715 = vmatpush1.msra.mxu0 0.0
    %2716 = vmatprep.subr.mxu0 0.0
    %2717 = vmatpush1.msra.mxu0 0.0
    %2718 = vmatprep.subr.mxu0 0.0
    %2719 = vmatpush1.msra.mxu0 0.0
    %2720 = vmatprep.subr.mxu0 0.0
    %2721 = vmatpush1.msra.mxu0 0.0
    %2722 = vmatprep.subr.mxu0 0.0
    %2723 = vmatpush1.msra.mxu0 0.0
    %2724 = vmatprep.subr.mxu0 0.0
    %2725 = vmatpush1.msra.mxu0 0.0
    %2726 = vmatprep.subr.mxu0 0.0
    %2727 = vmatpush1.msra.mxu0 0.0
    %2728 = vmatprep.subr.mxu0 0.0
    %2729 = vmatpush1.msra.mxu0 0.0
    %2730 = vmatprep.subr.mxu0 0.0
    %2731 = vmatpush1.msra.mxu0 0.0
    %2732 = vmatprep.subr.mxu0 0.0
    %2733 = vmatpush1.msra.mxu0 0.0
    %2734 = vmatprep.subr.mxu0 0.0
    %2735 = vmatpush1.msra.mxu0 0.0
    %2736 = vmatprep.subr.mxu0 0.0
    %2737 = vmatpush1.msra.mxu0 0.0
    %2738 = vmatprep.subr.mxu0 0.0
    %2739 = vmatpush1.msra.mxu0 0.0
    %2740 = vmatprep.subr.mxu0 0.0
    %2741 = vmatpush1.msra.mxu0 0.0
    %2742 = vmatprep.subr.mxu0 0.0
    %2743 = vmatpush1.msra.mxu0 0.0
    %2744 = vmatprep.mubr.f32.mxu0 0.0
    %2745 = vmatmul.mubr.f32.gmra.mrb[0].mxu0 %v2678
    %v2746 = vpop.f32.mrb[0].mxu0
    %v2747 = vadd.f32 0.0, %v2746
    %v2748 = vpop.f32.mrb[0].mxu0
    %2749 = vdwg.mxu0
    %2750 = vrot.lane.b32.xlu0 %v2076, 112
    %v2751 = vpop.permute.xlu0 %2750
    %2752 = vrot.lane.b32.xlu0 %v2076, 80
    %v2753 = vpop.permute.xlu0 %2752
    %v2754 = vsel %vm275, %v2751, 0
    %v2756 = vsel %vm275, %v2753, 0
    %2758 = vmatprep.subr.mxu0 0.0
    %2759 = vmatpush1.xpose.msra.mxu0 %v2756
    %2760 = vmatprep.subr.mxu0 0.0
    %2761 = vmatpush1.xpose.msra.mxu0 0.0
    %2762 = vmatprep.subr.mxu0 0.0
    %2763 = vmatpush1.xpose.msra.mxu0 0.0
    %2764 = vmatprep.subr.mxu0 0.0
    %2765 = vmatpush1.xpose.msra.mxu0 0.0
    %2766 = vmatprep.subr.mxu0 0.0
    %2767 = vmatpush1.xpose.msra.mxu0 0.0
    %2768 = vmatprep.subr.mxu0 0.0
    %2769 = vmatpush1.xpose.msra.mxu0 0.0
    %2770 = vmatprep.subr.mxu0 0.0
    %2771 = vmatpush1.xpose.msra.mxu0 0.0
    %2772 = vmatprep.subr.mxu0 0.0
    %2773 = vmatpush1.xpose.msra.mxu0 0.0
    %2774 = vmatprep.subr.mxu0 0.0
    %2775 = vmatpush1.xpose.msra.mxu0 0.0
    %2776 = vmatprep.subr.mxu0 0.0
    %2777 = vmatpush1.xpose.msra.mxu0 0.0
    %2778 = vmatprep.subr.mxu0 0.0
    %2779 = vmatpush1.xpose.msra.mxu0 0.0
    %2780 = vmatprep.subr.mxu0 0.0
    %2781 = vmatpush1.xpose.msra.mxu0 0.0
    %2782 = vmatprep.subr.mxu0 0.0
    %2783 = vmatpush1.xpose.msra.mxu0 0.0
    %2784 = vmatprep.subr.mxu0 0.0
    %2785 = vmatpush1.xpose.msra.mxu0 0.0
    %2786 = vmatprep.subr.mxu0 0.0
    %2787 = vmatpush1.xpose.msra.mxu0 0.0
    %2788 = vmatprep.subr.mxu0 0.0
    %2789 = vmatpush1.xpose.msra.mxu0 0.0
    %2790 = vmatprep.subr.mxu0 0.0
    %2791 = vmatpush1.xpose.msra.mxu0 0.0
    %2792 = vmatprep.subr.mxu0 0.0
    %2793 = vmatpush1.xpose.msra.mxu0 0.0
    %2794 = vmatprep.subr.mxu0 0.0
    %2795 = vmatpush1.xpose.msra.mxu0 0.0
    %2796 = vmatprep.subr.mxu0 0.0
    %2797 = vmatpush1.xpose.msra.mxu0 0.0
    %2798 = vmatprep.subr.mxu0 0.0
    %2799 = vmatpush1.xpose.msra.mxu0 0.0
    %2800 = vmatprep.subr.mxu0 0.0
    %2801 = vmatpush1.xpose.msra.mxu0 0.0
    %2802 = vmatprep.subr.mxu0 0.0
    %2803 = vmatpush1.xpose.msra.mxu0 0.0
    %2804 = vmatprep.subr.mxu0 0.0
    %2805 = vmatpush1.xpose.msra.mxu0 0.0
    %2806 = vmatprep.subr.mxu0 0.0
    %2807 = vmatpush1.xpose.msra.mxu0 0.0
    %2808 = vmatprep.subr.mxu0 0.0
    %2809 = vmatpush1.xpose.msra.mxu0 0.0
    %2810 = vmatprep.subr.mxu0 0.0
    %2811 = vmatpush1.xpose.msra.mxu0 0.0
    %2812 = vmatprep.subr.mxu0 0.0
    %2813 = vmatpush1.xpose.msra.mxu0 0.0
    %2814 = vmatprep.subr.mxu0 0.0
    %2815 = vmatpush1.xpose.msra.mxu0 0.0
    %2816 = vmatprep.subr.mxu0 0.0
    %2817 = vmatpush1.xpose.msra.mxu0 0.0
    %2818 = vmatprep.subr.mxu0 0.0
    %2819 = vmatpush1.xpose.msra.mxu0 0.0
    %2820 = vmatprep.subr.mxu0 0.0
    %2821 = vmatpush1.xpose.msra.mxu0 0.0
    %2822 = vmatprep.mubr.f32.mxu0 0.0
    %2823 = vmatmul.mubr.f32.gmra.mrb[0].mxu0 %v2754
    %v2824 = vpop.f32.mrb[0].mxu0
    %v2825 = vadd.f32 0.0, %v2824
    %v2826 = vpop.f32.mrb[0].mxu0
    %2827 = vdwg.mxu0
    %2828 = vrot.lane.b32.xlu0 %v2081, 112
    %v2829 = vpop.permute.xlu0 %2828
    %2830 = vrot.lane.b32.xlu0 %v2081, 80
    %v2831 = vpop.permute.xlu0 %2830
    %v2832 = vsel %vm275, %v2829, 0
    %v2834 = vsel %vm275, %v2831, 0
    %2836 = vmatprep.subr.mxu0 0.0
    %2837 = vmatpush1.xpose.msra.mxu0 %v2834
    %2838 = vmatprep.subr.mxu0 0.0
    %2839 = vmatpush1.xpose.msra.mxu0 0.0
    %2840 = vmatprep.subr.mxu0 0.0
    %2841 = vmatpush1.xpose.msra.mxu0 0.0
    %2842 = vmatprep.subr.mxu0 0.0
    %2843 = vmatpush1.xpose.msra.mxu0 0.0
    %2844 = vmatprep.subr.mxu0 0.0
    %2845 = vmatpush1.xpose.msra.mxu0 0.0
    %2846 = vmatprep.subr.mxu0 0.0
    %2847 = vmatpush1.xpose.msra.mxu0 0.0
    %2848 = vmatprep.subr.mxu0 0.0
    %2849 = vmatpush1.xpose.msra.mxu0 0.0
    %2850 = vmatprep.subr.mxu0 0.0
    %2851 = vmatpush1.xpose.msra.mxu0 0.0
    %2852 = vmatprep.subr.mxu0 0.0
    %2853 = vmatpush1.xpose.msra.mxu0 0.0
    %2854 = vmatprep.subr.mxu0 0.0
    %2855 = vmatpush1.xpose.msra.mxu0 0.0
    %2856 = vmatprep.subr.mxu0 0.0
    %2857 = vmatpush1.xpose.msra.mxu0 0.0
    %2858 = vmatprep.subr.mxu0 0.0
    %2859 = vmatpush1.xpose.msra.mxu0 0.0
    %2860 = vmatprep.subr.mxu0 0.0
    %2861 = vmatpush1.xpose.msra.mxu0 0.0
    %2862 = vmatprep.subr.mxu0 0.0
    %2863 = vmatpush1.xpose.msra.mxu0 0.0
    %2864 = vmatprep.subr.mxu0 0.0
    %2865 = vmatpush1.xpose.msra.mxu0 0.0
    %2866 = vmatprep.subr.mxu0 0.0
    %2867 = vmatpush1.xpose.msra.mxu0 0.0
    %2868 = vmatprep.subr.mxu0 0.0
    %2869 = vmatpush1.xpose.msra.mxu0 0.0
    %2870 = vmatprep.subr.mxu0 0.0
    %2871 = vmatpush1.xpose.msra.mxu0 0.0
    %2872 = vmatprep.subr.mxu0 0.0
    %2873 = vmatpush1.xpose.msra.mxu0 0.0
    %2874 = vmatprep.subr.mxu0 0.0
    %2875 = vmatpush1.xpose.msra.mxu0 0.0
    %2876 = vmatprep.subr.mxu0 0.0
    %2877 = vmatpush1.xpose.msra.mxu0 0.0
    %2878 = vmatprep.subr.mxu0 0.0
    %2879 = vmatpush1.xpose.msra.mxu0 0.0
    %2880 = vmatprep.subr.mxu0 0.0
    %2881 = vmatpush1.xpose.msra.mxu0 0.0
    %2882 = vmatprep.subr.mxu0 0.0
    %2883 = vmatpush1.xpose.msra.mxu0 0.0
    %2884 = vmatprep.subr.mxu0 0.0
    %2885 = vmatpush1.xpose.msra.mxu0 0.0
    %2886 = vmatprep.subr.mxu0 0.0
    %2887 = vmatpush1.xpose.msra.mxu0 0.0
    %2888 = vmatprep.subr.mxu0 0.0
    %2889 = vmatpush1.xpose.msra.mxu0 0.0
    %2890 = vmatprep.subr.mxu0 0.0
    %2891 = vmatpush1.xpose.msra.mxu0 0.0
    %2892 = vmatprep.subr.mxu0 0.0
    %2893 = vmatpush1.xpose.msra.mxu0 0.0
    %2894 = vmatprep.subr.mxu0 0.0
    %2895 = vmatpush1.xpose.msra.mxu0 0.0
    %2896 = vmatprep.subr.mxu0 0.0
    %2897 = vmatpush1.xpose.msra.mxu0 0.0
    %2898 = vmatprep.subr.mxu0 0.0
    %2899 = vmatpush1.xpose.msra.mxu0 0.0
    %2900 = vmatprep.mubr.f32.mxu0 0.0
    %2901 = vmatmul.mubr.f32.gmra.mrb[0].mxu0 %v2832
    %v2902 = vpop.f32.mrb[0].mxu0
    %v2903 = vadd.f32 0.0, %v2902
    %v2904 = vpop.f32.mrb[0].mxu0
    %2905 = vdwg.mxu0
    %v2906 = vmul.f32 %v2825, 0.35355338
    %v2907 = vmul.f32 %v2903, 0.35355338
    %v2908 = vadd.f32 %v2906, %v432
    %v2909 = vadd.f32 %v2907, %v436
    %v2910 = vsel %vm275, %v2908, -inf
    %2911 = vmax.xlane.f32.xlu0 %v2910
    %v2912 = vpop.xlane.xlu0 %2911
    %v2913 = vsel %vm275, %v2909, -inf
    %2914 = vmax.xlane.f32.xlu0 %v2913
    %v2915 = vpop.xlane.xlu0 %2914
    %v2916 = vsub.f32 %v2908, %v2912
    %v2917 = vsub.f32 %v2909, %v2915
    %v2918 = vmul.f32 %v2916, 1.442695
    %v2919 = vpow.pop %v2918
    %v2920 = vmul.f32 %v2917, 1.442695
    %v2921 = vpow.pop %v2920
    %v2922 = vsel %vm275, %v2919, 0.0
    %2923 = vadd.xlane.f32.xlu0 %v2922
    %v2924 = vpop.xlane.xlu0 %2923
    %v2925 = vsel %vm275, %v2921, 0.0
    %2926 = vadd.xlane.f32.xlu0 %v2925
    %v2927 = vpop.xlane.xlu0 %2926
    %v2928 = vrcp.pop %v2924
    %v2929 = vmul.f32 %v2919, %v2928
    %v2930 = vrcp.pop %v2927
    %v2931 = vmul.f32 %v2921, %v2930
    %2932 = vrot.lane.b32.xlu0 %v2076, 48
    %v2933 = vpop.permute.xlu0 %2932
    %v2936 = vsel %vm275, %v2929, 0
    %2938 = vmatprep.subr.mxu0 0.0
    %2939 = vmatpush1.msra.mxu0 %v2933
    %2940 = vmatprep.subr.mxu0 0.0
    %2941 = vmatpush1.msra.mxu0 0.0
    %2942 = vmatprep.subr.mxu0 0.0
    %2943 = vmatpush1.msra.mxu0 0.0
    %2944 = vmatprep.subr.mxu0 0.0
    %2945 = vmatpush1.msra.mxu0 0.0
    %2946 = vmatprep.subr.mxu0 0.0
    %2947 = vmatpush1.msra.mxu0 0.0
    %2948 = vmatprep.subr.mxu0 0.0
    %2949 = vmatpush1.msra.mxu0 0.0
    %2950 = vmatprep.subr.mxu0 0.0
    %2951 = vmatpush1.msra.mxu0 0.0
    %2952 = vmatprep.subr.mxu0 0.0
    %2953 = vmatpush1.msra.mxu0 0.0
    %2954 = vmatprep.subr.mxu0 0.0
    %2955 = vmatpush1.msra.mxu0 0.0
    %2956 = vmatprep.subr.mxu0 0.0
    %2957 = vmatpush1.msra.mxu0 0.0
    %2958 = vmatprep.subr.mxu0 0.0
    %2959 = vmatpush1.msra.mxu0 0.0
    %2960 = vmatprep.subr.mxu0 0.0
    %2961 = vmatpush1.msra.mxu0 0.0
    %2962 = vmatprep.subr.mxu0 0.0
    %2963 = vmatpush1.msra.mxu0 0.0
    %2964 = vmatprep.subr.mxu0 0.0
    %2965 = vmatpush1.msra.mxu0 0.0
    %2966 = vmatprep.subr.mxu0 0.0
    %2967 = vmatpush1.msra.mxu0 0.0
    %2968 = vmatprep.subr.mxu0 0.0
    %2969 = vmatpush1.msra.mxu0 0.0
    %2970 = vmatprep.subr.mxu0 0.0
    %2971 = vmatpush1.msra.mxu0 0.0
    %2972 = vmatprep.subr.mxu0 0.0
    %2973 = vmatpush1.msra.mxu0 0.0
    %2974 = vmatprep.subr.mxu0 0.0
    %2975 = vmatpush1.msra.mxu0 0.0
    %2976 = vmatprep.subr.mxu0 0.0
    %2977 = vmatpush1.msra.mxu0 0.0
    %2978 = vmatprep.subr.mxu0 0.0
    %2979 = vmatpush1.msra.mxu0 0.0
    %2980 = vmatprep.subr.mxu0 0.0
    %2981 = vmatpush1.msra.mxu0 0.0
    %2982 = vmatprep.subr.mxu0 0.0
    %2983 = vmatpush1.msra.mxu0 0.0
    %2984 = vmatprep.subr.mxu0 0.0
    %2985 = vmatpush1.msra.mxu0 0.0
    %2986 = vmatprep.subr.mxu0 0.0
    %2987 = vmatpush1.msra.mxu0 0.0
    %2988 = vmatprep.subr.mxu0 0.0
    %2989 = vmatpush1.msra.mxu0 0.0
    %2990 = vmatprep.subr.mxu0 0.0
    %2991 = vmatpush1.msra.mxu0 0.0
    %2992 = vmatprep.subr.mxu0 0.0
    %2993 = vmatpush1.msra.mxu0 0.0
    %2994 = vmatprep.subr.mxu0 0.0
    %2995 = vmatpush1.msra.mxu0 0.0
    %2996 = vmatprep.subr.mxu0 0.0
    %2997 = vmatpush1.msra.mxu0 0.0
    %2998 = vmatprep.subr.mxu0 0.0
    %2999 = vmatpush1.msra.mxu0 0.0
    %3000 = vmatprep.subr.mxu0 0.0
    %3001 = vmatpush1.msra.mxu0 0.0
    %3002 = vmatprep.mubr.f32.mxu0 0.0
    %3003 = vmatmul.mubr.f32.gmra.mrb[0].mxu0 %v2936
    %v3004 = vpop.f32.mrb[0].mxu0
    %v3005 = vadd.f32 0.0, %v3004
    %v3006 = vpop.f32.mrb[0].mxu0
    %3007 = vdwg.mxu0
    %3008 = vrot.lane.b32.xlu0 %v2081, 48
    %v3009 = vpop.permute.xlu0 %3008
    %v3012 = vsel %vm275, %v2931, 0
    %3014 = vmatprep.subr.mxu0 0.0
    %3015 = vmatpush1.msra.mxu0 %v3009
    %3016 = vmatprep.subr.mxu0 0.0
    %3017 = vmatpush1.msra.mxu0 0.0
    %3018 = vmatprep.subr.mxu0 0.0
    %3019 = vmatpush1.msra.mxu0 0.0
    %3020 = vmatprep.subr.mxu0 0.0
    %3021 = vmatpush1.msra.mxu0 0.0
    %3022 = vmatprep.subr.mxu0 0.0
    %3023 = vmatpush1.msra.mxu0 0.0
    %3024 = vmatprep.subr.mxu0 0.0
    %3025 = vmatpush1.msra.mxu0 0.0
    %3026 = vmatprep.subr.mxu0 0.0
    %3027 = vmatpush1.msra.mxu0 0.0
    %3028 = vmatprep.subr.mxu0 0.0
    %3029 = vmatpush1.msra.mxu0 0.0
    %3030 = vmatprep.subr.mxu0 0.0
    %3031 = vmatpush1.msra.mxu0 0.0
    %3032 = vmatprep.subr.mxu0 0.0
    %3033 = vmatpush1.msra.mxu0 0.0
    %3034 = vmatprep.subr.mxu0 0.0
    %3035 = vmatpush1.msra.mxu0 0.0
    %3036 = vmatprep.subr.mxu0 0.0
    %3037 = vmatpush1.msra.mxu0 0.0
    %3038 = vmatprep.subr.mxu0 0.0
    %3039 = vmatpush1.msra.mxu0 0.0
    %3040 = vmatprep.subr.mxu0 0.0
    %3041 = vmatpush1.msra.mxu0 0.0
    %3042 = vmatprep.subr.mxu0 0.0
    %3043 = vmatpush1.msra.mxu0 0.0
    %3044 = vmatprep.subr.mxu0 0.0
    %3045 = vmatpush1.msra.mxu0 0.0
    %3046 = vmatprep.subr.mxu0 0.0
    %3047 = vmatpush1.msra.mxu0 0.0
    %3048 = vmatprep.subr.mxu0 0.0
    %3049 = vmatpush1.msra.mxu0 0.0
    %3050 = vmatprep.subr.mxu0 0.0
    %3051 = vmatpush1.msra.mxu0 0.0
    %3052 = vmatprep.subr.mxu0 0.0
    %3053 = vmatpush1.msra.mxu0 0.0
    %3054 = vmatprep.subr.mxu0 0.0
    %3055 = vmatpush1.msra.mxu0 0.0
    %3056 = vmatprep.subr.mxu0 0.0
    %3057 = vmatpush1.msra.mxu0 0.0
    %3058 = vmatprep.subr.mxu0 0.0
    %3059 = vmatpush1.msra.mxu0 0.0
    %3060 = vmatprep.subr.mxu0 0.0
    %3061 = vmatpush1.msra.mxu0 0.0
    %3062 = vmatprep.subr.mxu0 0.0
    %3063 = vmatpush1.msra.mxu0 0.0
    %3064 = vmatprep.subr.mxu0 0.0
    %3065 = vmatpush1.msra.mxu0 0.0
    %3066 = vmatprep.subr.mxu0 0.0
    %3067 = vmatpush1.msra.mxu0 0.0
    %3068 = vmatprep.subr.mxu0 0.0
    %3069 = vmatpush1.msra.mxu0 0.0
    %3070 = vmatprep.subr.mxu0 0.0
    %3071 = vmatpush1.msra.mxu0 0.0
    %3072 = vmatprep.subr.mxu0 0.0
    %3073 = vmatpush1.msra.mxu0 0.0
    %3074 = vmatprep.subr.mxu0 0.0
    %3075 = vmatpush1.msra.mxu0 0.0
    %3076 = vmatprep.subr.mxu0 0.0
    %3077 = vmatpush1.msra.mxu0 0.0
    %3078 = vmatprep.mubr.f32.mxu0 0.0
    %3079 = vmatmul.mubr.f32.gmra.mrb[0].mxu0 %v3012
    %v3080 = vpop.f32.mrb[0].mxu0
    %v3081 = vadd.f32 0.0, %v3080
    %v3082 = vpop.f32.mrb[0].mxu0
    %3083 = vdwg.mxu0
    %3084 = vrot.lane.b32.xlu0 %v2076, 104
    %v3085 = vpop.permute.xlu0 %3084
    %3086 = vrot.lane.b32.xlu0 %v2076, 72
    %v3087 = vpop.permute.xlu0 %3086
    %v3088 = vsel %vm275, %v3085, 0
    %v3090 = vsel %vm275, %v3087, 0
    %3092 = vmatprep.subr.mxu0 0.0
    %3093 = vmatpush1.xpose.msra.mxu0 %v3090
    %3094 = vmatprep.subr.mxu0 0.0
    %3095 = vmatpush1.xpose.msra.mxu0 0.0
    %3096 = vmatprep.subr.mxu0 0.0
    %3097 = vmatpush1.xpose.msra.mxu0 0.0
    %3098 = vmatprep.subr.mxu0 0.0
    %3099 = vmatpush1.xpose.msra.mxu0 0.0
    %3100 = vmatprep.subr.mxu0 0.0
    %3101 = vmatpush1.xpose.msra.mxu0 0.0
    %3102 = vmatprep.subr.mxu0 0.0
    %3103 = vmatpush1.xpose.msra.mxu0 0.0
    %3104 = vmatprep.subr.mxu0 0.0
    %3105 = vmatpush1.xpose.msra.mxu0 0.0
    %3106 = vmatprep.subr.mxu0 0.0
    %3107 = vmatpush1.xpose.msra.mxu0 0.0
    %3108 = vmatprep.subr.mxu0 0.0
    %3109 = vmatpush1.xpose.msra.mxu0 0.0
    %3110 = vmatprep.subr.mxu0 0.0
    %3111 = vmatpush1.xpose.msra.mxu0 0.0
    %3112 = vmatprep.subr.mxu0 0.0
    %3113 = vmatpush1.xpose.msra.mxu0 0.0
    %3114 = vmatprep.subr.mxu0 0.0
    %3115 = vmatpush1.xpose.msra.mxu0 0.0
    %3116 = vmatprep.subr.mxu0 0.0
    %3117 = vmatpush1.xpose.msra.mxu0 0.0
    %3118 = vmatprep.subr.mxu0 0.0
    %3119 = vmatpush1.xpose.msra.mxu0 0.0
    %3120 = vmatprep.subr.mxu0 0.0
    %3121 = vmatpush1.xpose.msra.mxu0 0.0
    %3122 = vmatprep.subr.mxu0 0.0
    %3123 = vmatpush1.xpose.msra.mxu0 0.0
    %3124 = vmatprep.subr.mxu0 0.0
    %3125 = vmatpush1.xpose.msra.mxu0 0.0
    %3126 = vmatprep.subr.mxu0 0.0
    %3127 = vmatpush1.xpose.msra.mxu0 0.0
    %3128 = vmatprep.subr.mxu0 0.0
    %3129 = vmatpush1.xpose.msra.mxu0 0.0
    %3130 = vmatprep.subr.mxu0 0.0
    %3131 = vmatpush1.xpose.msra.mxu0 0.0
    %3132 = vmatprep.subr.mxu0 0.0
    %3133 = vmatpush1.xpose.msra.mxu0 0.0
    %3134 = vmatprep.subr.mxu0 0.0
    %3135 = vmatpush1.xpose.msra.mxu0 0.0
    %3136 = vmatprep.subr.mxu0 0.0
    %3137 = vmatpush1.xpose.msra.mxu0 0.0
    %3138 = vmatprep.subr.mxu0 0.0
    %3139 = vmatpush1.xpose.msra.mxu0 0.0
    %3140 = vmatprep.subr.mxu0 0.0
    %3141 = vmatpush1.xpose.msra.mxu0 0.0
    %3142 = vmatprep.subr.mxu0 0.0
    %3143 = vmatpush1.xpose.msra.mxu0 0.0
    %3144 = vmatprep.subr.mxu0 0.0
    %3145 = vmatpush1.xpose.msra.mxu0 0.0
    %3146 = vmatprep.subr.mxu0 0.0
    %3147 = vmatpush1.xpose.msra.mxu0 0.0
    %3148 = vmatprep.subr.mxu0 0.0
    %3149 = vmatpush1.xpose.msra.mxu0 0.0
    %3150 = vmatprep.subr.mxu0 0.0
    %3151 = vmatpush1.xpose.msra.mxu0 0.0
    %3152 = vmatprep.subr.mxu0 0.0
    %3153 = vmatpush1.xpose.msra.mxu0 0.0
    %3154 = vmatprep.subr.mxu0 0.0
    %3155 = vmatpush1.xpose.msra.mxu0 0.0
    %3156 = vmatprep.mubr.f32.mxu0 0.0
    %3157 = vmatmul.mubr.f32.gmra.mrb[0].mxu0 %v3088
    %v3158 = vpop.f32.mrb[0].mxu0
    %v3159 = vadd.f32 0.0, %v3158
    %v3160 = vpop.f32.mrb[0].mxu0
    %3161 = vdwg.mxu0
    %3162 = vrot.lane.b32.xlu0 %v2081, 104
    %v3163 = vpop.permute.xlu0 %3162
    %3164 = vrot.lane.b32.xlu0 %v2081, 72
    %v3165 = vpop.permute.xlu0 %3164
    %v3166 = vsel %vm275, %v3163, 0
    %v3168 = vsel %vm275, %v3165, 0
    %3170 = vmatprep.subr.mxu0 0.0
    %3171 = vmatpush1.xpose.msra.mxu0 %v3168
    %3172 = vmatprep.subr.mxu0 0.0
    %3173 = vmatpush1.xpose.msra.mxu0 0.0
    %3174 = vmatprep.subr.mxu0 0.0
    %3175 = vmatpush1.xpose.msra.mxu0 0.0
    %3176 = vmatprep.subr.mxu0 0.0
    %3177 = vmatpush1.xpose.msra.mxu0 0.0
    %3178 = vmatprep.subr.mxu0 0.0
    %3179 = vmatpush1.xpose.msra.mxu0 0.0
    %3180 = vmatprep.subr.mxu0 0.0
    %3181 = vmatpush1.xpose.msra.mxu0 0.0
    %3182 = vmatprep.subr.mxu0 0.0
    %3183 = vmatpush1.xpose.msra.mxu0 0.0
    %3184 = vmatprep.subr.mxu0 0.0
    %3185 = vmatpush1.xpose.msra.mxu0 0.0
    %3186 = vmatprep.subr.mxu0 0.0
    %3187 = vmatpush1.xpose.msra.mxu0 0.0
    %3188 = vmatprep.subr.mxu0 0.0
    %3189 = vmatpush1.xpose.msra.mxu0 0.0
    %3190 = vmatprep.subr.mxu0 0.0
    %3191 = vmatpush1.xpose.msra.mxu0 0.0
    %3192 = vmatprep.subr.mxu0 0.0
    %3193 = vmatpush1.xpose.msra.mxu0 0.0
    %3194 = vmatprep.subr.mxu0 0.0
    %3195 = vmatpush1.xpose.msra.mxu0 0.0
    %3196 = vmatprep.subr.mxu0 0.0
    %3197 = vmatpush1.xpose.msra.mxu0 0.0
    %3198 = vmatprep.subr.mxu0 0.0
    %3199 = vmatpush1.xpose.msra.mxu0 0.0
    %3200 = vmatprep.subr.mxu0 0.0
    %3201 = vmatpush1.xpose.msra.mxu0 0.0
    %3202 = vmatprep.subr.mxu0 0.0
    %3203 = vmatpush1.xpose.msra.mxu0 0.0
    %3204 = vmatprep.subr.mxu0 0.0
    %3205 = vmatpush1.xpose.msra.mxu0 0.0
    %3206 = vmatprep.subr.mxu0 0.0
    %3207 = vmatpush1.xpose.msra.mxu0 0.0
    %3208 = vmatprep.subr.mxu0 0.0
    %3209 = vmatpush1.xpose.msra.mxu0 0.0
    %3210 = vmatprep.subr.mxu0 0.0
    %3211 = vmatpush1.xpose.msra.mxu0 0.0
    %3212 = vmatprep.subr.mxu0 0.0
    %3213 = vmatpush1.xpose.msra.mxu0 0.0
    %3214 = vmatprep.subr.mxu0 0.0
    %3215 = vmatpush1.xpose.msra.mxu0 0.0
    %3216 = vmatprep.subr.mxu0 0.0
    %3217 = vmatpush1.xpose.msra.mxu0 0.0
    %3218 = vmatprep.subr.mxu0 0.0
    %3219 = vmatpush1.xpose.msra.mxu0 0.0
    %3220 = vmatprep.subr.mxu0 0.0
    %3221 = vmatpush1.xpose.msra.mxu0 0.0
    %3222 = vmatprep.subr.mxu0 0.0
    %3223 = vmatpush1.xpose.msra.mxu0 0.0
    %3224 = vmatprep.subr.mxu0 0.0
    %3225 = vmatpush1.xpose.msra.mxu0 0.0
    %3226 = vmatprep.subr.mxu0 0.0
    %3227 = vmatpush1.xpose.msra.mxu0 0.0
    %3228 = vmatprep.subr.mxu0 0.0
    %3229 = vmatpush1.xpose.msra.mxu0 0.0
    %3230 = vmatprep.subr.mxu0 0.0
    %3231 = vmatpush1.xpose.msra.mxu0 0.0
    %3232 = vmatprep.subr.mxu0 0.0
    %3233 = vmatpush1.xpose.msra.mxu0 0.0
    %3234 = vmatprep.mubr.f32.mxu0 0.0
    %3235 = vmatmul.mubr.f32.gmra.mrb[0].mxu0 %v3166
    %v3236 = vpop.f32.mrb[0].mxu0
    %v3237 = vadd.f32 0.0, %v3236
    %v3238 = vpop.f32.mrb[0].mxu0
    %3239 = vdwg.mxu0
    %v3240 = vmul.f32 %v3159, 0.35355338
    %v3241 = vmul.f32 %v3237, 0.35355338
    %v3242 = vadd.f32 %v3240, %v432
    %v3243 = vadd.f32 %v3241, %v436
    %v3244 = vsel %vm275, %v3242, -inf
    %3245 = vmax.xlane.f32.xlu0 %v3244
    %v3246 = vpop.xlane.xlu0 %3245
    %v3247 = vsel %vm275, %v3243, -inf
    %3248 = vmax.xlane.f32.xlu0 %v3247
    %v3249 = vpop.xlane.xlu0 %3248
    %v3250 = vsub.f32 %v3242, %v3246
    %v3251 = vsub.f32 %v3243, %v3249
    %v3252 = vmul.f32 %v3250, 1.442695
    %v3253 = vpow.pop %v3252
    %v3254 = vmul.f32 %v3251, 1.442695
    %v3255 = vpow.pop %v3254
    %v3256 = vsel %vm275, %v3253, 0.0
    %3257 = vadd.xlane.f32.xlu0 %v3256
    %v3258 = vpop.xlane.xlu0 %3257
    %v3259 = vsel %vm275, %v3255, 0.0
    %3260 = vadd.xlane.f32.xlu0 %v3259
    %v3261 = vpop.xlane.xlu0 %3260
    %v3262 = vrcp.pop %v3258
    %v3263 = vmul.f32 %v3253, %v3262
    %v3264 = vrcp.pop %v3261
    %v3265 = vmul.f32 %v3255, %v3264
    %3266 = vrot.lane.b32.xlu0 %v2076, 40
    %v3267 = vpop.permute.xlu0 %3266
    %v3270 = vsel %vm275, %v3263, 0
    %3272 = vmatprep.subr.mxu0 0.0
    %3273 = vmatpush1.msra.mxu0 %v3267
    %3274 = vmatprep.subr.mxu0 0.0
    %3275 = vmatpush1.msra.mxu0 0.0
    %3276 = vmatprep.subr.mxu0 0.0
    %3277 = vmatpush1.msra.mxu0 0.0
    %3278 = vmatprep.subr.mxu0 0.0
    %3279 = vmatpush1.msra.mxu0 0.0
    %3280 = vmatprep.subr.mxu0 0.0
    %3281 = vmatpush1.msra.mxu0 0.0
    %3282 = vmatprep.subr.mxu0 0.0
    %3283 = vmatpush1.msra.mxu0 0.0
    %3284 = vmatprep.subr.mxu0 0.0
    %3285 = vmatpush1.msra.mxu0 0.0
    %3286 = vmatprep.subr.mxu0 0.0
    %3287 = vmatpush1.msra.mxu0 0.0
    %3288 = vmatprep.subr.mxu0 0.0
    %3289 = vmatpush1.msra.mxu0 0.0
    %3290 = vmatprep.subr.mxu0 0.0
    %3291 = vmatpush1.msra.mxu0 0.0
    %3292 = vmatprep.subr.mxu0 0.0
    %3293 = vmatpush1.msra.mxu0 0.0
    %3294 = vmatprep.subr.mxu0 0.0
    %3295 = vmatpush1.msra.mxu0 0.0
    %3296 = vmatprep.subr.mxu0 0.0
    %3297 = vmatpush1.msra.mxu0 0.0
    %3298 = vmatprep.subr.mxu0 0.0
    %3299 = vmatpush1.msra.mxu0 0.0
    %3300 = vmatprep.subr.mxu0 0.0
    %3301 = vmatpush1.msra.mxu0 0.0
    %3302 = vmatprep.subr.mxu0 0.0
    %3303 = vmatpush1.msra.mxu0 0.0
    %3304 = vmatprep.subr.mxu0 0.0
    %3305 = vmatpush1.msra.mxu0 0.0
    %3306 = vmatprep.subr.mxu0 0.0
    %3307 = vmatpush1.msra.mxu0 0.0
    %3308 = vmatprep.subr.mxu0 0.0
    %3309 = vmatpush1.msra.mxu0 0.0
    %3310 = vmatprep.subr.mxu0 0.0
    %3311 = vmatpush1.msra.mxu0 0.0
    %3312 = vmatprep.subr.mxu0 0.0
    %3313 = vmatpush1.msra.mxu0 0.0
    %3314 = vmatprep.subr.mxu0 0.0
    %3315 = vmatpush1.msra.mxu0 0.0
    %3316 = vmatprep.subr.mxu0 0.0
    %3317 = vmatpush1.msra.mxu0 0.0
    %3318 = vmatprep.subr.mxu0 0.0
    %3319 = vmatpush1.msra.mxu0 0.0
    %3320 = vmatprep.subr.mxu0 0.0
    %3321 = vmatpush1.msra.mxu0 0.0
    %3322 = vmatprep.subr.mxu0 0.0
    %3323 = vmatpush1.msra.mxu0 0.0
    %3324 = vmatprep.subr.mxu0 0.0
    %3325 = vmatpush1.msra.mxu0 0.0
    %3326 = vmatprep.subr.mxu0 0.0
    %3327 = vmatpush1.msra.mxu0 0.0
    %3328 = vmatprep.subr.mxu0 0.0
    %3329 = vmatpush1.msra.mxu0 0.0
    %3330 = vmatprep.subr.mxu0 0.0
    %3331 = vmatpush1.msra.mxu0 0.0
    %3332 = vmatprep.subr.mxu0 0.0
    %3333 = vmatpush1.msra.mxu0 0.0
    %3334 = vmatprep.subr.mxu0 0.0
    %3335 = vmatpush1.msra.mxu0 0.0
    %3336 = vmatprep.mubr.f32.mxu0 0.0
    %3337 = vmatmul.mubr.f32.gmra.mrb[0].mxu0 %v3270
    %v3338 = vpop.f32.mrb[0].mxu0
    %v3339 = vadd.f32 0.0, %v3338
    %v3340 = vpop.f32.mrb[0].mxu0
    %3341 = vdwg.mxu0
    %3342 = vrot.lane.b32.xlu0 %v2081, 40
    %v3343 = vpop.permute.xlu0 %3342
    %v3346 = vsel %vm275, %v3265, 0
    %3348 = vmatprep.subr.mxu0 0.0
    %3349 = vmatpush1.msra.mxu0 %v3343
    %3350 = vmatprep.subr.mxu0 0.0
    %3351 = vmatpush1.msra.mxu0 0.0
    %3352 = vmatprep.subr.mxu0 0.0
    %3353 = vmatpush1.msra.mxu0 0.0
    %3354 = vmatprep.subr.mxu0 0.0
    %3355 = vmatpush1.msra.mxu0 0.0
    %3356 = vmatprep.subr.mxu0 0.0
    %3357 = vmatpush1.msra.mxu0 0.0
    %3358 = vmatprep.subr.mxu0 0.0
    %3359 = vmatpush1.msra.mxu0 0.0
    %3360 = vmatprep.subr.mxu0 0.0
    %3361 = vmatpush1.msra.mxu0 0.0
    %3362 = vmatprep.subr.mxu0 0.0
    %3363 = vmatpush1.msra.mxu0 0.0
    %3364 = vmatprep.subr.mxu0 0.0
    %3365 = vmatpush1.msra.mxu0 0.0
    %3366 = vmatprep.subr.mxu0 0.0
    %3367 = vmatpush1.msra.mxu0 0.0
    %3368 = vmatprep.subr.mxu0 0.0
    %3369 = vmatpush1.msra.mxu0 0.0
    %3370 = vmatprep.subr.mxu0 0.0
    %3371 = vmatpush1.msra.mxu0 0.0
    %3372 = vmatprep.subr.mxu0 0.0
    %3373 = vmatpush1.msra.mxu0 0.0
    %3374 = vmatprep.subr.mxu0 0.0
    %3375 = vmatpush1.msra.mxu0 0.0
    %3376 = vmatprep.subr.mxu0 0.0
    %3377 = vmatpush1.msra.mxu0 0.0
    %3378 = vmatprep.subr.mxu0 0.0
    %3379 = vmatpush1.msra.mxu0 0.0
    %3380 = vmatprep.subr.mxu0 0.0
    %3381 = vmatpush1.msra.mxu0 0.0
    %3382 = vmatprep.subr.mxu0 0.0
    %3383 = vmatpush1.msra.mxu0 0.0
    %3384 = vmatprep.subr.mxu0 0.0
    %3385 = vmatpush1.msra.mxu0 0.0
    %3386 = vmatprep.subr.mxu0 0.0
    %3387 = vmatpush1.msra.mxu0 0.0
    %3388 = vmatprep.subr.mxu0 0.0
    %3389 = vmatpush1.msra.mxu0 0.0
    %3390 = vmatprep.subr.mxu0 0.0
    %3391 = vmatpush1.msra.mxu0 0.0
    %3392 = vmatprep.subr.mxu0 0.0
    %3393 = vmatpush1.msra.mxu0 0.0
    %3394 = vmatprep.subr.mxu0 0.0
    %3395 = vmatpush1.msra.mxu0 0.0
    %3396 = vmatprep.subr.mxu0 0.0
    %3397 = vmatpush1.msra.mxu0 0.0
    %3398 = vmatprep.subr.mxu0 0.0
    %3399 = vmatpush1.msra.mxu0 0.0
    %3400 = vmatprep.subr.mxu0 0.0
    %3401 = vmatpush1.msra.mxu0 0.0
    %3402 = vmatprep.subr.mxu0 0.0
    %3403 = vmatpush1.msra.mxu0 0.0
    %3404 = vmatprep.subr.mxu0 0.0
    %3405 = vmatpush1.msra.mxu0 0.0
    %3406 = vmatprep.subr.mxu0 0.0
    %3407 = vmatpush1.msra.mxu0 0.0
    %3408 = vmatprep.subr.mxu0 0.0
    %3409 = vmatpush1.msra.mxu0 0.0
    %3410 = vmatprep.subr.mxu0 0.0
    %3411 = vmatpush1.msra.mxu0 0.0
    %3412 = vmatprep.mubr.f32.mxu0 0.0
    %3413 = vmatmul.mubr.f32.gmra.mrb[0].mxu0 %v3346
    %v3414 = vpop.f32.mrb[0].mxu0
    %v3415 = vadd.f32 0.0, %v3414
    %v3416 = vpop.f32.mrb[0].mxu0
    %3417 = vdwg.mxu0
    %3420 = vrot.lane.b32.xlu0 %v2671, 8
    %v3421 = vpop.permute.xlu0 %3420
    %3422 = vrot.lane.b32.xlu0 %v2747, 8
    %v3423 = vpop.permute.xlu0 %3422
    %3428 = vrot.lane.b32.xlu0 %v3005, 16
    %v3429 = vpop.permute.xlu0 %3428
    %3430 = vrot.lane.b32.xlu0 %v3081, 16
    %v3431 = vpop.permute.xlu0 %3430
    %3436 = vrot.lane.b32.xlu0 %v3339, 24
    %v3437 = vpop.permute.xlu0 %3436
    %3438 = vrot.lane.b32.xlu0 %v3415, 24
    %v3439 = vpop.permute.xlu0 %3438
    %v3442 = vsel %vm275, %v2337, %v3421
    %v3443 = vsel %vm275, %v2413, %v3423
    %v3444 = vsel %vm81, %v3442, %v3429
    %v3445 = vsel %vm81, %v3443, %v3431
    %v3446 = vsel %vm1645, %v3444, %v3437
    %v3447 = vsel %vm1645, %v3445, %v3439
    %v3449 = vsel %vm190, %v3446, 0
    %v3452 = vsel %vm190, %v3447, 0
    %3454 = vmatprep.subr.mxu0 0.0
    %3455 = vmatpush1.msra.mxu0 %v52
    %3456 = vmatprep.subr.mxu0 0.0
    %3457 = vmatpush1.msra.mxu0 %v53
    %3458 = vmatprep.subr.mxu0 0.0
    %3459 = vmatpush1.msra.mxu0 %v54
    %3460 = vmatprep.subr.mxu0 0.0
    %3461 = vmatpush1.msra.mxu0 %v55
    %3462 = vmatprep.subr.mxu0 0.0
    %3463 = vmatpush1.msra.mxu0 0.0
    %3464 = vmatprep.subr.mxu0 0.0
    %3465 = vmatpush1.msra.mxu0 0.0
    %3466 = vmatprep.subr.mxu0 0.0
    %3467 = vmatpush1.msra.mxu0 0.0
    %3468 = vmatprep.subr.mxu0 0.0
    %3469 = vmatpush1.msra.mxu0 0.0
    %3470 = vmatprep.subr.mxu0 0.0
    %3471 = vmatpush1.msra.mxu0 0.0
    %3472 = vmatprep.subr.mxu0 0.0
    %3473 = vmatpush1.msra.mxu0 0.0
    %3474 = vmatprep.subr.mxu0 0.0
    %3475 = vmatpush1.msra.mxu0 0.0
    %3476 = vmatprep.subr.mxu0 0.0
    %3477 = vmatpush1.msra.mxu0 0.0
    %3478 = vmatprep.subr.mxu0 0.0
    %3479 = vmatpush1.msra.mxu0 0.0
    %3480 = vmatprep.subr.mxu0 0.0
    %3481 = vmatpush1.msra.mxu0 0.0
    %3482 = vmatprep.subr.mxu0 0.0
    %3483 = vmatpush1.msra.mxu0 0.0
    %3484 = vmatprep.subr.mxu0 0.0
    %3485 = vmatpush1.msra.mxu0 0.0
    %3486 = vmatprep.subr.mxu0 0.0
    %3487 = vmatpush1.msra.mxu0 0.0
    %3488 = vmatprep.subr.mxu0 0.0
    %3489 = vmatpush1.msra.mxu0 0.0
    %3490 = vmatprep.subr.mxu0 0.0
    %3491 = vmatpush1.msra.mxu0 0.0
    %3492 = vmatprep.subr.mxu0 0.0
    %3493 = vmatpush1.msra.mxu0 0.0
    %3494 = vmatprep.subr.mxu0 0.0
    %3495 = vmatpush1.msra.mxu0 0.0
    %3496 = vmatprep.subr.mxu0 0.0
    %3497 = vmatpush1.msra.mxu0 0.0
    %3498 = vmatprep.subr.mxu0 0.0
    %3499 = vmatpush1.msra.mxu0 0.0
    %3500 = vmatprep.subr.mxu0 0.0
    %3501 = vmatpush1.msra.mxu0 0.0
    %3502 = vmatprep.subr.mxu0 0.0
    %3503 = vmatpush1.msra.mxu0 0.0
    %3504 = vmatprep.subr.mxu0 0.0
    %3505 = vmatpush1.msra.mxu0 0.0
    %3506 = vmatprep.subr.mxu0 0.0
    %3507 = vmatpush1.msra.mxu0 0.0
    %3508 = vmatprep.subr.mxu0 0.0
    %3509 = vmatpush1.msra.mxu0 0.0
    %3510 = vmatprep.subr.mxu0 0.0
    %3511 = vmatpush1.msra.mxu0 0.0
    %3512 = vmatprep.subr.mxu0 0.0
    %3513 = vmatpush1.msra.mxu0 0.0
    %3514 = vmatprep.subr.mxu0 0.0
    %3515 = vmatpush1.msra.mxu0 0.0
    %3516 = vmatprep.subr.mxu0 0.0
    %3517 = vmatpush1.msra.mxu0 0.0
    %3518 = vmatprep.mubr.f32.mxu0 0.0
    %3519 = vmatmul.mubr.f32.gmra.mrb[0].mxu0 %v3449
    %v3520 = vpop.f32.mrb[0].mxu0
    %v3521 = vadd.f32 %v1651, %v3520
    %v3522 = vpop.f32.mrb[0].mxu0
    %3523 = vmatprep.mubr.f32.mxu0 0.0
    %3524 = vmatmul.mubr.f32.gmra.mrb[0].mxu0 %v3452
    %v3525 = vpop.f32.mrb[0].mxu0
    %v3526 = vadd.f32 %v1651, %v3525
    %v3527 = vpop.f32.mrb[0].mxu0
    %3528 = vdwg.mxu0
    %v3529 = vadd.f32 %v2001, %v3521
    %v3530 = vadd.f32 %v2002, %v3526
    %v3531 = vsel %vm190, %v3529, 0.0
    %3532 = vadd.xlane.f32.xlu0 %v3531
    %v3533 = vpop.xlane.xlu0 %3532
    %v3534 = vsel %vm190, %v3530, 0.0
    %3535 = vadd.xlane.f32.xlu0 %v3534
    %v3536 = vpop.xlane.xlu0 %3535
    %v3537 = vmul.f32 %v3533, %v1741
    %v3538 = vmul.f32 %v3536, %v1741
    %v3539 = vsub.f32 %v3529, %v3537
    %v3540 = vsub.f32 %v3530, %v3538
    %v3541 = vmul.f32 %v3539, %v3539
    %v3542 = vmul.f32 %v3540, %v3540
    %v3543 = vsel %vm190, %v3541, 0.0
    %3544 = vadd.xlane.f32.xlu0 %v3543
    %v3545 = vpop.xlane.xlu0 %3544
    %v3546 = vsel %vm190, %v3542, 0.0
    %3547 = vadd.xlane.f32.xlu0 %v3546
    %v3548 = vpop.xlane.xlu0 %3547
    %v3549 = vmul.f32 %v3545, %v1741
    %v3550 = vmul.f32 %v3548, %v1741
    %v3551 = vadd.f32 %v3549, 1e-12
    %v3552 = vadd.f32 %v3550, 1e-12
    %v3553 = vrsqrt.pop %v3551
    %v3554 = vrsqrt.pop %v3552
    %v3555 = vmul.f32 %v3539, %v3553
    %v3556 = vmul.f32 %v3540, %v3554
    %v3557 = vmul.f32 %v3555, %v1765
    %v3558 = vmul.f32 %v3556, %v1765
    %v3559 = vadd.f32 %v3557, %v1771
    %v3560 = vadd.f32 %v3558, %v1771
    %v3562 = vsel %vm190, %v3559, 0
    %v3565 = vsel %vm190, %v3560, 0
    %3567 = vmatprep.subr.mxu0 0.0
    %3568 = vmatpush1.msra.mxu0 %v56
    %3569 = vmatprep.subr.mxu0 0.0
    %3570 = vmatpush1.msra.mxu0 %v57
    %3571 = vmatprep.subr.mxu0 0.0
    %3572 = vmatpush1.msra.mxu0 %v58
    %3573 = vmatprep.subr.mxu0 0.0
    %3574 = vmatpush1.msra.mxu0 %v59
    %3575 = vmatprep.subr.mxu0 0.0
    %3576 = vmatpush1.msra.mxu0 0.0
    %3577 = vmatprep.subr.mxu0 0.0
    %3578 = vmatpush1.msra.mxu0 0.0
    %3579 = vmatprep.subr.mxu0 0.0
    %3580 = vmatpush1.msra.mxu0 0.0
    %3581 = vmatprep.subr.mxu0 0.0
    %3582 = vmatpush1.msra.mxu0 0.0
    %3583 = vmatprep.subr.mxu0 0.0
    %3584 = vmatpush1.msra.mxu0 0.0
    %3585 = vmatprep.subr.mxu0 0.0
    %3586 = vmatpush1.msra.mxu0 0.0
    %3587 = vmatprep.subr.mxu0 0.0
    %3588 = vmatpush1.msra.mxu0 0.0
    %3589 = vmatprep.subr.mxu0 0.0
    %3590 = vmatpush1.msra.mxu0 0.0
    %3591 = vmatprep.subr.mxu0 0.0
    %3592 = vmatpush1.msra.mxu0 0.0
    %3593 = vmatprep.subr.mxu0 0.0
    %3594 = vmatpush1.msra.mxu0 0.0
    %3595 = vmatprep.subr.mxu0 0.0
    %3596 = vmatpush1.msra.mxu0 0.0
    %3597 = vmatprep.subr.mxu0 0.0
    %3598 = vmatpush1.msra.mxu0 0.0
    %3599 = vmatprep.subr.mxu0 0.0
    %3600 = vmatpush1.msra.mxu0 0.0
    %3601 = vmatprep.subr.mxu0 0.0
    %3602 = vmatpush1.msra.mxu0 0.0
    %3603 = vmatprep.subr.mxu0 0.0
    %3604 = vmatpush1.msra.mxu0 0.0
    %3605 = vmatprep.subr.mxu0 0.0
    %3606 = vmatpush1.msra.mxu0 0.0
    %3607 = vmatprep.subr.mxu0 0.0
    %3608 = vmatpush1.msra.mxu0 0.0
    %3609 = vmatprep.subr.mxu0 0.0
    %3610 = vmatpush1.msra.mxu0 0.0
    %3611 = vmatprep.subr.mxu0 0.0
    %3612 = vmatpush1.msra.mxu0 0.0
    %3613 = vmatprep.subr.mxu0 0.0
    %3614 = vmatpush1.msra.mxu0 0.0
    %3615 = vmatprep.subr.mxu0 0.0
    %3616 = vmatpush1.msra.mxu0 0.0
    %3617 = vmatprep.subr.mxu0 0.0
    %3618 = vmatpush1.msra.mxu0 0.0
    %3619 = vmatprep.subr.mxu0 0.0
    %3620 = vmatpush1.msra.mxu0 0.0
    %3621 = vmatprep.subr.mxu0 0.0
    %3622 = vmatpush1.msra.mxu0 0.0
    %3623 = vmatprep.subr.mxu0 0.0
    %3624 = vmatpush1.msra.mxu0 0.0
    %3625 = vmatprep.subr.mxu0 0.0
    %3626 = vmatpush1.msra.mxu0 0.0
    %3627 = vmatprep.subr.mxu0 0.0
    %3628 = vmatpush1.msra.mxu0 0.0
    %3629 = vmatprep.subr.mxu0 0.0
    %3630 = vmatpush1.msra.mxu0 0.0
    %3631 = vmatprep.mubr.f32.mxu0 0.0
    %3632 = vmatmul.mubr.f32.gmra.mrb[0].mxu0 %v3562
    %v3633 = vpop.f32.mrb[0].mxu0
    %v3634 = vadd.f32 %v1777, %v3633
    %v3635 = vpop.f32.mrb[0].mxu0
    %3636 = vmatprep.mubr.f32.mxu0 0.0
    %3637 = vmatmul.mubr.f32.gmra.mrb[0].mxu0 %v3565
    %v3638 = vpop.f32.mrb[0].mxu0
    %v3639 = vadd.f32 %v1777, %v3638
    %v3640 = vpop.f32.mrb[0].mxu0
    %3641 = vdwg.mxu0
    %v3642 = vmul.f32 %v3634, 0.5
    %v3643 = vmul.f32 %v3639, 0.5
    %v3644 = vmul.f32 %v3634, 0.044715
    %v3645 = vmul.f32 %v3639, 0.044715
    %v3646 = vmul.f32 %v3644, %v3634
    %v3647 = vmul.f32 %v3645, %v3639
    %v3648 = vmul.f32 %v3646, %v3634
    %v3649 = vmul.f32 %v3647, %v3639
    %v3650 = vadd.f32 %v3634, %v3648
    %v3651 = vadd.f32 %v3639, %v3649
    %v3652 = vmul.f32 %v3650, 0.7978846
    %v3653 = vmul.f32 %v3651, 0.7978846
    %v3654 = vtanh.pop %v3652
    %v3655 = vtanh.pop %v3653
    %v3656 = vadd.f32 %v3654, 1.0
    %v3657 = vadd.f32 %v3655, 1.0
    %v3658 = vmul.f32 %v3642, %v3656
    %v3659 = vmul.f32 %v3643, %v3657
    %v3661 = vsel %vm1881, %v3658, 0
    %v3664 = vsel %vm1881, %v3659, 0
    %3666 = vmatprep.subr.mxu0 0.0
    %3667 = vmatpush1.msra.mxu0 %v60
    %3668 = vmatprep.subr.mxu0 0.0
    %3669 = vmatpush1.msra.mxu0 %v61
    %3670 = vmatprep.subr.mxu0 0.0
    %3671 = vmatpush1.msra.mxu0 %v62
    %3672 = vmatprep.subr.mxu0 0.0
    %3673 = vmatpush1.msra.mxu0 %v63
    %3674 = vmatprep.subr.mxu0 0.0
    %3675 = vmatpush1.msra.mxu0 %v64
    %3676 = vmatprep.subr.mxu0 0.0
    %3677 = vmatpush1.msra.mxu0 %v65
    %3678 = vmatprep.subr.mxu0 0.0
    %3679 = vmatpush1.msra.mxu0 %v66
    %3680 = vmatprep.subr.mxu0 0.0
    %3681 = vmatpush1.msra.mxu0 %v67
    %3682 = vmatprep.subr.mxu0 0.0
    %3683 = vmatpush1.msra.mxu0 0.0
    %3684 = vmatprep.subr.mxu0 0.0
    %3685 = vmatpush1.msra.mxu0 0.0
    %3686 = vmatprep.subr.mxu0 0.0
    %3687 = vmatpush1.msra.mxu0 0.0
    %3688 = vmatprep.subr.mxu0 0.0
    %3689 = vmatpush1.msra.mxu0 0.0
    %3690 = vmatprep.subr.mxu0 0.0
    %3691 = vmatpush1.msra.mxu0 0.0
    %3692 = vmatprep.subr.mxu0 0.0
    %3693 = vmatpush1.msra.mxu0 0.0
    %3694 = vmatprep.subr.mxu0 0.0
    %3695 = vmatpush1.msra.mxu0 0.0
    %3696 = vmatprep.subr.mxu0 0.0
    %3697 = vmatpush1.msra.mxu0 0.0
    %3698 = vmatprep.subr.mxu0 0.0
    %3699 = vmatpush1.msra.mxu0 0.0
    %3700 = vmatprep.subr.mxu0 0.0
    %3701 = vmatpush1.msra.mxu0 0.0
    %3702 = vmatprep.subr.mxu0 0.0
    %3703 = vmatpush1.msra.mxu0 0.0
    %3704 = vmatprep.subr.mxu0 0.0
    %3705 = vmatpush1.msra.mxu0 0.0
    %3706 = vmatprep.subr.mxu0 0.0
    %3707 = vmatpush1.msra.mxu0 0.0
    %3708 = vmatprep.subr.mxu0 0.0
    %3709 = vmatpush1.msra.mxu0 0.0
    %3710 = vmatprep.subr.mxu0 0.0
    %3711 = vmatpush1.msra.mxu0 0.0
    %3712 = vmatprep.subr.mxu0 0.0
    %3713 = vmatpush1.msra.mxu0 0.0
    %3714 = vmatprep.subr.mxu0 0.0
    %3715 = vmatpush1.msra.mxu0 0.0
    %3716 = vmatprep.subr.mxu0 0.0
    %3717 = vmatpush1.msra.mxu0 0.0
    %3718 = vmatprep.subr.mxu0 0.0
    %3719 = vmatpush1.msra.mxu0 0.0
    %3720 = vmatprep.subr.mxu0 0.0
    %3721 = vmatpush1.msra.mxu0 0.0
    %3722 = vmatprep.subr.mxu0 0.0
    %3723 = vmatpush1.msra.mxu0 0.0
    %3724 = vmatprep.subr.mxu0 0.0
    %3725 = vmatpush1.msra.mxu0 0.0
    %3726 = vmatprep.subr.mxu0 0.0
    %3727 = vmatpush1.msra.mxu0 0.0
    %3728 = vmatprep.subr.mxu0 0.0
    %3729 = vmatpush1.msra.mxu0 0.0
    %3730 = vmatprep.mubr.f32.mxu0 0.0
    %3731 = vmatmul.mubr.f32.gmra.mrb[0].mxu0 %v3661
    %v3732 = vpop.f32.mrb[0].mxu0
    %v3733 = vadd.f32 %v1880, %v3732
    %v3734 = vpop.f32.mrb[0].mxu0
    %3735 = vmatprep.mubr.f32.mxu0 0.0
    %3736 = vmatmul.mubr.f32.gmra.mrb[0].mxu0 %v3664
    %v3737 = vpop.f32.mrb[0].mxu0
    %v3738 = vadd.f32 %v1880, %v3737
    %v3739 = vpop.f32.mrb[0].mxu0
    %3740 = vdwg.mxu0
    %v3741 = vadd.f32 %v3733, %v3559
    %v3742 = vadd.f32 %v3738, %v3560
    %v3743 = vsel %vm190, %v3741, 0.0
    %3744 = vadd.xlane.f32.xlu0 %v3743
    %v3745 = vpop.xlane.xlu0 %3744
    %v3746 = vsel %vm190, %v3742, 0.0
    %3747 = vadd.xlane.f32.xlu0 %v3746
    %v3748 = vpop.xlane.xlu0 %3747
    %v3749 = vmul.f32 %v3745, %v1741
    %v3750 = vmul.f32 %v3748, %v1741
    %v3751 = vsub.f32 %v3741, %v3749
    %v3752 = vsub.f32 %v3742, %v3750
    %v3753 = vmul.f32 %v3751, %v3751
    %v3754 = vmul.f32 %v3752, %v3752
    %v3755 = vsel %vm190, %v3753, 0.0
    %3756 = vadd.xlane.f32.xlu0 %v3755
    %v3757 = vpop.xlane.xlu0 %3756
    %v3758 = vsel %vm190, %v3754, 0.0
    %3759 = vadd.xlane.f32.xlu0 %v3758
    %v3760 = vpop.xlane.xlu0 %3759
    %v3761 = vmul.f32 %v3757, %v1741
    %v3762 = vmul.f32 %v3760, %v1741
    %v3763 = vadd.f32 %v3761, 1e-12
    %v3764 = vadd.f32 %v3762, 1e-12
    %v3765 = vrsqrt.pop %v3763
    %v3766 = vrsqrt.pop %v3764
    %v3767 = vmul.f32 %v3751, %v3765
    %v3768 = vmul.f32 %v3752, %v3766
    %v3769 = vmul.f32 %v3767, %v1994
    %v3770 = vmul.f32 %v3768, %v1994
    %v3771 = vadd.f32 %v3769, %v2000
    %v3772 = vadd.f32 %v3770, %v2000
    %3773 = vst.msk [vmem:[#allocation7] sm:$0xff] %vm190, %v3771
    %3774 = vst.msk [vmem:[#allocation7 + $0x8] sm:$0xff] %vm190, %v3772
    // Predicated region
    $region22: #{tpu_custom_call.1} parent=1 // pred_check
      _
    $region23: #{tpu_custom_call.1} parent=1 // pred_check_branch
      %3776 = sbr.rel (0) target = $region25
    $region24: #{tpu_custom_call.1} parent=1 // pred_region
      %s3778 = ssub.s32 256, 256
      %3779 = vsyncadd [#allocation4], %s3778
      %s3780 = sshll.u32 [#allocation7], 4
      %s3781 = int_to_ptr.vmem [resolvable:$true] %s3780
      %3786 = dma.vmem_to_hbm [thread:$0]  %s3781, 256, %s3, [#allocation4], 128, 128, 8
    $region25: #{tpu_custom_call.1} parent=1 // pred_fallthru
      _
    // Predicated region
    $region26: #{tpu_custom_call.1} parent=1 // pred_check
      _
    $region27: #{tpu_custom_call.1} parent=1 // pred_check_branch
      %3788 = sbr.rel (0) target = $region29
    $region28: #{tpu_custom_call.1} parent=1 // pred_region
      %3789 = dma.done [#allocation4], 256
    $region29: #{tpu_custom_call.1} parent=1 // pred_fallthru
      _
    %3790 = vsyncpa [#allocation3], 1
    %3791 = vsyncpa [#allocation6], 1
    %3792 = vsyncpa [#allocation4], 1

</llo_original>
